<compile_context>
chip_gen: v7x
topology: tpu7x:2x2x1
jax: 0.10.0
libtpu: 0.0.40
codegen_flags: <defaults>
</compile_context>

<pallas_src>
import functools

import numpy as np

import jax
import jax.numpy as jnp
from jax.experimental import pallas as pl
from jax.experimental.pallas import tpu as pltpu


def _bayar_conv_kernel(x_ref, w_ref, o_ref, xpad_ref, patch_ref, *,
                       K, pad, H, W, Wp, Cin, Nb, NW_img, NW_pad):
    """Processes Nb images per grid step.

    x_ref     : (Nb, Cin, H, W)            activations (compute dtype, e.g. bf16)
    w_ref     : (Cout, D_pad)              weight slab, tap-major / channel-minor
    o_ref     : (Nb, Cout, H_out*Wp)       wide, lane-dense output slab
    xpad_ref  : (Nb, Cin, Hp*Wp + K - 1)   zero-padded images, spatially flattened
    patch_ref : (D_pad, Nb*NW_pad)         im2col buffer; per-image column block is
                                           padded to a 128-lane multiple (NW_pad) so
                                           stores stay lane-aligned
    """
    KK = K * K

    # One-time init of the persistent scratch: pad borders / tails, padded weight
    # rows [K*K*Cin : D_pad), and the inter-image gap columns.  Every interior
    # position is rewritten each grid step at identical offsets, so this is safe as
    # long as the grid axis runs sequentially on one core ("arbitrary" semantics).
    @pl.when(pl.program_id(0) == 0)
    def _init():
        xpad_ref[...] = jnp.zeros(xpad_ref.shape, xpad_ref.dtype)
        patch_ref[...] = jnp.zeros(patch_ref.shape, patch_ref.dtype)

    for b in range(Nb):
        # --- 1) in-kernel zero padding: copy image rows into the flattened slab ---
        # TODO(synk): at large H switch to lax.fori_loop to bound unrolled code size.
        for h in range(H):
            off = (h + pad) * Wp + pad
            xpad_ref[b, :, off:off + W] = x_ref[b, :, h, :]

        # --- 2) "wide" im2col at Cin granularity: one contiguous, lane-shifted ----
        #        slice copy per tap (columns laid out on a Wp stride).
        # TODO(synk): reuse one row-span load per kh and derive kw shifts on the XLU.
        col0 = b * NW_pad
        for t in range(KK):
            src = (t // K) * Wp + (t % K)
            patch_ref[t * Cin:(t + 1) * Cin, col0:col0 + NW_img] = (
                xpad_ref[b, :, src:src + NW_img])

    # --- 3) one MXU contraction for all Nb images, f32 accumulation ---------------
    acc = jnp.dot(w_ref[...], patch_ref[...],
                  preferred_element_type=jnp.float32)        # (Cout, Nb*NW_pad)

    # --- 4) one unmasked, lane-dense store per image (wide slab; crop in wrapper) -
    for b in range(Nb):
        o_ref[b, :, :] = acc[:, b * NW_pad:b * NW_pad + NW_img].astype(o_ref.dtype)


def _largest_divisor_at_most(n, cap):
    cap = max(1, min(n, cap))
    for d in range(cap, 0, -1):
        if n % d == 0:
            return d
    return 1


def bayar_conv2d(x_nchw, w_oihw, *, stride=1, padding=2,
                 compute_dtype=jnp.bfloat16, out_dtype=None):
    """x_nchw: (N, Cin, H, W); w_oihw: (Cout, Cin, K, K). Returns NCHW output."""
    assert stride == 1  # TODO(synk): general stride not implemented (module default is 1)
    if out_dtype is None:
        out_dtype = compute_dtype   # bf16 output halves the dominant output HBM DMA
    N, Cin, H, W = x_nchw.shape
    Cout, Cin_w, K, K2 = w_oihw.shape
    assert Cin_w == Cin and K == K2
    H_out = H + 2 * padding - K + 1
    W_out = W + 2 * padding - K + 1
    Hp, Wp = H + 2 * padding, W + 2 * padding
    NW_img = H_out * Wp                        # wide (Wp-strided) flattened width per image
    NW_pad = ((NW_img + 127) // 128) * 128     # lane-aligned per-image patch column block
    Lx = Hp * Wp + (K - 1)                     # flattened padded image + slice overrun room
    D = K * K * Cin                            # Cin-granular contraction depth (no zero taps)
    D_pad = ((D + 7) // 8) * 8

    # Weight -> (Cout, D_pad) slab, tap-major / channel-minor; padded rows are zero.
    w_slab = jnp.transpose(w_oihw.reshape(Cout, Cin, K * K), (0, 2, 1)).reshape(Cout, D)
    w_slab = jnp.pad(w_slab, ((0, 0), (0, D_pad - D))).astype(compute_dtype)

    # Only wrapper-side activation op: dtype cast.
    x_c = x_nchw.astype(compute_dtype)

    # Batch Nb images per grid step (amortize per-step overhead, enlarge DMAs),
    # bounded by a conservative VMEM budget and a code-size cap.
    itm_c = np.dtype(compute_dtype).itemsize
    itm_o = np.dtype(out_dtype).itemsize
    per_image_vmem = (itm_c * (Cin * Lx + D_pad * NW_pad + 2 * Cin * H * W)
                      + 2 * itm_o * Cout * NW_img)
    budget = 8 * 1024 * 1024
    Nb = _largest_divisor_at_most(N, min(8, max(1, budget // max(per_image_vmem, 1))))

    out_wide = pl.pallas_call(
        functools.partial(_bayar_conv_kernel, K=K, pad=padding, H=H, W=W,
                          Wp=Wp, Cin=Cin, Nb=Nb, NW_img=NW_img, NW_pad=NW_pad),
        out_shape=jax.ShapeDtypeStruct((N, Cout, NW_img), out_dtype),
        grid=(N // Nb,),
        in_specs=[
            pl.BlockSpec((Nb, Cin, H, W), lambda n: (n, 0, 0, 0)),
            pl.BlockSpec((Cout, D_pad), lambda n: (0, 0)),
        ],
        out_specs=pl.BlockSpec((Nb, Cout, NW_img), lambda n: (n, 0, 0)),
        scratch_shapes=[
            pltpu.VMEM((Nb, Cin, Lx), compute_dtype),
            pltpu.VMEM((D_pad, Nb * NW_pad), compute_dtype),
        ],
        compiler_params=pltpu.CompilerParams(
            # "arbitrary": the one-time scratch init (pl.when on program_id==0) requires
            # the grid axis to run sequentially on a single core; a megacore-parallel
            # split would leave the second core's persistent scratch uninitialized.
            dimension_semantics=("arbitrary",),
            vmem_limit_bytes=32 * 1024 * 1024,
        ),
        # TODO(synk): v7x — add a second "parallel" grid axis over halo'd H_out row
        # tiles (2 TensorCores, 64 MiB VMEM) and make the scratch init per-core safe.
    )(x_c, w_slab)

    # Crop the K-1 garbage columns per row; metadata reshape back to NCHW spatial dims.
    return out_wide.reshape(N, Cout, H_out, Wp)[:, :, :, :W_out]


def make_bayar_weight(key, in_channels, out_channels, kernel_size=5):
    """Deterministic parameter init + bayarConstraint(); returns the OIHW weight."""
    kk = kernel_size * kernel_size
    kernel = jax.random.uniform(key, (in_channels, out_channels, kk - 1),
                                dtype=jnp.float32)            # ~ torch.rand
    # Normalize so each (in, out) slice of the K*K-1 free taps sums to 1.
    kernel = kernel / kernel.sum(axis=2, keepdims=True)
    minus1 = -jnp.ones((in_channels, out_channels, 1), jnp.float32)
    ctr = kk // 2
    real = jnp.concatenate([kernel[:, :, :ctr], minus1, kernel[:, :, ctr:]], axis=2)
    # PyTorch does a raw .reshape of the contiguous (in, out, K*K) tensor into
    # (out, in, K, K) -- reproduce exactly (NOT a transpose).
    return real.reshape(out_channels, in_channels, kernel_size, kernel_size)


if __name__ == "__main__":
    key = jax.random.PRNGKey(0)
    k_w, k_x = jax.random.split(key)

    in_channels, out_channels = 4, 8
    N, H, W = 2, 16, 16
    kernel_size, stride, padding = 5, 1, 2

    w_oihw = make_bayar_weight(k_w, in_channels, out_channels, kernel_size)
    x = jax.random.normal(k_x, (N, in_channels, H, W), dtype=jnp.float32)

    out = bayar_conv2d(x, w_oihw, stride=stride, padding=padding)
    out = jax.block_until_ready(out)

    # Reference: XLA conv on the same bf16-rounded operands (the kernel's MXU path
    # is bf16 x bf16 -> f32 and the kernel output defaults to bf16), so tolerances
    # reflect that intentional precision choice.
    x_c = x.astype(jnp.bfloat16).astype(jnp.float32)
    w_c = w_oihw.astype(jnp.bfloat16).astype(jnp.float32)
    ref = jax.lax.conv_general_dilated(
        x_c, w_c, window_strides=(stride, stride),
        padding=((padding, padding), (padding, padding)),
        dimension_numbers=("NCHW", "OIHW", "NCHW"),
        precision=jax.lax.Precision.HIGHEST)
    ref = jax.block_until_ready(ref)

    out_f32 = out.astype(jnp.float32)
    assert out.shape == (N, out_channels, H, W), out.shape
    assert jnp.allclose(out_f32, ref, atol=3e-2, rtol=3e-2), (
        "mismatch vs reference conv: max abs diff = %f"
        % float(jnp.max(jnp.abs(out_f32 - ref))))
    print("KERNEL_OK")
</pallas_src>

<mosaic_0001>
module attributes {stable_mosaic.version = 11 : i64} {
  func.func @_bayar_conv_kernel(%arg0: i32, %arg1: memref<2x4x16x16xbf16, #tpu.memory_space<vmem>>, %arg2: memref<8x104xbf16, #tpu.memory_space<vmem>>, %arg3: memref<2x8x320xbf16, #tpu.memory_space<vmem>>, %arg4: memref<2x4x404xbf16, #tpu.memory_space<vmem>>, %arg5: memref<104x768xbf16, #tpu.memory_space<vmem>>) attributes {dimension_semantics = [#tpu.dimension_semantics<arbitrary>], iteration_bounds = array<i64: 1>, scalar_prefetch = 0 : i64, scratch_operands = 2 : i64, tpu.core_type = #tpu.core_type<tc>, window_params = [{transform_indices = @transform_0, window_bounds = array<i64: 2, 4, 16, 16>}, {pipeline_mode = #tpu.pipeline_mode<synchronous>, transform_indices = @transform_1, window_bounds = array<i64: 8, 104>}, {transform_indices = @transform_2, window_bounds = array<i64: 2, 8, 320>}]} {
    %c0_i32 = arith.constant 0 : i32
    %0 = arith.cmpi eq, %arg0, %c0_i32 : i32
    %1 = arith.extui %0 : i1 to i32
    %c0_i32_0 = arith.constant 0 : i32
    %2 = arith.cmpi ne, %1, %c0_i32_0 : i32
    scf.if %2 {
      %cst_422 = arith.constant 0.000000e+00 : bf16
      %326 = vector.broadcast %cst_422 : bf16 to vector<2x4x404xbf16>
      %c0_423 = arith.constant 0 : index
      %c0_424 = arith.constant 0 : index
      %c0_425 = arith.constant 0 : index
      %327 = vector.load %arg4[%c0_423, %c0_424, %c0_425] : memref<2x4x404xbf16, #tpu.memory_space<vmem>>, vector<2x4x404xbf16>
      tpu.vector_store %arg4[%c0_423, %c0_424, %c0_425], %326 {strides = array<i32>} : memref<2x4x404xbf16, #tpu.memory_space<vmem>>, vector<2x4x404xbf16>,
      %cst_426 = arith.constant 0.000000e+00 : bf16
      %328 = vector.broadcast %cst_426 : bf16 to vector<104x768xbf16>
      %c0_427 = arith.constant 0 : index
      %c0_428 = arith.constant 0 : index
      %329 = vector.load %arg5[%c0_427, %c0_428] : memref<104x768xbf16, #tpu.memory_space<vmem>>, vector<104x768xbf16>
      tpu.vector_store %arg5[%c0_427, %c0_428], %328 {strides = array<i32>} : memref<104x768xbf16, #tpu.memory_space<vmem>>, vector<104x768xbf16>,
    } else {
    }
    %c0 = arith.constant 0 : index
    %c0_1 = arith.constant 0 : index
    %c0_2 = arith.constant 0 : index
    %c0_3 = arith.constant 0 : index
    %3 = vector.load %arg1[%c0, %c0_1, %c0_2, %c0_3] : memref<2x4x16x16xbf16, #tpu.memory_space<vmem>>, vector<1x4x1x16xbf16>
    %4 = vector.shape_cast %3 : vector<1x4x1x16xbf16> to vector<4x16xbf16>
    %c0_4 = arith.constant 0 : index
    %c0_5 = arith.constant 0 : index
    %c42 = arith.constant 42 : index
    %5 = vector.load %arg4[%c0_4, %c0_5, %c42] : memref<2x4x404xbf16, #tpu.memory_space<vmem>>, vector<1x4x16xbf16>
    %6 = vector.shape_cast %5 : vector<1x4x16xbf16> to vector<4x16xbf16>
    %7 = vector.shape_cast %4 : vector<4x16xbf16> to vector<1x4x16xbf16>
    tpu.vector_store %arg4[%c0_4, %c0_5, %c42], %7 {strides = array<i32>} : memref<2x4x404xbf16, #tpu.memory_space<vmem>>, vector<1x4x16xbf16>,
    %c0_6 = arith.constant 0 : index
    %c0_7 = arith.constant 0 : index
    %c1 = arith.constant 1 : index
    %c0_8 = arith.constant 0 : index
    %8 = vector.load %arg1[%c0_6, %c0_7, %c1, %c0_8] : memref<2x4x16x16xbf16, #tpu.memory_space<vmem>>, vector<1x4x1x16xbf16>
    %9 = vector.shape_cast %8 : vector<1x4x1x16xbf16> to vector<4x16xbf16>
    %c0_9 = arith.constant 0 : index
    %c0_10 = arith.constant 0 : index
    %c62 = arith.constant 62 : index
    %10 = vector.load %arg4[%c0_9, %c0_10, %c62] : memref<2x4x404xbf16, #tpu.memory_space<vmem>>, vector<1x4x16xbf16>
    %11 = vector.shape_cast %10 : vector<1x4x16xbf16> to vector<4x16xbf16>
    %12 = vector.shape_cast %9 : vector<4x16xbf16> to vector<1x4x16xbf16>
    tpu.vector_store %arg4[%c0_9, %c0_10, %c62], %12 {strides = array<i32>} : memref<2x4x404xbf16, #tpu.memory_space<vmem>>, vector<1x4x16xbf16>,
    %c0_11 = arith.constant 0 : index
    %c0_12 = arith.constant 0 : index
    %c2 = arith.constant 2 : index
    %c0_13 = arith.constant 0 : index
    %13 = vector.load %arg1[%c0_11, %c0_12, %c2, %c0_13] : memref<2x4x16x16xbf16, #tpu.memory_space<vmem>>, vector<1x4x1x16xbf16>
    %14 = vector.shape_cast %13 : vector<1x4x1x16xbf16> to vector<4x16xbf16>
    %c0_14 = arith.constant 0 : index
    %c0_15 = arith.constant 0 : index
    %c82 = arith.constant 82 : index
    %15 = vector.load %arg4[%c0_14, %c0_15, %c82] : memref<2x4x404xbf16, #tpu.memory_space<vmem>>, vector<1x4x16xbf16>
    %16 = vector.shape_cast %15 : vector<1x4x16xbf16> to vector<4x16xbf16>
    %17 = vector.shape_cast %14 : vector<4x16xbf16> to vector<1x4x16xbf16>
    tpu.vector_store %arg4[%c0_14, %c0_15, %c82], %17 {strides = array<i32>} : memref<2x4x404xbf16, #tpu.memory_space<vmem>>, vector<1x4x16xbf16>,
    %c0_16 = arith.constant 0 : index
    %c0_17 = arith.constant 0 : index
    %c3 = arith.constant 3 : index
    %c0_18 = arith.constant 0 : index
    %18 = vector.load %arg1[%c0_16, %c0_17, %c3, %c0_18] : memref<2x4x16x16xbf16, #tpu.memory_space<vmem>>, vector<1x4x1x16xbf16>
    %19 = vector.shape_cast %18 : vector<1x4x1x16xbf16> to vector<4x16xbf16>
    %c0_19 = arith.constant 0 : index
    %c0_20 = arith.constant 0 : index
    %c102 = arith.constant 102 : index
    %20 = vector.load %arg4[%c0_19, %c0_20, %c102] : memref<2x4x404xbf16, #tpu.memory_space<vmem>>, vector<1x4x16xbf16>
    %21 = vector.shape_cast %20 : vector<1x4x16xbf16> to vector<4x16xbf16>
    %22 = vector.shape_cast %19 : vector<4x16xbf16> to vector<1x4x16xbf16>
    tpu.vector_store %arg4[%c0_19, %c0_20, %c102], %22 {strides = array<i32>} : memref<2x4x404xbf16, #tpu.memory_space<vmem>>, vector<1x4x16xbf16>,
    %c0_21 = arith.constant 0 : index
    %c0_22 = arith.constant 0 : index
    %c4 = arith.constant 4 : index
    %c0_23 = arith.constant 0 : index
    %23 = vector.load %arg1[%c0_21, %c0_22, %c4, %c0_23] : memref<2x4x16x16xbf16, #tpu.memory_space<vmem>>, vector<1x4x1x16xbf16>
    %24 = vector.shape_cast %23 : vector<1x4x1x16xbf16> to vector<4x16xbf16>
    %c0_24 = arith.constant 0 : index
    %c0_25 = arith.constant 0 : index
    %c122 = arith.constant 122 : index
    %25 = vector.load %arg4[%c0_24, %c0_25, %c122] : memref<2x4x404xbf16, #tpu.memory_space<vmem>>, vector<1x4x16xbf16>
    %26 = vector.shape_cast %25 : vector<1x4x16xbf16> to vector<4x16xbf16>
    %27 = vector.shape_cast %24 : vector<4x16xbf16> to vector<1x4x16xbf16>
    tpu.vector_store %arg4[%c0_24, %c0_25, %c122], %27 {strides = array<i32>} : memref<2x4x404xbf16, #tpu.memory_space<vmem>>, vector<1x4x16xbf16>,
    %c0_26 = arith.constant 0 : index
    %c0_27 = arith.constant 0 : index
    %c5 = arith.constant 5 : index
    %c0_28 = arith.constant 0 : index
    %28 = vector.load %arg1[%c0_26, %c0_27, %c5, %c0_28] : memref<2x4x16x16xbf16, #tpu.memory_space<vmem>>, vector<1x4x1x16xbf16>
    %29 = vector.shape_cast %28 : vector<1x4x1x16xbf16> to vector<4x16xbf16>
    %c0_29 = arith.constant 0 : index
    %c0_30 = arith.constant 0 : index
    %c142 = arith.constant 142 : index
    %30 = vector.load %arg4[%c0_29, %c0_30, %c142] : memref<2x4x404xbf16, #tpu.memory_space<vmem>>, vector<1x4x16xbf16>
    %31 = vector.shape_cast %30 : vector<1x4x16xbf16> to vector<4x16xbf16>
    %32 = vector.shape_cast %29 : vector<4x16xbf16> to vector<1x4x16xbf16>
    tpu.vector_store %arg4[%c0_29, %c0_30, %c142], %32 {strides = array<i32>} : memref<2x4x404xbf16, #tpu.memory_space<vmem>>, vector<1x4x16xbf16>,
    %c0_31 = arith.constant 0 : index
    %c0_32 = arith.constant 0 : index
    %c6 = arith.constant 6 : index
    %c0_33 = arith.constant 0 : index
    %33 = vector.load %arg1[%c0_31, %c0_32, %c6, %c0_33] : memref<2x4x16x16xbf16, #tpu.memory_space<vmem>>, vector<1x4x1x16xbf16>
    %34 = vector.shape_cast %33 : vector<1x4x1x16xbf16> to vector<4x16xbf16>
    %c0_34 = arith.constant 0 : index
    %c0_35 = arith.constant 0 : index
    %c162 = arith.constant 162 : index
    %35 = vector.load %arg4[%c0_34, %c0_35, %c162] : memref<2x4x404xbf16, #tpu.memory_space<vmem>>, vector<1x4x16xbf16>
    %36 = vector.shape_cast %35 : vector<1x4x16xbf16> to vector<4x16xbf16>
    %37 = vector.shape_cast %34 : vector<4x16xbf16> to vector<1x4x16xbf16>
    tpu.vector_store %arg4[%c0_34, %c0_35, %c162], %37 {strides = array<i32>} : memref<2x4x404xbf16, #tpu.memory_space<vmem>>, vector<1x4x16xbf16>,
    %c0_36 = arith.constant 0 : index
    %c0_37 = arith.constant 0 : index
    %c7 = arith.constant 7 : index
    %c0_38 = arith.constant 0 : index
    %38 = vector.load %arg1[%c0_36, %c0_37, %c7, %c0_38] : memref<2x4x16x16xbf16, #tpu.memory_space<vmem>>, vector<1x4x1x16xbf16>
    %39 = vector.shape_cast %38 : vector<1x4x1x16xbf16> to vector<4x16xbf16>
    %c0_39 = arith.constant 0 : index
    %c0_40 = arith.constant 0 : index
    %c182 = arith.constant 182 : index
    %40 = vector.load %arg4[%c0_39, %c0_40, %c182] : memref<2x4x404xbf16, #tpu.memory_space<vmem>>, vector<1x4x16xbf16>
    %41 = vector.shape_cast %40 : vector<1x4x16xbf16> to vector<4x16xbf16>
    %42 = vector.shape_cast %39 : vector<4x16xbf16> to vector<1x4x16xbf16>
    tpu.vector_store %arg4[%c0_39, %c0_40, %c182], %42 {strides = array<i32>} : memref<2x4x404xbf16, #tpu.memory_space<vmem>>, vector<1x4x16xbf16>,
    %c0_41 = arith.constant 0 : index
    %c0_42 = arith.constant 0 : index
    %c8 = arith.constant 8 : index
    %c0_43 = arith.constant 0 : index
    %43 = vector.load %arg1[%c0_41, %c0_42, %c8, %c0_43] : memref<2x4x16x16xbf16, #tpu.memory_space<vmem>>, vector<1x4x1x16xbf16>
    %44 = vector.shape_cast %43 : vector<1x4x1x16xbf16> to vector<4x16xbf16>
    %c0_44 = arith.constant 0 : index
    %c0_45 = arith.constant 0 : index
    %c202 = arith.constant 202 : index
    %45 = vector.load %arg4[%c0_44, %c0_45, %c202] : memref<2x4x404xbf16, #tpu.memory_space<vmem>>, vector<1x4x16xbf16>
    %46 = vector.shape_cast %45 : vector<1x4x16xbf16> to vector<4x16xbf16>
    %47 = vector.shape_cast %44 : vector<4x16xbf16> to vector<1x4x16xbf16>
    tpu.vector_store %arg4[%c0_44, %c0_45, %c202], %47 {strides = array<i32>} : memref<2x4x404xbf16, #tpu.memory_space<vmem>>, vector<1x4x16xbf16>,
    %c0_46 = arith.constant 0 : index
    %c0_47 = arith.constant 0 : index
    %c9 = arith.constant 9 : index
    %c0_48 = arith.constant 0 : index
    %48 = vector.load %arg1[%c0_46, %c0_47, %c9, %c0_48] : memref<2x4x16x16xbf16, #tpu.memory_space<vmem>>, vector<1x4x1x16xbf16>
    %49 = vector.shape_cast %48 : vector<1x4x1x16xbf16> to vector<4x16xbf16>
    %c0_49 = arith.constant 0 : index
    %c0_50 = arith.constant 0 : index
    %c222 = arith.constant 222 : index
    %50 = vector.load %arg4[%c0_49, %c0_50, %c222] : memref<2x4x404xbf16, #tpu.memory_space<vmem>>, vector<1x4x16xbf16>
    %51 = vector.shape_cast %50 : vector<1x4x16xbf16> to vector<4x16xbf16>
    %52 = vector.shape_cast %49 : vector<4x16xbf16> to vector<1x4x16xbf16>
    tpu.vector_store %arg4[%c0_49, %c0_50, %c222], %52 {strides = array<i32>} : memref<2x4x404xbf16, #tpu.memory_space<vmem>>, vector<1x4x16xbf16>,
    %c0_51 = arith.constant 0 : index
    %c0_52 = arith.constant 0 : index
    %c10 = arith.constant 10 : index
    %c0_53 = arith.constant 0 : index
    %53 = vector.load %arg1[%c0_51, %c0_52, %c10, %c0_53] : memref<2x4x16x16xbf16, #tpu.memory_space<vmem>>, vector<1x4x1x16xbf16>
    %54 = vector.shape_cast %53 : vector<1x4x1x16xbf16> to vector<4x16xbf16>
    %c0_54 = arith.constant 0 : index
    %c0_55 = arith.constant 0 : index
    %c242 = arith.constant 242 : index
    %55 = vector.load %arg4[%c0_54, %c0_55, %c242] : memref<2x4x404xbf16, #tpu.memory_space<vmem>>, vector<1x4x16xbf16>
    %56 = vector.shape_cast %55 : vector<1x4x16xbf16> to vector<4x16xbf16>
    %57 = vector.shape_cast %54 : vector<4x16xbf16> to vector<1x4x16xbf16>
    tpu.vector_store %arg4[%c0_54, %c0_55, %c242], %57 {strides = array<i32>} : memref<2x4x404xbf16, #tpu.memory_space<vmem>>, vector<1x4x16xbf16>,
    %c0_56 = arith.constant 0 : index
    %c0_57 = arith.constant 0 : index
    %c11 = arith.constant 11 : index
    %c0_58 = arith.constant 0 : index
    %58 = vector.load %arg1[%c0_56, %c0_57, %c11, %c0_58] : memref<2x4x16x16xbf16, #tpu.memory_space<vmem>>, vector<1x4x1x16xbf16>
    %59 = vector.shape_cast %58 : vector<1x4x1x16xbf16> to vector<4x16xbf16>
    %c0_59 = arith.constant 0 : index
    %c0_60 = arith.constant 0 : index
    %c262 = arith.constant 262 : index
    %60 = vector.load %arg4[%c0_59, %c0_60, %c262] : memref<2x4x404xbf16, #tpu.memory_space<vmem>>, vector<1x4x16xbf16>
    %61 = vector.shape_cast %60 : vector<1x4x16xbf16> to vector<4x16xbf16>
    %62 = vector.shape_cast %59 : vector<4x16xbf16> to vector<1x4x16xbf16>
    tpu.vector_store %arg4[%c0_59, %c0_60, %c262], %62 {strides = array<i32>} : memref<2x4x404xbf16, #tpu.memory_space<vmem>>, vector<1x4x16xbf16>,
    %c0_61 = arith.constant 0 : index
    %c0_62 = arith.constant 0 : index
    %c12 = arith.constant 12 : index
    %c0_63 = arith.constant 0 : index
    %63 = vector.load %arg1[%c0_61, %c0_62, %c12, %c0_63] : memref<2x4x16x16xbf16, #tpu.memory_space<vmem>>, vector<1x4x1x16xbf16>
    %64 = vector.shape_cast %63 : vector<1x4x1x16xbf16> to vector<4x16xbf16>
    %c0_64 = arith.constant 0 : index
    %c0_65 = arith.constant 0 : index
    %c282 = arith.constant 282 : index
    %65 = vector.load %arg4[%c0_64, %c0_65, %c282] : memref<2x4x404xbf16, #tpu.memory_space<vmem>>, vector<1x4x16xbf16>
    %66 = vector.shape_cast %65 : vector<1x4x16xbf16> to vector<4x16xbf16>
    %67 = vector.shape_cast %64 : vector<4x16xbf16> to vector<1x4x16xbf16>
    tpu.vector_store %arg4[%c0_64, %c0_65, %c282], %67 {strides = array<i32>} : memref<2x4x404xbf16, #tpu.memory_space<vmem>>, vector<1x4x16xbf16>,
    %c0_66 = arith.constant 0 : index
    %c0_67 = arith.constant 0 : index
    %c13 = arith.constant 13 : index
    %c0_68 = arith.constant 0 : index
    %68 = vector.load %arg1[%c0_66, %c0_67, %c13, %c0_68] : memref<2x4x16x16xbf16, #tpu.memory_space<vmem>>, vector<1x4x1x16xbf16>
    %69 = vector.shape_cast %68 : vector<1x4x1x16xbf16> to vector<4x16xbf16>
    %c0_69 = arith.constant 0 : index
    %c0_70 = arith.constant 0 : index
    %c302 = arith.constant 302 : index
    %70 = vector.load %arg4[%c0_69, %c0_70, %c302] : memref<2x4x404xbf16, #tpu.memory_space<vmem>>, vector<1x4x16xbf16>
    %71 = vector.shape_cast %70 : vector<1x4x16xbf16> to vector<4x16xbf16>
    %72 = vector.shape_cast %69 : vector<4x16xbf16> to vector<1x4x16xbf16>
    tpu.vector_store %arg4[%c0_69, %c0_70, %c302], %72 {strides = array<i32>} : memref<2x4x404xbf16, #tpu.memory_space<vmem>>, vector<1x4x16xbf16>,
    %c0_71 = arith.constant 0 : index
    %c0_72 = arith.constant 0 : index
    %c14 = arith.constant 14 : index
    %c0_73 = arith.constant 0 : index
    %73 = vector.load %arg1[%c0_71, %c0_72, %c14, %c0_73] : memref<2x4x16x16xbf16, #tpu.memory_space<vmem>>, vector<1x4x1x16xbf16>
    %74 = vector.shape_cast %73 : vector<1x4x1x16xbf16> to vector<4x16xbf16>
    %c0_74 = arith.constant 0 : index
    %c0_75 = arith.constant 0 : index
    %c322 = arith.constant 322 : index
    %75 = vector.load %arg4[%c0_74, %c0_75, %c322] : memref<2x4x404xbf16, #tpu.memory_space<vmem>>, vector<1x4x16xbf16>
    %76 = vector.shape_cast %75 : vector<1x4x16xbf16> to vector<4x16xbf16>
    %77 = vector.shape_cast %74 : vector<4x16xbf16> to vector<1x4x16xbf16>
    tpu.vector_store %arg4[%c0_74, %c0_75, %c322], %77 {strides = array<i32>} : memref<2x4x404xbf16, #tpu.memory_space<vmem>>, vector<1x4x16xbf16>,
    %c0_76 = arith.constant 0 : index
    %c0_77 = arith.constant 0 : index
    %c15 = arith.constant 15 : index
    %c0_78 = arith.constant 0 : index
    %78 = vector.load %arg1[%c0_76, %c0_77, %c15, %c0_78] : memref<2x4x16x16xbf16, #tpu.memory_space<vmem>>, vector<1x4x1x16xbf16>
    %79 = vector.shape_cast %78 : vector<1x4x1x16xbf16> to vector<4x16xbf16>
    %c0_79 = arith.constant 0 : index
    %c0_80 = arith.constant 0 : index
    %c342 = arith.constant 342 : index
    %80 = vector.load %arg4[%c0_79, %c0_80, %c342] : memref<2x4x404xbf16, #tpu.memory_space<vmem>>, vector<1x4x16xbf16>
    %81 = vector.shape_cast %80 : vector<1x4x16xbf16> to vector<4x16xbf16>
    %82 = vector.shape_cast %79 : vector<4x16xbf16> to vector<1x4x16xbf16>
    tpu.vector_store %arg4[%c0_79, %c0_80, %c342], %82 {strides = array<i32>} : memref<2x4x404xbf16, #tpu.memory_space<vmem>>, vector<1x4x16xbf16>,
    %c0_81 = arith.constant 0 : index
    %c0_82 = arith.constant 0 : index
    %c0_83 = arith.constant 0 : index
    %83 = vector.load %arg4[%c0_81, %c0_82, %c0_83] : memref<2x4x404xbf16, #tpu.memory_space<vmem>>, vector<1x4x320xbf16>
    %84 = vector.shape_cast %83 : vector<1x4x320xbf16> to vector<4x320xbf16>
    %c0_84 = arith.constant 0 : index
    %c0_85 = arith.constant 0 : index
    %85 = vector.load %arg5[%c0_84, %c0_85] : memref<104x768xbf16, #tpu.memory_space<vmem>>, vector<4x320xbf16>
    tpu.vector_store %arg5[%c0_84, %c0_85], %84 {strides = array<i32>} : memref<104x768xbf16, #tpu.memory_space<vmem>>, vector<4x320xbf16>,
    %c0_86 = arith.constant 0 : index
    %c0_87 = arith.constant 0 : index
    %c1_88 = arith.constant 1 : index
    %86 = vector.load %arg4[%c0_86, %c0_87, %c1_88] : memref<2x4x404xbf16, #tpu.memory_space<vmem>>, vector<1x4x320xbf16>
    %87 = vector.shape_cast %86 : vector<1x4x320xbf16> to vector<4x320xbf16>
    %c4_89 = arith.constant 4 : index
    %c0_90 = arith.constant 0 : index
    %88 = vector.load %arg5[%c4_89, %c0_90] : memref<104x768xbf16, #tpu.memory_space<vmem>>, vector<4x320xbf16>
    tpu.vector_store %arg5[%c4_89, %c0_90], %87 {strides = array<i32>} : memref<104x768xbf16, #tpu.memory_space<vmem>>, vector<4x320xbf16>,
    %c0_91 = arith.constant 0 : index
    %c0_92 = arith.constant 0 : index
    %c2_93 = arith.constant 2 : index
    %89 = vector.load %arg4[%c0_91, %c0_92, %c2_93] : memref<2x4x404xbf16, #tpu.memory_space<vmem>>, vector<1x4x320xbf16>
    %90 = vector.shape_cast %89 : vector<1x4x320xbf16> to vector<4x320xbf16>
    %c8_94 = arith.constant 8 : index
    %c0_95 = arith.constant 0 : index
    %91 = vector.load %arg5[%c8_94, %c0_95] : memref<104x768xbf16, #tpu.memory_space<vmem>>, vector<4x320xbf16>
    tpu.vector_store %arg5[%c8_94, %c0_95], %90 {strides = array<i32>} : memref<104x768xbf16, #tpu.memory_space<vmem>>, vector<4x320xbf16>,
    %c0_96 = arith.constant 0 : index
    %c0_97 = arith.constant 0 : index
    %c3_98 = arith.constant 3 : index
    %92 = vector.load %arg4[%c0_96, %c0_97, %c3_98] : memref<2x4x404xbf16, #tpu.memory_space<vmem>>, vector<1x4x320xbf16>
    %93 = vector.shape_cast %92 : vector<1x4x320xbf16> to vector<4x320xbf16>
    %c12_99 = arith.constant 12 : index
    %c0_100 = arith.constant 0 : index
    %94 = vector.load %arg5[%c12_99, %c0_100] : memref<104x768xbf16, #tpu.memory_space<vmem>>, vector<4x320xbf16>
    tpu.vector_store %arg5[%c12_99, %c0_100], %93 {strides = array<i32>} : memref<104x768xbf16, #tpu.memory_space<vmem>>, vector<4x320xbf16>,
    %c0_101 = arith.constant 0 : index
    %c0_102 = arith.constant 0 : index
    %c4_103 = arith.constant 4 : index
    %95 = vector.load %arg4[%c0_101, %c0_102, %c4_103] : memref<2x4x404xbf16, #tpu.memory_space<vmem>>, vector<1x4x320xbf16>
    %96 = vector.shape_cast %95 : vector<1x4x320xbf16> to vector<4x320xbf16>
    %c16 = arith.constant 16 : index
    %c0_104 = arith.constant 0 : index
    %97 = vector.load %arg5[%c16, %c0_104] : memref<104x768xbf16, #tpu.memory_space<vmem>>, vector<4x320xbf16>
    tpu.vector_store %arg5[%c16, %c0_104], %96 {strides = array<i32>} : memref<104x768xbf16, #tpu.memory_space<vmem>>, vector<4x320xbf16>,
    %c0_105 = arith.constant 0 : index
    %c0_106 = arith.constant 0 : index
    %c20 = arith.constant 20 : index
    %98 = vector.load %arg4[%c0_105, %c0_106, %c20] : memref<2x4x404xbf16, #tpu.memory_space<vmem>>, vector<1x4x320xbf16>
    %99 = vector.shape_cast %98 : vector<1x4x320xbf16> to vector<4x320xbf16>
    %c20_107 = arith.constant 20 : index
    %c0_108 = arith.constant 0 : index
    %100 = vector.load %arg5[%c20_107, %c0_108] : memref<104x768xbf16, #tpu.memory_space<vmem>>, vector<4x320xbf16>
    tpu.vector_store %arg5[%c20_107, %c0_108], %99 {strides = array<i32>} : memref<104x768xbf16, #tpu.memory_space<vmem>>, vector<4x320xbf16>,
    %c0_109 = arith.constant 0 : index
    %c0_110 = arith.constant 0 : index
    %c21 = arith.constant 21 : index
    %101 = vector.load %arg4[%c0_109, %c0_110, %c21] : memref<2x4x404xbf16, #tpu.memory_space<vmem>>, vector<1x4x320xbf16>
    %102 = vector.shape_cast %101 : vector<1x4x320xbf16> to vector<4x320xbf16>
    %c24 = arith.constant 24 : index
    %c0_111 = arith.constant 0 : index
    %103 = vector.load %arg5[%c24, %c0_111] : memref<104x768xbf16, #tpu.memory_space<vmem>>, vector<4x320xbf16>
    tpu.vector_store %arg5[%c24, %c0_111], %102 {strides = array<i32>} : memref<104x768xbf16, #tpu.memory_space<vmem>>, vector<4x320xbf16>,
    %c0_112 = arith.constant 0 : index
    %c0_113 = arith.constant 0 : index
    %c22 = arith.constant 22 : index
    %104 = vector.load %arg4[%c0_112, %c0_113, %c22] : memref<2x4x404xbf16, #tpu.memory_space<vmem>>, vector<1x4x320xbf16>
    %105 = vector.shape_cast %104 : vector<1x4x320xbf16> to vector<4x320xbf16>
    %c28 = arith.constant 28 : index
    %c0_114 = arith.constant 0 : index
    %106 = vector.load %arg5[%c28, %c0_114] : memref<104x768xbf16, #tpu.memory_space<vmem>>, vector<4x320xbf16>
    tpu.vector_store %arg5[%c28, %c0_114], %105 {strides = array<i32>} : memref<104x768xbf16, #tpu.memory_space<vmem>>, vector<4x320xbf16>,
    %c0_115 = arith.constant 0 : index
    %c0_116 = arith.constant 0 : index
    %c23 = arith.constant 23 : index
    %107 = vector.load %arg4[%c0_115, %c0_116, %c23] : memref<2x4x404xbf16, #tpu.memory_space<vmem>>, vector<1x4x320xbf16>
    %108 = vector.shape_cast %107 : vector<1x4x320xbf16> to vector<4x320xbf16>
    %c32 = arith.constant 32 : index
    %c0_117 = arith.constant 0 : index
    %109 = vector.load %arg5[%c32, %c0_117] : memref<104x768xbf16, #tpu.memory_space<vmem>>, vector<4x320xbf16>
    tpu.vector_store %arg5[%c32, %c0_117], %108 {strides = array<i32>} : memref<104x768xbf16, #tpu.memory_space<vmem>>, vector<4x320xbf16>,
    %c0_118 = arith.constant 0 : index
    %c0_119 = arith.constant 0 : index
    %c24_120 = arith.constant 24 : index
    %110 = vector.load %arg4[%c0_118, %c0_119, %c24_120] : memref<2x4x404xbf16, #tpu.memory_space<vmem>>, vector<1x4x320xbf16>
    %111 = vector.shape_cast %110 : vector<1x4x320xbf16> to vector<4x320xbf16>
    %c36 = arith.constant 36 : index
    %c0_121 = arith.constant 0 : index
    %112 = vector.load %arg5[%c36, %c0_121] : memref<104x768xbf16, #tpu.memory_space<vmem>>, vector<4x320xbf16>
    tpu.vector_store %arg5[%c36, %c0_121], %111 {strides = array<i32>} : memref<104x768xbf16, #tpu.memory_space<vmem>>, vector<4x320xbf16>,
    %c0_122 = arith.constant 0 : index
    %c0_123 = arith.constant 0 : index
    %c40 = arith.constant 40 : index
    %113 = vector.load %arg4[%c0_122, %c0_123, %c40] : memref<2x4x404xbf16, #tpu.memory_space<vmem>>, vector<1x4x320xbf16>
    %114 = vector.shape_cast %113 : vector<1x4x320xbf16> to vector<4x320xbf16>
    %c40_124 = arith.constant 40 : index
    %c0_125 = arith.constant 0 : index
    %115 = vector.load %arg5[%c40_124, %c0_125] : memref<104x768xbf16, #tpu.memory_space<vmem>>, vector<4x320xbf16>
    tpu.vector_store %arg5[%c40_124, %c0_125], %114 {strides = array<i32>} : memref<104x768xbf16, #tpu.memory_space<vmem>>, vector<4x320xbf16>,
    %c0_126 = arith.constant 0 : index
    %c0_127 = arith.constant 0 : index
    %c41 = arith.constant 41 : index
    %116 = vector.load %arg4[%c0_126, %c0_127, %c41] : memref<2x4x404xbf16, #tpu.memory_space<vmem>>, vector<1x4x320xbf16>
    %117 = vector.shape_cast %116 : vector<1x4x320xbf16> to vector<4x320xbf16>
    %c44 = arith.constant 44 : index
    %c0_128 = arith.constant 0 : index
    %118 = vector.load %arg5[%c44, %c0_128] : memref<104x768xbf16, #tpu.memory_space<vmem>>, vector<4x320xbf16>
    tpu.vector_store %arg5[%c44, %c0_128], %117 {strides = array<i32>} : memref<104x768xbf16, #tpu.memory_space<vmem>>, vector<4x320xbf16>,
    %c0_129 = arith.constant 0 : index
    %c0_130 = arith.constant 0 : index
    %c42_131 = arith.constant 42 : index
    %119 = vector.load %arg4[%c0_129, %c0_130, %c42_131] : memref<2x4x404xbf16, #tpu.memory_space<vmem>>, vector<1x4x320xbf16>
    %120 = vector.shape_cast %119 : vector<1x4x320xbf16> to vector<4x320xbf16>
    %c48 = arith.constant 48 : index
    %c0_132 = arith.constant 0 : index
    %121 = vector.load %arg5[%c48, %c0_132] : memref<104x768xbf16, #tpu.memory_space<vmem>>, vector<4x320xbf16>
    tpu.vector_store %arg5[%c48, %c0_132], %120 {strides = array<i32>} : memref<104x768xbf16, #tpu.memory_space<vmem>>, vector<4x320xbf16>,
    %c0_133 = arith.constant 0 : index
    %c0_134 = arith.constant 0 : index
    %c43 = arith.constant 43 : index
    %122 = vector.load %arg4[%c0_133, %c0_134, %c43] : memref<2x4x404xbf16, #tpu.memory_space<vmem>>, vector<1x4x320xbf16>
    %123 = vector.shape_cast %122 : vector<1x4x320xbf16> to vector<4x320xbf16>
    %c52 = arith.constant 52 : index
    %c0_135 = arith.constant 0 : index
    %124 = vector.load %arg5[%c52, %c0_135] : memref<104x768xbf16, #tpu.memory_space<vmem>>, vector<4x320xbf16>
    tpu.vector_store %arg5[%c52, %c0_135], %123 {strides = array<i32>} : memref<104x768xbf16, #tpu.memory_space<vmem>>, vector<4x320xbf16>,
    %c0_136 = arith.constant 0 : index
    %c0_137 = arith.constant 0 : index
    %c44_138 = arith.constant 44 : index
    %125 = vector.load %arg4[%c0_136, %c0_137, %c44_138] : memref<2x4x404xbf16, #tpu.memory_space<vmem>>, vector<1x4x320xbf16>
    %126 = vector.shape_cast %125 : vector<1x4x320xbf16> to vector<4x320xbf16>
    %c56 = arith.constant 56 : index
    %c0_139 = arith.constant 0 : index
    %127 = vector.load %arg5[%c56, %c0_139] : memref<104x768xbf16, #tpu.memory_space<vmem>>, vector<4x320xbf16>
    tpu.vector_store %arg5[%c56, %c0_139], %126 {strides = array<i32>} : memref<104x768xbf16, #tpu.memory_space<vmem>>, vector<4x320xbf16>,
    %c0_140 = arith.constant 0 : index
    %c0_141 = arith.constant 0 : index
    %c60 = arith.constant 60 : index
    %128 = vector.load %arg4[%c0_140, %c0_141, %c60] : memref<2x4x404xbf16, #tpu.memory_space<vmem>>, vector<1x4x320xbf16>
    %129 = vector.shape_cast %128 : vector<1x4x320xbf16> to vector<4x320xbf16>
    %c60_142 = arith.constant 60 : index
    %c0_143 = arith.constant 0 : index
    %130 = vector.load %arg5[%c60_142, %c0_143] : memref<104x768xbf16, #tpu.memory_space<vmem>>, vector<4x320xbf16>
    tpu.vector_store %arg5[%c60_142, %c0_143], %129 {strides = array<i32>} : memref<104x768xbf16, #tpu.memory_space<vmem>>, vector<4x320xbf16>,
    %c0_144 = arith.constant 0 : index
    %c0_145 = arith.constant 0 : index
    %c61 = arith.constant 61 : index
    %131 = vector.load %arg4[%c0_144, %c0_145, %c61] : memref<2x4x404xbf16, #tpu.memory_space<vmem>>, vector<1x4x320xbf16>
    %132 = vector.shape_cast %131 : vector<1x4x320xbf16> to vector<4x320xbf16>
    %c64 = arith.constant 64 : index
    %c0_146 = arith.constant 0 : index
    %133 = vector.load %arg5[%c64, %c0_146] : memref<104x768xbf16, #tpu.memory_space<vmem>>, vector<4x320xbf16>
    tpu.vector_store %arg5[%c64, %c0_146], %132 {strides = array<i32>} : memref<104x768xbf16, #tpu.memory_space<vmem>>, vector<4x320xbf16>,
    %c0_147 = arith.constant 0 : index
    %c0_148 = arith.constant 0 : index
    %c62_149 = arith.constant 62 : index
    %134 = vector.load %arg4[%c0_147, %c0_148, %c62_149] : memref<2x4x404xbf16, #tpu.memory_space<vmem>>, vector<1x4x320xbf16>
    %135 = vector.shape_cast %134 : vector<1x4x320xbf16> to vector<4x320xbf16>
    %c68 = arith.constant 68 : index
    %c0_150 = arith.constant 0 : index
    %136 = vector.load %arg5[%c68, %c0_150] : memref<104x768xbf16, #tpu.memory_space<vmem>>, vector<4x320xbf16>
    tpu.vector_store %arg5[%c68, %c0_150], %135 {strides = array<i32>} : memref<104x768xbf16, #tpu.memory_space<vmem>>, vector<4x320xbf16>,
    %c0_151 = arith.constant 0 : index
    %c0_152 = arith.constant 0 : index
    %c63 = arith.constant 63 : index
    %137 = vector.load %arg4[%c0_151, %c0_152, %c63] : memref<2x4x404xbf16, #tpu.memory_space<vmem>>, vector<1x4x320xbf16>
    %138 = vector.shape_cast %137 : vector<1x4x320xbf16> to vector<4x320xbf16>
    %c72 = arith.constant 72 : index
    %c0_153 = arith.constant 0 : index
    %139 = vector.load %arg5[%c72, %c0_153] : memref<104x768xbf16, #tpu.memory_space<vmem>>, vector<4x320xbf16>
    tpu.vector_store %arg5[%c72, %c0_153], %138 {strides = array<i32>} : memref<104x768xbf16, #tpu.memory_space<vmem>>, vector<4x320xbf16>,
    %c0_154 = arith.constant 0 : index
    %c0_155 = arith.constant 0 : index
    %c64_156 = arith.constant 64 : index
    %140 = vector.load %arg4[%c0_154, %c0_155, %c64_156] : memref<2x4x404xbf16, #tpu.memory_space<vmem>>, vector<1x4x320xbf16>
    %141 = vector.shape_cast %140 : vector<1x4x320xbf16> to vector<4x320xbf16>
    %c76 = arith.constant 76 : index
    %c0_157 = arith.constant 0 : index
    %142 = vector.load %arg5[%c76, %c0_157] : memref<104x768xbf16, #tpu.memory_space<vmem>>, vector<4x320xbf16>
    tpu.vector_store %arg5[%c76, %c0_157], %141 {strides = array<i32>} : memref<104x768xbf16, #tpu.memory_space<vmem>>, vector<4x320xbf16>,
    %c0_158 = arith.constant 0 : index
    %c0_159 = arith.constant 0 : index
    %c80 = arith.constant 80 : index
    %143 = vector.load %arg4[%c0_158, %c0_159, %c80] : memref<2x4x404xbf16, #tpu.memory_space<vmem>>, vector<1x4x320xbf16>
    %144 = vector.shape_cast %143 : vector<1x4x320xbf16> to vector<4x320xbf16>
    %c80_160 = arith.constant 80 : index
    %c0_161 = arith.constant 0 : index
    %145 = vector.load %arg5[%c80_160, %c0_161] : memref<104x768xbf16, #tpu.memory_space<vmem>>, vector<4x320xbf16>
    tpu.vector_store %arg5[%c80_160, %c0_161], %144 {strides = array<i32>} : memref<104x768xbf16, #tpu.memory_space<vmem>>, vector<4x320xbf16>,
    %c0_162 = arith.constant 0 : index
    %c0_163 = arith.constant 0 : index
    %c81 = arith.constant 81 : index
    %146 = vector.load %arg4[%c0_162, %c0_163, %c81] : memref<2x4x404xbf16, #tpu.memory_space<vmem>>, vector<1x4x320xbf16>
    %147 = vector.shape_cast %146 : vector<1x4x320xbf16> to vector<4x320xbf16>
    %c84 = arith.constant 84 : index
    %c0_164 = arith.constant 0 : index
    %148 = vector.load %arg5[%c84, %c0_164] : memref<104x768xbf16, #tpu.memory_space<vmem>>, vector<4x320xbf16>
    tpu.vector_store %arg5[%c84, %c0_164], %147 {strides = array<i32>} : memref<104x768xbf16, #tpu.memory_space<vmem>>, vector<4x320xbf16>,
    %c0_165 = arith.constant 0 : index
    %c0_166 = arith.constant 0 : index
    %c82_167 = arith.constant 82 : index
    %149 = vector.load %arg4[%c0_165, %c0_166, %c82_167] : memref<2x4x404xbf16, #tpu.memory_space<vmem>>, vector<1x4x320xbf16>
    %150 = vector.shape_cast %149 : vector<1x4x320xbf16> to vector<4x320xbf16>
    %c88 = arith.constant 88 : index
    %c0_168 = arith.constant 0 : index
    %151 = vector.load %arg5[%c88, %c0_168] : memref<104x768xbf16, #tpu.memory_space<vmem>>, vector<4x320xbf16>
    tpu.vector_store %arg5[%c88, %c0_168], %150 {strides = array<i32>} : memref<104x768xbf16, #tpu.memory_space<vmem>>, vector<4x320xbf16>,
    %c0_169 = arith.constant 0 : index
    %c0_170 = arith.constant 0 : index
    %c83 = arith.constant 83 : index
    %152 = vector.load %arg4[%c0_169, %c0_170, %c83] : memref<2x4x404xbf16, #tpu.memory_space<vmem>>, vector<1x4x320xbf16>
    %153 = vector.shape_cast %152 : vector<1x4x320xbf16> to vector<4x320xbf16>
    %c92 = arith.constant 92 : index
    %c0_171 = arith.constant 0 : index
    %154 = vector.load %arg5[%c92, %c0_171] : memref<104x768xbf16, #tpu.memory_space<vmem>>, vector<4x320xbf16>
    tpu.vector_store %arg5[%c92, %c0_171], %153 {strides = array<i32>} : memref<104x768xbf16, #tpu.memory_space<vmem>>, vector<4x320xbf16>,
    %c0_172 = arith.constant 0 : index
    %c0_173 = arith.constant 0 : index
    %c84_174 = arith.constant 84 : index
    %155 = vector.load %arg4[%c0_172, %c0_173, %c84_174] : memref<2x4x404xbf16, #tpu.memory_space<vmem>>, vector<1x4x320xbf16>
    %156 = vector.shape_cast %155 : vector<1x4x320xbf16> to vector<4x320xbf16>
    %c96 = arith.constant 96 : index
    %c0_175 = arith.constant 0 : index
    %157 = vector.load %arg5[%c96, %c0_175] : memref<104x768xbf16, #tpu.memory_space<vmem>>, vector<4x320xbf16>
    tpu.vector_store %arg5[%c96, %c0_175], %156 {strides = array<i32>} : memref<104x768xbf16, #tpu.memory_space<vmem>>, vector<4x320xbf16>,
    %c1_176 = arith.constant 1 : index
    %c0_177 = arith.constant 0 : index
    %c0_178 = arith.constant 0 : index
    %c0_179 = arith.constant 0 : index
    %158 = vector.load %arg1[%c1_176, %c0_177, %c0_178, %c0_179] : memref<2x4x16x16xbf16, #tpu.memory_space<vmem>>, vector<1x4x1x16xbf16>
    %159 = vector.shape_cast %158 : vector<1x4x1x16xbf16> to vector<4x16xbf16>
    %c1_180 = arith.constant 1 : index
    %c0_181 = arith.constant 0 : index
    %c42_182 = arith.constant 42 : index
    %160 = vector.load %arg4[%c1_180, %c0_181, %c42_182] : memref<2x4x404xbf16, #tpu.memory_space<vmem>>, vector<1x4x16xbf16>
    %161 = vector.shape_cast %160 : vector<1x4x16xbf16> to vector<4x16xbf16>
    %162 = vector.shape_cast %159 : vector<4x16xbf16> to vector<1x4x16xbf16>
    tpu.vector_store %arg4[%c1_180, %c0_181, %c42_182], %162 {strides = array<i32>} : memref<2x4x404xbf16, #tpu.memory_space<vmem>>, vector<1x4x16xbf16>,
    %c1_183 = arith.constant 1 : index
    %c0_184 = arith.constant 0 : index
    %c1_185 = arith.constant 1 : index
    %c0_186 = arith.constant 0 : index
    %163 = vector.load %arg1[%c1_183, %c0_184, %c1_185, %c0_186] : memref<2x4x16x16xbf16, #tpu.memory_space<vmem>>, vector<1x4x1x16xbf16>
    %164 = vector.shape_cast %163 : vector<1x4x1x16xbf16> to vector<4x16xbf16>
    %c1_187 = arith.constant 1 : index
    %c0_188 = arith.constant 0 : index
    %c62_189 = arith.constant 62 : index
    %165 = vector.load %arg4[%c1_187, %c0_188, %c62_189] : memref<2x4x404xbf16, #tpu.memory_space<vmem>>, vector<1x4x16xbf16>
    %166 = vector.shape_cast %165 : vector<1x4x16xbf16> to vector<4x16xbf16>
    %167 = vector.shape_cast %164 : vector<4x16xbf16> to vector<1x4x16xbf16>
    tpu.vector_store %arg4[%c1_187, %c0_188, %c62_189], %167 {strides = array<i32>} : memref<2x4x404xbf16, #tpu.memory_space<vmem>>, vector<1x4x16xbf16>,
    %c1_190 = arith.constant 1 : index
    %c0_191 = arith.constant 0 : index
    %c2_192 = arith.constant 2 : index
    %c0_193 = arith.constant 0 : index
    %168 = vector.load %arg1[%c1_190, %c0_191, %c2_192, %c0_193] : memref<2x4x16x16xbf16, #tpu.memory_space<vmem>>, vector<1x4x1x16xbf16>
    %169 = vector.shape_cast %168 : vector<1x4x1x16xbf16> to vector<4x16xbf16>
    %c1_194 = arith.constant 1 : index
    %c0_195 = arith.constant 0 : index
    %c82_196 = arith.constant 82 : index
    %170 = vector.load %arg4[%c1_194, %c0_195, %c82_196] : memref<2x4x404xbf16, #tpu.memory_space<vmem>>, vector<1x4x16xbf16>
    %171 = vector.shape_cast %170 : vector<1x4x16xbf16> to vector<4x16xbf16>
    %172 = vector.shape_cast %169 : vector<4x16xbf16> to vector<1x4x16xbf16>
    tpu.vector_store %arg4[%c1_194, %c0_195, %c82_196], %172 {strides = array<i32>} : memref<2x4x404xbf16, #tpu.memory_space<vmem>>, vector<1x4x16xbf16>,
    %c1_197 = arith.constant 1 : index
    %c0_198 = arith.constant 0 : index
    %c3_199 = arith.constant 3 : index
    %c0_200 = arith.constant 0 : index
    %173 = vector.load %arg1[%c1_197, %c0_198, %c3_199, %c0_200] : memref<2x4x16x16xbf16, #tpu.memory_space<vmem>>, vector<1x4x1x16xbf16>
    %174 = vector.shape_cast %173 : vector<1x4x1x16xbf16> to vector<4x16xbf16>
    %c1_201 = arith.constant 1 : index
    %c0_202 = arith.constant 0 : index
    %c102_203 = arith.constant 102 : index
    %175 = vector.load %arg4[%c1_201, %c0_202, %c102_203] : memref<2x4x404xbf16, #tpu.memory_space<vmem>>, vector<1x4x16xbf16>
    %176 = vector.shape_cast %175 : vector<1x4x16xbf16> to vector<4x16xbf16>
    %177 = vector.shape_cast %174 : vector<4x16xbf16> to vector<1x4x16xbf16>
    tpu.vector_store %arg4[%c1_201, %c0_202, %c102_203], %177 {strides = array<i32>} : memref<2x4x404xbf16, #tpu.memory_space<vmem>>, vector<1x4x16xbf16>,
    %c1_204 = arith.constant 1 : index
    %c0_205 = arith.constant 0 : index
    %c4_206 = arith.constant 4 : index
    %c0_207 = arith.constant 0 : index
    %178 = vector.load %arg1[%c1_204, %c0_205, %c4_206, %c0_207] : memref<2x4x16x16xbf16, #tpu.memory_space<vmem>>, vector<1x4x1x16xbf16>
    %179 = vector.shape_cast %178 : vector<1x4x1x16xbf16> to vector<4x16xbf16>
    %c1_208 = arith.constant 1 : index
    %c0_209 = arith.constant 0 : index
    %c122_210 = arith.constant 122 : index
    %180 = vector.load %arg4[%c1_208, %c0_209, %c122_210] : memref<2x4x404xbf16, #tpu.memory_space<vmem>>, vector<1x4x16xbf16>
    %181 = vector.shape_cast %180 : vector<1x4x16xbf16> to vector<4x16xbf16>
    %182 = vector.shape_cast %179 : vector<4x16xbf16> to vector<1x4x16xbf16>
    tpu.vector_store %arg4[%c1_208, %c0_209, %c122_210], %182 {strides = array<i32>} : memref<2x4x404xbf16, #tpu.memory_space<vmem>>, vector<1x4x16xbf16>,
    %c1_211 = arith.constant 1 : index
    %c0_212 = arith.constant 0 : index
    %c5_213 = arith.constant 5 : index
    %c0_214 = arith.constant 0 : index
    %183 = vector.load %arg1[%c1_211, %c0_212, %c5_213, %c0_214] : memref<2x4x16x16xbf16, #tpu.memory_space<vmem>>, vector<1x4x1x16xbf16>
    %184 = vector.shape_cast %183 : vector<1x4x1x16xbf16> to vector<4x16xbf16>
    %c1_215 = arith.constant 1 : index
    %c0_216 = arith.constant 0 : index
    %c142_217 = arith.constant 142 : index
    %185 = vector.load %arg4[%c1_215, %c0_216, %c142_217] : memref<2x4x404xbf16, #tpu.memory_space<vmem>>, vector<1x4x16xbf16>
    %186 = vector.shape_cast %185 : vector<1x4x16xbf16> to vector<4x16xbf16>
    %187 = vector.shape_cast %184 : vector<4x16xbf16> to vector<1x4x16xbf16>
    tpu.vector_store %arg4[%c1_215, %c0_216, %c142_217], %187 {strides = array<i32>} : memref<2x4x404xbf16, #tpu.memory_space<vmem>>, vector<1x4x16xbf16>,
    %c1_218 = arith.constant 1 : index
    %c0_219 = arith.constant 0 : index
    %c6_220 = arith.constant 6 : index
    %c0_221 = arith.constant 0 : index
    %188 = vector.load %arg1[%c1_218, %c0_219, %c6_220, %c0_221] : memref<2x4x16x16xbf16, #tpu.memory_space<vmem>>, vector<1x4x1x16xbf16>
    %189 = vector.shape_cast %188 : vector<1x4x1x16xbf16> to vector<4x16xbf16>
    %c1_222 = arith.constant 1 : index
    %c0_223 = arith.constant 0 : index
    %c162_224 = arith.constant 162 : index
    %190 = vector.load %arg4[%c1_222, %c0_223, %c162_224] : memref<2x4x404xbf16, #tpu.memory_space<vmem>>, vector<1x4x16xbf16>
    %191 = vector.shape_cast %190 : vector<1x4x16xbf16> to vector<4x16xbf16>
    %192 = vector.shape_cast %189 : vector<4x16xbf16> to vector<1x4x16xbf16>
    tpu.vector_store %arg4[%c1_222, %c0_223, %c162_224], %192 {strides = array<i32>} : memref<2x4x404xbf16, #tpu.memory_space<vmem>>, vector<1x4x16xbf16>,
    %c1_225 = arith.constant 1 : index
    %c0_226 = arith.constant 0 : index
    %c7_227 = arith.constant 7 : index
    %c0_228 = arith.constant 0 : index
    %193 = vector.load %arg1[%c1_225, %c0_226, %c7_227, %c0_228] : memref<2x4x16x16xbf16, #tpu.memory_space<vmem>>, vector<1x4x1x16xbf16>
    %194 = vector.shape_cast %193 : vector<1x4x1x16xbf16> to vector<4x16xbf16>
    %c1_229 = arith.constant 1 : index
    %c0_230 = arith.constant 0 : index
    %c182_231 = arith.constant 182 : index
    %195 = vector.load %arg4[%c1_229, %c0_230, %c182_231] : memref<2x4x404xbf16, #tpu.memory_space<vmem>>, vector<1x4x16xbf16>
    %196 = vector.shape_cast %195 : vector<1x4x16xbf16> to vector<4x16xbf16>
    %197 = vector.shape_cast %194 : vector<4x16xbf16> to vector<1x4x16xbf16>
    tpu.vector_store %arg4[%c1_229, %c0_230, %c182_231], %197 {strides = array<i32>} : memref<2x4x404xbf16, #tpu.memory_space<vmem>>, vector<1x4x16xbf16>,
    %c1_232 = arith.constant 1 : index
    %c0_233 = arith.constant 0 : index
    %c8_234 = arith.constant 8 : index
    %c0_235 = arith.constant 0 : index
    %198 = vector.load %arg1[%c1_232, %c0_233, %c8_234, %c0_235] : memref<2x4x16x16xbf16, #tpu.memory_space<vmem>>, vector<1x4x1x16xbf16>
    %199 = vector.shape_cast %198 : vector<1x4x1x16xbf16> to vector<4x16xbf16>
    %c1_236 = arith.constant 1 : index
    %c0_237 = arith.constant 0 : index
    %c202_238 = arith.constant 202 : index
    %200 = vector.load %arg4[%c1_236, %c0_237, %c202_238] : memref<2x4x404xbf16, #tpu.memory_space<vmem>>, vector<1x4x16xbf16>
    %201 = vector.shape_cast %200 : vector<1x4x16xbf16> to vector<4x16xbf16>
    %202 = vector.shape_cast %199 : vector<4x16xbf16> to vector<1x4x16xbf16>
    tpu.vector_store %arg4[%c1_236, %c0_237, %c202_238], %202 {strides = array<i32>} : memref<2x4x404xbf16, #tpu.memory_space<vmem>>, vector<1x4x16xbf16>,
    %c1_239 = arith.constant 1 : index
    %c0_240 = arith.constant 0 : index
    %c9_241 = arith.constant 9 : index
    %c0_242 = arith.constant 0 : index
    %203 = vector.load %arg1[%c1_239, %c0_240, %c9_241, %c0_242] : memref<2x4x16x16xbf16, #tpu.memory_space<vmem>>, vector<1x4x1x16xbf16>
    %204 = vector.shape_cast %203 : vector<1x4x1x16xbf16> to vector<4x16xbf16>
    %c1_243 = arith.constant 1 : index
    %c0_244 = arith.constant 0 : index
    %c222_245 = arith.constant 222 : index
    %205 = vector.load %arg4[%c1_243, %c0_244, %c222_245] : memref<2x4x404xbf16, #tpu.memory_space<vmem>>, vector<1x4x16xbf16>
    %206 = vector.shape_cast %205 : vector<1x4x16xbf16> to vector<4x16xbf16>
    %207 = vector.shape_cast %204 : vector<4x16xbf16> to vector<1x4x16xbf16>
    tpu.vector_store %arg4[%c1_243, %c0_244, %c222_245], %207 {strides = array<i32>} : memref<2x4x404xbf16, #tpu.memory_space<vmem>>, vector<1x4x16xbf16>,
    %c1_246 = arith.constant 1 : index
    %c0_247 = arith.constant 0 : index
    %c10_248 = arith.constant 10 : index
    %c0_249 = arith.constant 0 : index
    %208 = vector.load %arg1[%c1_246, %c0_247, %c10_248, %c0_249] : memref<2x4x16x16xbf16, #tpu.memory_space<vmem>>, vector<1x4x1x16xbf16>
    %209 = vector.shape_cast %208 : vector<1x4x1x16xbf16> to vector<4x16xbf16>
    %c1_250 = arith.constant 1 : index
    %c0_251 = arith.constant 0 : index
    %c242_252 = arith.constant 242 : index
    %210 = vector.load %arg4[%c1_250, %c0_251, %c242_252] : memref<2x4x404xbf16, #tpu.memory_space<vmem>>, vector<1x4x16xbf16>
    %211 = vector.shape_cast %210 : vector<1x4x16xbf16> to vector<4x16xbf16>
    %212 = vector.shape_cast %209 : vector<4x16xbf16> to vector<1x4x16xbf16>
    tpu.vector_store %arg4[%c1_250, %c0_251, %c242_252], %212 {strides = array<i32>} : memref<2x4x404xbf16, #tpu.memory_space<vmem>>, vector<1x4x16xbf16>,
    %c1_253 = arith.constant 1 : index
    %c0_254 = arith.constant 0 : index
    %c11_255 = arith.constant 11 : index
    %c0_256 = arith.constant 0 : index
    %213 = vector.load %arg1[%c1_253, %c0_254, %c11_255, %c0_256] : memref<2x4x16x16xbf16, #tpu.memory_space<vmem>>, vector<1x4x1x16xbf16>
    %214 = vector.shape_cast %213 : vector<1x4x1x16xbf16> to vector<4x16xbf16>
    %c1_257 = arith.constant 1 : index
    %c0_258 = arith.constant 0 : index
    %c262_259 = arith.constant 262 : index
    %215 = vector.load %arg4[%c1_257, %c0_258, %c262_259] : memref<2x4x404xbf16, #tpu.memory_space<vmem>>, vector<1x4x16xbf16>
    %216 = vector.shape_cast %215 : vector<1x4x16xbf16> to vector<4x16xbf16>
    %217 = vector.shape_cast %214 : vector<4x16xbf16> to vector<1x4x16xbf16>
    tpu.vector_store %arg4[%c1_257, %c0_258, %c262_259], %217 {strides = array<i32>} : memref<2x4x404xbf16, #tpu.memory_space<vmem>>, vector<1x4x16xbf16>,
    %c1_260 = arith.constant 1 : index
    %c0_261 = arith.constant 0 : index
    %c12_262 = arith.constant 12 : index
    %c0_263 = arith.constant 0 : index
    %218 = vector.load %arg1[%c1_260, %c0_261, %c12_262, %c0_263] : memref<2x4x16x16xbf16, #tpu.memory_space<vmem>>, vector<1x4x1x16xbf16>
    %219 = vector.shape_cast %218 : vector<1x4x1x16xbf16> to vector<4x16xbf16>
    %c1_264 = arith.constant 1 : index
    %c0_265 = arith.constant 0 : index
    %c282_266 = arith.constant 282 : index
    %220 = vector.load %arg4[%c1_264, %c0_265, %c282_266] : memref<2x4x404xbf16, #tpu.memory_space<vmem>>, vector<1x4x16xbf16>
    %221 = vector.shape_cast %220 : vector<1x4x16xbf16> to vector<4x16xbf16>
    %222 = vector.shape_cast %219 : vector<4x16xbf16> to vector<1x4x16xbf16>
    tpu.vector_store %arg4[%c1_264, %c0_265, %c282_266], %222 {strides = array<i32>} : memref<2x4x404xbf16, #tpu.memory_space<vmem>>, vector<1x4x16xbf16>,
    %c1_267 = arith.constant 1 : index
    %c0_268 = arith.constant 0 : index
    %c13_269 = arith.constant 13 : index
    %c0_270 = arith.constant 0 : index
    %223 = vector.load %arg1[%c1_267, %c0_268, %c13_269, %c0_270] : memref<2x4x16x16xbf16, #tpu.memory_space<vmem>>, vector<1x4x1x16xbf16>
    %224 = vector.shape_cast %223 : vector<1x4x1x16xbf16> to vector<4x16xbf16>
    %c1_271 = arith.constant 1 : index
    %c0_272 = arith.constant 0 : index
    %c302_273 = arith.constant 302 : index
    %225 = vector.load %arg4[%c1_271, %c0_272, %c302_273] : memref<2x4x404xbf16, #tpu.memory_space<vmem>>, vector<1x4x16xbf16>
    %226 = vector.shape_cast %225 : vector<1x4x16xbf16> to vector<4x16xbf16>
    %227 = vector.shape_cast %224 : vector<4x16xbf16> to vector<1x4x16xbf16>
    tpu.vector_store %arg4[%c1_271, %c0_272, %c302_273], %227 {strides = array<i32>} : memref<2x4x404xbf16, #tpu.memory_space<vmem>>, vector<1x4x16xbf16>,
    %c1_274 = arith.constant 1 : index
    %c0_275 = arith.constant 0 : index
    %c14_276 = arith.constant 14 : index
    %c0_277 = arith.constant 0 : index
    %228 = vector.load %arg1[%c1_274, %c0_275, %c14_276, %c0_277] : memref<2x4x16x16xbf16, #tpu.memory_space<vmem>>, vector<1x4x1x16xbf16>
    %229 = vector.shape_cast %228 : vector<1x4x1x16xbf16> to vector<4x16xbf16>
    %c1_278 = arith.constant 1 : index
    %c0_279 = arith.constant 0 : index
    %c322_280 = arith.constant 322 : index
    %230 = vector.load %arg4[%c1_278, %c0_279, %c322_280] : memref<2x4x404xbf16, #tpu.memory_space<vmem>>, vector<1x4x16xbf16>
    %231 = vector.shape_cast %230 : vector<1x4x16xbf16> to vector<4x16xbf16>
    %232 = vector.shape_cast %229 : vector<4x16xbf16> to vector<1x4x16xbf16>
    tpu.vector_store %arg4[%c1_278, %c0_279, %c322_280], %232 {strides = array<i32>} : memref<2x4x404xbf16, #tpu.memory_space<vmem>>, vector<1x4x16xbf16>,
    %c1_281 = arith.constant 1 : index
    %c0_282 = arith.constant 0 : index
    %c15_283 = arith.constant 15 : index
    %c0_284 = arith.constant 0 : index
    %233 = vector.load %arg1[%c1_281, %c0_282, %c15_283, %c0_284] : memref<2x4x16x16xbf16, #tpu.memory_space<vmem>>, vector<1x4x1x16xbf16>
    %234 = vector.shape_cast %233 : vector<1x4x1x16xbf16> to vector<4x16xbf16>
    %c1_285 = arith.constant 1 : index
    %c0_286 = arith.constant 0 : index
    %c342_287 = arith.constant 342 : index
    %235 = vector.load %arg4[%c1_285, %c0_286, %c342_287] : memref<2x4x404xbf16, #tpu.memory_space<vmem>>, vector<1x4x16xbf16>
    %236 = vector.shape_cast %235 : vector<1x4x16xbf16> to vector<4x16xbf16>
    %237 = vector.shape_cast %234 : vector<4x16xbf16> to vector<1x4x16xbf16>
    tpu.vector_store %arg4[%c1_285, %c0_286, %c342_287], %237 {strides = array<i32>} : memref<2x4x404xbf16, #tpu.memory_space<vmem>>, vector<1x4x16xbf16>,
    %c1_288 = arith.constant 1 : index
    %c0_289 = arith.constant 0 : index
    %c0_290 = arith.constant 0 : index
    %238 = vector.load %arg4[%c1_288, %c0_289, %c0_290] : memref<2x4x404xbf16, #tpu.memory_space<vmem>>, vector<1x4x320xbf16>
    %239 = vector.shape_cast %238 : vector<1x4x320xbf16> to vector<4x320xbf16>
    %c0_291 = arith.constant 0 : index
    %c384 = arith.constant 384 : index
    %240 = vector.load %arg5[%c0_291, %c384] : memref<104x768xbf16, #tpu.memory_space<vmem>>, vector<4x320xbf16>
    tpu.vector_store %arg5[%c0_291, %c384], %239 {strides = array<i32>} : memref<104x768xbf16, #tpu.memory_space<vmem>>, vector<4x320xbf16>,
    %c1_292 = arith.constant 1 : index
    %c0_293 = arith.constant 0 : index
    %c1_294 = arith.constant 1 : index
    %241 = vector.load %arg4[%c1_292, %c0_293, %c1_294] : memref<2x4x404xbf16, #tpu.memory_space<vmem>>, vector<1x4x320xbf16>
    %242 = vector.shape_cast %241 : vector<1x4x320xbf16> to vector<4x320xbf16>
    %c4_295 = arith.constant 4 : index
    %c384_296 = arith.constant 384 : index
    %243 = vector.load %arg5[%c4_295, %c384_296] : memref<104x768xbf16, #tpu.memory_space<vmem>>, vector<4x320xbf16>
    tpu.vector_store %arg5[%c4_295, %c384_296], %242 {strides = array<i32>} : memref<104x768xbf16, #tpu.memory_space<vmem>>, vector<4x320xbf16>,
    %c1_297 = arith.constant 1 : index
    %c0_298 = arith.constant 0 : index
    %c2_299 = arith.constant 2 : index
    %244 = vector.load %arg4[%c1_297, %c0_298, %c2_299] : memref<2x4x404xbf16, #tpu.memory_space<vmem>>, vector<1x4x320xbf16>
    %245 = vector.shape_cast %244 : vector<1x4x320xbf16> to vector<4x320xbf16>
    %c8_300 = arith.constant 8 : index
    %c384_301 = arith.constant 384 : index
    %246 = vector.load %arg5[%c8_300, %c384_301] : memref<104x768xbf16, #tpu.memory_space<vmem>>, vector<4x320xbf16>
    tpu.vector_store %arg5[%c8_300, %c384_301], %245 {strides = array<i32>} : memref<104x768xbf16, #tpu.memory_space<vmem>>, vector<4x320xbf16>,
    %c1_302 = arith.constant 1 : index
    %c0_303 = arith.constant 0 : index
    %c3_304 = arith.constant 3 : index
    %247 = vector.load %arg4[%c1_302, %c0_303, %c3_304] : memref<2x4x404xbf16, #tpu.memory_space<vmem>>, vector<1x4x320xbf16>
    %248 = vector.shape_cast %247 : vector<1x4x320xbf16> to vector<4x320xbf16>
    %c12_305 = arith.constant 12 : index
    %c384_306 = arith.constant 384 : index
    %249 = vector.load %arg5[%c12_305, %c384_306] : memref<104x768xbf16, #tpu.memory_space<vmem>>, vector<4x320xbf16>
    tpu.vector_store %arg5[%c12_305, %c384_306], %248 {strides = array<i32>} : memref<104x768xbf16, #tpu.memory_space<vmem>>, vector<4x320xbf16>,
    %c1_307 = arith.constant 1 : index
    %c0_308 = arith.constant 0 : index
    %c4_309 = arith.constant 4 : index
    %250 = vector.load %arg4[%c1_307, %c0_308, %c4_309] : memref<2x4x404xbf16, #tpu.memory_space<vmem>>, vector<1x4x320xbf16>
    %251 = vector.shape_cast %250 : vector<1x4x320xbf16> to vector<4x320xbf16>
    %c16_310 = arith.constant 16 : index
    %c384_311 = arith.constant 384 : index
    %252 = vector.load %arg5[%c16_310, %c384_311] : memref<104x768xbf16, #tpu.memory_space<vmem>>, vector<4x320xbf16>
    tpu.vector_store %arg5[%c16_310, %c384_311], %251 {strides = array<i32>} : memref<104x768xbf16, #tpu.memory_space<vmem>>, vector<4x320xbf16>,
    %c1_312 = arith.constant 1 : index
    %c0_313 = arith.constant 0 : index
    %c20_314 = arith.constant 20 : index
    %253 = vector.load %arg4[%c1_312, %c0_313, %c20_314] : memref<2x4x404xbf16, #tpu.memory_space<vmem>>, vector<1x4x320xbf16>
    %254 = vector.shape_cast %253 : vector<1x4x320xbf16> to vector<4x320xbf16>
    %c20_315 = arith.constant 20 : index
    %c384_316 = arith.constant 384 : index
    %255 = vector.load %arg5[%c20_315, %c384_316] : memref<104x768xbf16, #tpu.memory_space<vmem>>, vector<4x320xbf16>
    tpu.vector_store %arg5[%c20_315, %c384_316], %254 {strides = array<i32>} : memref<104x768xbf16, #tpu.memory_space<vmem>>, vector<4x320xbf16>,
    %c1_317 = arith.constant 1 : index
    %c0_318 = arith.constant 0 : index
    %c21_319 = arith.constant 21 : index
    %256 = vector.load %arg4[%c1_317, %c0_318, %c21_319] : memref<2x4x404xbf16, #tpu.memory_space<vmem>>, vector<1x4x320xbf16>
    %257 = vector.shape_cast %256 : vector<1x4x320xbf16> to vector<4x320xbf16>
    %c24_320 = arith.constant 24 : index
    %c384_321 = arith.constant 384 : index
    %258 = vector.load %arg5[%c24_320, %c384_321] : memref<104x768xbf16, #tpu.memory_space<vmem>>, vector<4x320xbf16>
    tpu.vector_store %arg5[%c24_320, %c384_321], %257 {strides = array<i32>} : memref<104x768xbf16, #tpu.memory_space<vmem>>, vector<4x320xbf16>,
    %c1_322 = arith.constant 1 : index
    %c0_323 = arith.constant 0 : index
    %c22_324 = arith.constant 22 : index
    %259 = vector.load %arg4[%c1_322, %c0_323, %c22_324] : memref<2x4x404xbf16, #tpu.memory_space<vmem>>, vector<1x4x320xbf16>
    %260 = vector.shape_cast %259 : vector<1x4x320xbf16> to vector<4x320xbf16>
    %c28_325 = arith.constant 28 : index
    %c384_326 = arith.constant 384 : index
    %261 = vector.load %arg5[%c28_325, %c384_326] : memref<104x768xbf16, #tpu.memory_space<vmem>>, vector<4x320xbf16>
    tpu.vector_store %arg5[%c28_325, %c384_326], %260 {strides = array<i32>} : memref<104x768xbf16, #tpu.memory_space<vmem>>, vector<4x320xbf16>,
    %c1_327 = arith.constant 1 : index
    %c0_328 = arith.constant 0 : index
    %c23_329 = arith.constant 23 : index
    %262 = vector.load %arg4[%c1_327, %c0_328, %c23_329] : memref<2x4x404xbf16, #tpu.memory_space<vmem>>, vector<1x4x320xbf16>
    %263 = vector.shape_cast %262 : vector<1x4x320xbf16> to vector<4x320xbf16>
    %c32_330 = arith.constant 32 : index
    %c384_331 = arith.constant 384 : index
    %264 = vector.load %arg5[%c32_330, %c384_331] : memref<104x768xbf16, #tpu.memory_space<vmem>>, vector<4x320xbf16>
    tpu.vector_store %arg5[%c32_330, %c384_331], %263 {strides = array<i32>} : memref<104x768xbf16, #tpu.memory_space<vmem>>, vector<4x320xbf16>,
    %c1_332 = arith.constant 1 : index
    %c0_333 = arith.constant 0 : index
    %c24_334 = arith.constant 24 : index
    %265 = vector.load %arg4[%c1_332, %c0_333, %c24_334] : memref<2x4x404xbf16, #tpu.memory_space<vmem>>, vector<1x4x320xbf16>
    %266 = vector.shape_cast %265 : vector<1x4x320xbf16> to vector<4x320xbf16>
    %c36_335 = arith.constant 36 : index
    %c384_336 = arith.constant 384 : index
    %267 = vector.load %arg5[%c36_335, %c384_336] : memref<104x768xbf16, #tpu.memory_space<vmem>>, vector<4x320xbf16>
    tpu.vector_store %arg5[%c36_335, %c384_336], %266 {strides = array<i32>} : memref<104x768xbf16, #tpu.memory_space<vmem>>, vector<4x320xbf16>,
    %c1_337 = arith.constant 1 : index
    %c0_338 = arith.constant 0 : index
    %c40_339 = arith.constant 40 : index
    %268 = vector.load %arg4[%c1_337, %c0_338, %c40_339] : memref<2x4x404xbf16, #tpu.memory_space<vmem>>, vector<1x4x320xbf16>
    %269 = vector.shape_cast %268 : vector<1x4x320xbf16> to vector<4x320xbf16>
    %c40_340 = arith.constant 40 : index
    %c384_341 = arith.constant 384 : index
    %270 = vector.load %arg5[%c40_340, %c384_341] : memref<104x768xbf16, #tpu.memory_space<vmem>>, vector<4x320xbf16>
    tpu.vector_store %arg5[%c40_340, %c384_341], %269 {strides = array<i32>} : memref<104x768xbf16, #tpu.memory_space<vmem>>, vector<4x320xbf16>,
    %c1_342 = arith.constant 1 : index
    %c0_343 = arith.constant 0 : index
    %c41_344 = arith.constant 41 : index
    %271 = vector.load %arg4[%c1_342, %c0_343, %c41_344] : memref<2x4x404xbf16, #tpu.memory_space<vmem>>, vector<1x4x320xbf16>
    %272 = vector.shape_cast %271 : vector<1x4x320xbf16> to vector<4x320xbf16>
    %c44_345 = arith.constant 44 : index
    %c384_346 = arith.constant 384 : index
    %273 = vector.load %arg5[%c44_345, %c384_346] : memref<104x768xbf16, #tpu.memory_space<vmem>>, vector<4x320xbf16>
    tpu.vector_store %arg5[%c44_345, %c384_346], %272 {strides = array<i32>} : memref<104x768xbf16, #tpu.memory_space<vmem>>, vector<4x320xbf16>,
    %c1_347 = arith.constant 1 : index
    %c0_348 = arith.constant 0 : index
    %c42_349 = arith.constant 42 : index
    %274 = vector.load %arg4[%c1_347, %c0_348, %c42_349] : memref<2x4x404xbf16, #tpu.memory_space<vmem>>, vector<1x4x320xbf16>
    %275 = vector.shape_cast %274 : vector<1x4x320xbf16> to vector<4x320xbf16>
    %c48_350 = arith.constant 48 : index
    %c384_351 = arith.constant 384 : index
    %276 = vector.load %arg5[%c48_350, %c384_351] : memref<104x768xbf16, #tpu.memory_space<vmem>>, vector<4x320xbf16>
    tpu.vector_store %arg5[%c48_350, %c384_351], %275 {strides = array<i32>} : memref<104x768xbf16, #tpu.memory_space<vmem>>, vector<4x320xbf16>,
    %c1_352 = arith.constant 1 : index
    %c0_353 = arith.constant 0 : index
    %c43_354 = arith.constant 43 : index
    %277 = vector.load %arg4[%c1_352, %c0_353, %c43_354] : memref<2x4x404xbf16, #tpu.memory_space<vmem>>, vector<1x4x320xbf16>
    %278 = vector.shape_cast %277 : vector<1x4x320xbf16> to vector<4x320xbf16>
    %c52_355 = arith.constant 52 : index
    %c384_356 = arith.constant 384 : index
    %279 = vector.load %arg5[%c52_355, %c384_356] : memref<104x768xbf16, #tpu.memory_space<vmem>>, vector<4x320xbf16>
    tpu.vector_store %arg5[%c52_355, %c384_356], %278 {strides = array<i32>} : memref<104x768xbf16, #tpu.memory_space<vmem>>, vector<4x320xbf16>,
    %c1_357 = arith.constant 1 : index
    %c0_358 = arith.constant 0 : index
    %c44_359 = arith.constant 44 : index
    %280 = vector.load %arg4[%c1_357, %c0_358, %c44_359] : memref<2x4x404xbf16, #tpu.memory_space<vmem>>, vector<1x4x320xbf16>
    %281 = vector.shape_cast %280 : vector<1x4x320xbf16> to vector<4x320xbf16>
    %c56_360 = arith.constant 56 : index
    %c384_361 = arith.constant 384 : index
    %282 = vector.load %arg5[%c56_360, %c384_361] : memref<104x768xbf16, #tpu.memory_space<vmem>>, vector<4x320xbf16>
    tpu.vector_store %arg5[%c56_360, %c384_361], %281 {strides = array<i32>} : memref<104x768xbf16, #tpu.memory_space<vmem>>, vector<4x320xbf16>,
    %c1_362 = arith.constant 1 : index
    %c0_363 = arith.constant 0 : index
    %c60_364 = arith.constant 60 : index
    %283 = vector.load %arg4[%c1_362, %c0_363, %c60_364] : memref<2x4x404xbf16, #tpu.memory_space<vmem>>, vector<1x4x320xbf16>
    %284 = vector.shape_cast %283 : vector<1x4x320xbf16> to vector<4x320xbf16>
    %c60_365 = arith.constant 60 : index
    %c384_366 = arith.constant 384 : index
    %285 = vector.load %arg5[%c60_365, %c384_366] : memref<104x768xbf16, #tpu.memory_space<vmem>>, vector<4x320xbf16>
    tpu.vector_store %arg5[%c60_365, %c384_366], %284 {strides = array<i32>} : memref<104x768xbf16, #tpu.memory_space<vmem>>, vector<4x320xbf16>,
    %c1_367 = arith.constant 1 : index
    %c0_368 = arith.constant 0 : index
    %c61_369 = arith.constant 61 : index
    %286 = vector.load %arg4[%c1_367, %c0_368, %c61_369] : memref<2x4x404xbf16, #tpu.memory_space<vmem>>, vector<1x4x320xbf16>
    %287 = vector.shape_cast %286 : vector<1x4x320xbf16> to vector<4x320xbf16>
    %c64_370 = arith.constant 64 : index
    %c384_371 = arith.constant 384 : index
    %288 = vector.load %arg5[%c64_370, %c384_371] : memref<104x768xbf16, #tpu.memory_space<vmem>>, vector<4x320xbf16>
    tpu.vector_store %arg5[%c64_370, %c384_371], %287 {strides = array<i32>} : memref<104x768xbf16, #tpu.memory_space<vmem>>, vector<4x320xbf16>,
    %c1_372 = arith.constant 1 : index
    %c0_373 = arith.constant 0 : index
    %c62_374 = arith.constant 62 : index
    %289 = vector.load %arg4[%c1_372, %c0_373, %c62_374] : memref<2x4x404xbf16, #tpu.memory_space<vmem>>, vector<1x4x320xbf16>
    %290 = vector.shape_cast %289 : vector<1x4x320xbf16> to vector<4x320xbf16>
    %c68_375 = arith.constant 68 : index
    %c384_376 = arith.constant 384 : index
    %291 = vector.load %arg5[%c68_375, %c384_376] : memref<104x768xbf16, #tpu.memory_space<vmem>>, vector<4x320xbf16>
    tpu.vector_store %arg5[%c68_375, %c384_376], %290 {strides = array<i32>} : memref<104x768xbf16, #tpu.memory_space<vmem>>, vector<4x320xbf16>,
    %c1_377 = arith.constant 1 : index
    %c0_378 = arith.constant 0 : index
    %c63_379 = arith.constant 63 : index
    %292 = vector.load %arg4[%c1_377, %c0_378, %c63_379] : memref<2x4x404xbf16, #tpu.memory_space<vmem>>, vector<1x4x320xbf16>
    %293 = vector.shape_cast %292 : vector<1x4x320xbf16> to vector<4x320xbf16>
    %c72_380 = arith.constant 72 : index
    %c384_381 = arith.constant 384 : index
    %294 = vector.load %arg5[%c72_380, %c384_381] : memref<104x768xbf16, #tpu.memory_space<vmem>>, vector<4x320xbf16>
    tpu.vector_store %arg5[%c72_380, %c384_381], %293 {strides = array<i32>} : memref<104x768xbf16, #tpu.memory_space<vmem>>, vector<4x320xbf16>,
    %c1_382 = arith.constant 1 : index
    %c0_383 = arith.constant 0 : index
    %c64_384 = arith.constant 64 : index
    %295 = vector.load %arg4[%c1_382, %c0_383, %c64_384] : memref<2x4x404xbf16, #tpu.memory_space<vmem>>, vector<1x4x320xbf16>
    %296 = vector.shape_cast %295 : vector<1x4x320xbf16> to vector<4x320xbf16>
    %c76_385 = arith.constant 76 : index
    %c384_386 = arith.constant 384 : index
    %297 = vector.load %arg5[%c76_385, %c384_386] : memref<104x768xbf16, #tpu.memory_space<vmem>>, vector<4x320xbf16>
    tpu.vector_store %arg5[%c76_385, %c384_386], %296 {strides = array<i32>} : memref<104x768xbf16, #tpu.memory_space<vmem>>, vector<4x320xbf16>,
    %c1_387 = arith.constant 1 : index
    %c0_388 = arith.constant 0 : index
    %c80_389 = arith.constant 80 : index
    %298 = vector.load %arg4[%c1_387, %c0_388, %c80_389] : memref<2x4x404xbf16, #tpu.memory_space<vmem>>, vector<1x4x320xbf16>
    %299 = vector.shape_cast %298 : vector<1x4x320xbf16> to vector<4x320xbf16>
    %c80_390 = arith.constant 80 : index
    %c384_391 = arith.constant 384 : index
    %300 = vector.load %arg5[%c80_390, %c384_391] : memref<104x768xbf16, #tpu.memory_space<vmem>>, vector<4x320xbf16>
    tpu.vector_store %arg5[%c80_390, %c384_391], %299 {strides = array<i32>} : memref<104x768xbf16, #tpu.memory_space<vmem>>, vector<4x320xbf16>,
    %c1_392 = arith.constant 1 : index
    %c0_393 = arith.constant 0 : index
    %c81_394 = arith.constant 81 : index
    %301 = vector.load %arg4[%c1_392, %c0_393, %c81_394] : memref<2x4x404xbf16, #tpu.memory_space<vmem>>, vector<1x4x320xbf16>
    %302 = vector.shape_cast %301 : vector<1x4x320xbf16> to vector<4x320xbf16>
    %c84_395 = arith.constant 84 : index
    %c384_396 = arith.constant 384 : index
    %303 = vector.load %arg5[%c84_395, %c384_396] : memref<104x768xbf16, #tpu.memory_space<vmem>>, vector<4x320xbf16>
    tpu.vector_store %arg5[%c84_395, %c384_396], %302 {strides = array<i32>} : memref<104x768xbf16, #tpu.memory_space<vmem>>, vector<4x320xbf16>,
    %c1_397 = arith.constant 1 : index
    %c0_398 = arith.constant 0 : index
    %c82_399 = arith.constant 82 : index
    %304 = vector.load %arg4[%c1_397, %c0_398, %c82_399] : memref<2x4x404xbf16, #tpu.memory_space<vmem>>, vector<1x4x320xbf16>
    %305 = vector.shape_cast %304 : vector<1x4x320xbf16> to vector<4x320xbf16>
    %c88_400 = arith.constant 88 : index
    %c384_401 = arith.constant 384 : index
    %306 = vector.load %arg5[%c88_400, %c384_401] : memref<104x768xbf16, #tpu.memory_space<vmem>>, vector<4x320xbf16>
    tpu.vector_store %arg5[%c88_400, %c384_401], %305 {strides = array<i32>} : memref<104x768xbf16, #tpu.memory_space<vmem>>, vector<4x320xbf16>,
    %c1_402 = arith.constant 1 : index
    %c0_403 = arith.constant 0 : index
    %c83_404 = arith.constant 83 : index
    %307 = vector.load %arg4[%c1_402, %c0_403, %c83_404] : memref<2x4x404xbf16, #tpu.memory_space<vmem>>, vector<1x4x320xbf16>
    %308 = vector.shape_cast %307 : vector<1x4x320xbf16> to vector<4x320xbf16>
    %c92_405 = arith.constant 92 : index
    %c384_406 = arith.constant 384 : index
    %309 = vector.load %arg5[%c92_405, %c384_406] : memref<104x768xbf16, #tpu.memory_space<vmem>>, vector<4x320xbf16>
    tpu.vector_store %arg5[%c92_405, %c384_406], %308 {strides = array<i32>} : memref<104x768xbf16, #tpu.memory_space<vmem>>, vector<4x320xbf16>,
    %c1_407 = arith.constant 1 : index
    %c0_408 = arith.constant 0 : index
    %c84_409 = arith.constant 84 : index
    %310 = vector.load %arg4[%c1_407, %c0_408, %c84_409] : memref<2x4x404xbf16, #tpu.memory_space<vmem>>, vector<1x4x320xbf16>
    %311 = vector.shape_cast %310 : vector<1x4x320xbf16> to vector<4x320xbf16>
    %c96_410 = arith.constant 96 : index
    %c384_411 = arith.constant 384 : index
    %312 = vector.load %arg5[%c96_410, %c384_411] : memref<104x768xbf16, #tpu.memory_space<vmem>>, vector<4x320xbf16>
    tpu.vector_store %arg5[%c96_410, %c384_411], %311 {strides = array<i32>} : memref<104x768xbf16, #tpu.memory_space<vmem>>, vector<4x320xbf16>,
    %c0_412 = arith.constant 0 : index
    %c0_413 = arith.constant 0 : index
    %313 = vector.load %arg2[%c0_412, %c0_413] : memref<8x104xbf16, #tpu.memory_space<vmem>>, vector<8x104xbf16>
    %c0_414 = arith.constant 0 : index
    %c0_415 = arith.constant 0 : index
    %314 = vector.load %arg5[%c0_414, %c0_415] : memref<104x768xbf16, #tpu.memory_space<vmem>>, vector<104x768xbf16>
    %cst = arith.constant dense<0.000000e+00> : vector<8x768xf32>
    %315 = tpu.matmul %313, %314, %cst {dimension_numbers = #tpu.dot_dimension_numbers<[1], [0], [0], [1], [0, 0, 1, 1], [], []>} : vector<8x104xbf16>, vector<104x768xbf16>, vector<8x768xf32> -> vector<8x768xf32>
    %316 = vector.extract_strided_slice %315 {offsets = [0, 0], sizes = [8, 320], strides = [1, 1]} : vector<8x768xf32> to vector<8x320xf32>
    %317 = arith.truncf %316 : vector<8x320xf32> to vector<8x320xbf16>
    %c0_416 = arith.constant 0 : index
    %c0_417 = arith.constant 0 : index
    %c0_418 = arith.constant 0 : index
    %318 = vector.load %arg3[%c0_416, %c0_417, %c0_418] : memref<2x8x320xbf16, #tpu.memory_space<vmem>>, vector<1x8x320xbf16>
    %319 = vector.shape_cast %318 : vector<1x8x320xbf16> to vector<8x320xbf16>
    %320 = vector.shape_cast %317 : vector<8x320xbf16> to vector<1x8x320xbf16>
    tpu.vector_store %arg3[%c0_416, %c0_417, %c0_418], %320 {strides = array<i32>} : memref<2x8x320xbf16, #tpu.memory_space<vmem>>, vector<1x8x320xbf16>,
    %321 = vector.extract_strided_slice %315 {offsets = [0, 384], sizes = [8, 320], strides = [1, 1]} : vector<8x768xf32> to vector<8x320xf32>
    %322 = arith.truncf %321 : vector<8x320xf32> to vector<8x320xbf16>
    %c1_419 = arith.constant 1 : index
    %c0_420 = arith.constant 0 : index
    %c0_421 = arith.constant 0 : index
    %323 = vector.load %arg3[%c1_419, %c0_420, %c0_421] : memref<2x8x320xbf16, #tpu.memory_space<vmem>>, vector<1x8x320xbf16>
    %324 = vector.shape_cast %323 : vector<1x8x320xbf16> to vector<8x320xbf16>
    %325 = vector.shape_cast %322 : vector<8x320xbf16> to vector<1x8x320xbf16>
    tpu.vector_store %arg3[%c1_419, %c0_420, %c0_421], %325 {strides = array<i32>} : memref<2x8x320xbf16, #tpu.memory_space<vmem>>, vector<1x8x320xbf16>,
    return
  }
  func.func @transform_0(%arg0: i32) -> (i32, i32, i32, i32) {
    %c0_i32 = arith.constant 0 : i32
    %c0_i32_0 = arith.constant 0 : i32
    %c0_i32_1 = arith.constant 0 : i32
    %c0_i32_2 = arith.constant 0 : i32
    return %arg0, %c0_i32, %c0_i32_0, %c0_i32_1 : i32, i32, i32, i32
  }
  func.func @transform_1(%arg0: i32) -> (i32, i32) {
    %c0_i32 = arith.constant 0 : i32
    %c0_i32_0 = arith.constant 0 : i32
    %c0_i32_1 = arith.constant 0 : i32
    return %c0_i32, %c0_i32_0 : i32, i32
  }
  func.func @transform_2(%arg0: i32) -> (i32, i32, i32) {
    %c0_i32 = arith.constant 0 : i32
    %c0_i32_0 = arith.constant 0 : i32
    %c0_i32_1 = arith.constant 0 : i32
    return %arg0, %c0_i32, %c0_i32_0 : i32, i32, i32
  }
}

</mosaic_0001>

<llo_original>
// kernel: tpu_custom_call.1
$region0: #{tpu_custom_call.1}
  #allocation0 [shape = 'u32[]', space=smem, size = 0x4, offset = 0x4, fixed_abs, tag = 'smem constant byte address 0x4 - core index']
  #allocation1 [shape = 'u32[144,128]{1,0:T(1,128)}', space=vmem, size = 0x12000, scoped, tag = 'internal scratch']
  #allocation2 [shape = 'bf16[2,4,404]{2,1,0:T(4,128)(2,1)}', space=vmem, size = 0x2000, scoped, tag = 'scratch operand']
  #allocation3 [shape = 'bf16[104,768]{1,0:T(8,128)(2,1)}', space=vmem, size = 0x27000, scoped, tag = 'scratch operand']
  %s0 = inlined_call_operand.hbm [shape: bf16[2,4,16,16], index: 0, kind: input, shape index: {}]
  %s1 = inlined_call_operand.hbm [shape: bf16[8,104], index: 1, kind: input, shape index: {}]
  %s2 = inlined_call_operand.hbm [shape: bf16[2,8,320], index: 2, kind: output, shape index: {}]
  %s3 = sld [smem:[#allocation0]]
  $region30: #{tpu_custom_call.1} parent=0
    _
  %s5 = ssub.s32 1, %s3
  %s6 = scalar_select 0, %s5, %s3
  $region1: #{tpu_custom_call.1} parent=0
    #allocation4 [shape = 'u8[32768]{0}', space=vmem, size = 0x8000, scoped, tag = 'input window, operand 0, single buffered']
    #allocation5 [shape = 's32[1]{0}', space=sflag, size = 0x4, scoped, tag = 'scoped memory for tpu_custom_call.1']
    #allocation6 [shape = 's32[1]{0}', space=sflag, size = 0x4, scoped, tag = 'scoped memory for tpu_custom_call.1']
    #allocation7 [shape = 'u8[2048]{0}', space=vmem, size = 0x800, scoped, tag = 'input window, operand 1, single buffered']
    #allocation8 [shape = 's32[1]{0}', space=sflag, size = 0x4, scoped, tag = 'scoped memory for tpu_custom_call.1']
    #allocation9 [shape = 'u8[12288]{0}', space=vmem, size = 0x3000, scoped, tag = 'output window, operand 0, single buffered']
    %7 = vsyncpa [#allocation5], 0
    %8 = vsyncpa [#allocation8], 0
    %9 = vsyncpa [#allocation6], 0
    // Predicated region
    $region2: #{tpu_custom_call.1} parent=1 // pred_check
      _
    $region3: #{tpu_custom_call.1} parent=1 // pred_check_branch
      %11 = sbr.rel (0) target = $region5
    $region4: #{tpu_custom_call.1} parent=1 // pred_region
      %s13 = ssub.s32 1024, 1024
      %14 = vsyncadd [#allocation5], %s13
      %s15 = sshll.u32 [#allocation4], 4
      %s16 = int_to_ptr.vmem [resolvable:$true] %s15
      %21 = dma.hbm_to_vmem [thread:$0]  %s0, 1024, %s16, [#allocation5], 64, 64, 4
    $region5: #{tpu_custom_call.1} parent=1 // pred_fallthru
      _
    // Predicated region
    $region6: #{tpu_custom_call.1} parent=1 // pred_check
      _
    $region7: #{tpu_custom_call.1} parent=1 // pred_check_branch
      %23 = sbr.rel (0) target = $region9
    $region8: #{tpu_custom_call.1} parent=1 // pred_region
      %s25 = ssub.s32 64, 64
      %26 = vsyncadd [#allocation8], %s25
      %s28 = sshll.u32 [#allocation7], 4
      %s29 = int_to_ptr.vmem [resolvable:$true] %s28
      %31 = dma.hbm_to_vmem [thread:$0]  %s1, 64, %s29, [#allocation8]
    $region9: #{tpu_custom_call.1} parent=1 // pred_fallthru
      _
    // Predicated region
    $region10: #{tpu_custom_call.1} parent=1 // pred_check
      _
    $region11: #{tpu_custom_call.1} parent=1 // pred_check_branch
      %33 = sbr.rel (0) target = $region13
    $region12: #{tpu_custom_call.1} parent=1 // pred_region
      %34 = dma.done [#allocation5], 1024
    $region13: #{tpu_custom_call.1} parent=1 // pred_fallthru
      _
    // Predicated region
    $region14: #{tpu_custom_call.1} parent=1 // pred_check
      _
    $region15: #{tpu_custom_call.1} parent=1 // pred_check_branch
      %36 = sbr.rel (0) target = $region17
    $region16: #{tpu_custom_call.1} parent=1 // pred_region
      %37 = dma.done [#allocation8], 64
    $region17: #{tpu_custom_call.1} parent=1 // pred_fallthru
      _
    %p39 = scmp.eq.s32.totalorder 0, 0
    // Predicated region
    $region18: #{tpu_custom_call.1} parent=1 // pred_check
      %p40 = pneg %p39
    $region19: #{tpu_custom_call.1} parent=1 // pred_check_branch
      %42 = sbr.rel (%p40) target = $region21
    $region20: #{tpu_custom_call.1} parent=1 // pred_region
      %vm43 = vcmask 1041408
      %vm44 = vcmask 1043458
      %vm45 = vmor %vm44, %vm43
      %vm46 = vcmask 1045508
      %vm47 = vmor %vm46, %vm45
      %vm48 = vcmask 162822
      %vm49 = vmor %vm48, %vm47
      %50 = vst.msk [vmem:[#allocation2] sm:$0xff] %vm49, 0
      %51 = vst.msk [vmem:[#allocation2 + $0x8] sm:$0xff] %vm49, 0
      %52 = vst [vmem:[#allocation3] sm:$0xff] 0
      %53 = vst [vmem:[#allocation3 + $0x8] sm:$0xff] 0
      %54 = vst [vmem:[#allocation3 + $0x10] sm:$0xff] 0
      %55 = vst [vmem:[#allocation3 + $0x18] sm:$0xff] 0
      %56 = vst [vmem:[#allocation3 + $0x20] sm:$0xff] 0
      %57 = vst [vmem:[#allocation3 + $0x28] sm:$0xff] 0
      %58 = vst [vmem:[#allocation3 + $0x30] sm:$0xff] 0
      %59 = vst [vmem:[#allocation3 + $0x38] sm:$0xff] 0
      %60 = vst [vmem:[#allocation3 + $0x40] sm:$0xff] 0
      %61 = vst [vmem:[#allocation3 + $0x48] sm:$0xff] 0
      %62 = vst [vmem:[#allocation3 + $0x50] sm:$0xff] 0
      %63 = vst [vmem:[#allocation3 + $0x58] sm:$0xff] 0
      %64 = vst [vmem:[#allocation3 + $0x60] sm:$0xff] 0
      %65 = vst [vmem:[#allocation3 + $0x68] sm:$0xff] 0
      %66 = vst [vmem:[#allocation3 + $0x70] sm:$0xff] 0
      %67 = vst [vmem:[#allocation3 + $0x78] sm:$0xff] 0
      %68 = vst [vmem:[#allocation3 + $0x80] sm:$0xff] 0
      %69 = vst [vmem:[#allocation3 + $0x88] sm:$0xff] 0
      %70 = vst [vmem:[#allocation3 + $0x90] sm:$0xff] 0
      %71 = vst [vmem:[#allocation3 + $0x98] sm:$0xff] 0
      %72 = vst [vmem:[#allocation3 + $0xa0] sm:$0xff] 0
      %73 = vst [vmem:[#allocation3 + $0xa8] sm:$0xff] 0
      %74 = vst [vmem:[#allocation3 + $0xb0] sm:$0xff] 0
      %75 = vst [vmem:[#allocation3 + $0xb8] sm:$0xff] 0
      %76 = vst [vmem:[#allocation3 + $0xc0] sm:$0xff] 0
      %77 = vst [vmem:[#allocation3 + $0xc8] sm:$0xff] 0
      %78 = vst [vmem:[#allocation3 + $0xd0] sm:$0xff] 0
      %79 = vst [vmem:[#allocation3 + $0xd8] sm:$0xff] 0
      %80 = vst [vmem:[#allocation3 + $0xe0] sm:$0xff] 0
      %81 = vst [vmem:[#allocation3 + $0xe8] sm:$0xff] 0
      %82 = vst [vmem:[#allocation3 + $0xf0] sm:$0xff] 0
      %83 = vst [vmem:[#allocation3 + $0xf8] sm:$0xff] 0
      %84 = vst [vmem:[#allocation3 + $0x100] sm:$0xff] 0
      %85 = vst [vmem:[#allocation3 + $0x108] sm:$0xff] 0
      %86 = vst [vmem:[#allocation3 + $0x110] sm:$0xff] 0
      %87 = vst [vmem:[#allocation3 + $0x118] sm:$0xff] 0
      %88 = vst [vmem:[#allocation3 + $0x120] sm:$0xff] 0
      %89 = vst [vmem:[#allocation3 + $0x128] sm:$0xff] 0
      %90 = vst [vmem:[#allocation3 + $0x130] sm:$0xff] 0
    $region21: #{tpu_custom_call.1} parent=1 // pred_fallthru
      _
    %v91 = vld [vmem:[#allocation4] sm:$0x1]
    %v92 = vld [vmem:[#allocation4 + $0x8] sm:$0x1]
    %v93 = vld [vmem:[#allocation4 + $0x10] sm:$0x1]
    %v94 = vld [vmem:[#allocation4 + $0x18] sm:$0x1]
    %v100 = vunpack.c.l.s4 1983009808
    %v101 = vunpack.c.0.s8 %v100
    %v102 = vlaneseq
    %v103 = vshrl.u32 %v102, 7
    %v104 = vsub.s32 %v101, %v103
    %v105 = vrot.slane %v91, %v104
    %v107 = vunpack.c.l.s4 1983009808
    %v108 = vunpack.c.0.s8 %v107
    %v109 = vlaneseq
    %v110 = vshrl.u32 %v109, 7
    %v111 = vsub.s32 %v108, %v110
    %v112 = vrot.slane %v92, %v111
    %v114 = vunpack.c.l.s4 1983009808
    %v115 = vunpack.c.0.s8 %v114
    %v116 = vlaneseq
    %v117 = vshrl.u32 %v116, 7
    %v118 = vsub.s32 %v115, %v117
    %v119 = vrot.slane %v93, %v118
    %v121 = vunpack.c.l.s4 1983009808
    %v122 = vunpack.c.0.s8 %v121
    %v123 = vlaneseq
    %v124 = vshrl.u32 %v123, 7
    %v125 = vsub.s32 %v122, %v124
    %v126 = vrot.slane %v94, %v125
    %v128 = vunpack.c.l.s4 1983009808
    %v129 = vunpack.c.0.s8 %v128
    %v130 = vlaneseq
    %v131 = vshrl.u32 %v130, 7
    %v132 = vsub.s32 %v129, %v131
    %v133 = vrot.slane %v105, %v132
    %v135 = vunpack.c.l.s4 1983009808
    %v136 = vunpack.c.0.s8 %v135
    %v137 = vlaneseq
    %v138 = vshrl.u32 %v137, 7
    %v139 = vsub.s32 %v136, %v138
    %v140 = vrot.slane %v112, %v139
    %v142 = vunpack.c.l.s4 1983009808
    %v143 = vunpack.c.0.s8 %v142
    %v144 = vlaneseq
    %v145 = vshrl.u32 %v144, 7
    %v146 = vsub.s32 %v143, %v145
    %v147 = vrot.slane %v119, %v146
    %v149 = vunpack.c.l.s4 1983009808
    %v150 = vunpack.c.0.s8 %v149
    %v151 = vlaneseq
    %v152 = vshrl.u32 %v151, 7
    %v153 = vsub.s32 %v150, %v152
    %v154 = vrot.slane %v126, %v153
    %v155 = vunpack.c.l.b16 %v133
    %v156 = vunpack.c.l.b16 %v140
    %v157 = vunpack.c.l.b16 %v147
    %v158 = vunpack.c.l.b16 %v154
    %v159 = vrot.slane %v156, 7
    %vm160 = vcmask 1041409
    %v161 = vsel %vm160, %v159, %v155
    %v162 = vrot.slane %v157, 6
    %vm163 = vcmask 1042434
    %v164 = vsel %vm163, %v162, %v161
    %v165 = vrot.slane %v158, 5
    %vm166 = vcmask 1043459
    %v167 = vsel %vm166, %v165, %v164
    %v168 = vpack.c.b16 %v167, %v167
    %v170 = vunpack.c.l.s4 1983009808
    %v171 = vunpack.c.0.s8 %v170
    %v172 = vlaneseq
    %v173 = vshrl.u32 %v172, 7
    %v174 = vsub.s32 %v171, %v173
    %v175 = vrot.slane %v168, %v174
    %176 = vrot.lane.b32.xlu0 %v175, 42
    %v177 = vpop.permute.xlu0 %176
    %vm179 = vcmask 468304
    %180 = vst.msk [vmem:[#allocation2] sm:$0x3] %vm179, %v177
    %v181 = vld [vmem:[#allocation4] sm:$0x1]
    %v182 = vld [vmem:[#allocation4 + $0x8] sm:$0x1]
    %v183 = vld [vmem:[#allocation4 + $0x10] sm:$0x1]
    %v184 = vld [vmem:[#allocation4 + $0x18] sm:$0x1]
    %v190 = vunpack.c.l.s4 1983009808
    %v191 = vunpack.c.0.s8 %v190
    %v192 = vlaneseq
    %v193 = vshrl.u32 %v192, 7
    %v194 = vsub.s32 %v191, %v193
    %v195 = vrot.slane %v181, %v194
    %v197 = vunpack.c.l.s4 1983009808
    %v198 = vunpack.c.0.s8 %v197
    %v199 = vlaneseq
    %v200 = vshrl.u32 %v199, 7
    %v201 = vsub.s32 %v198, %v200
    %v202 = vrot.slane %v182, %v201
    %v204 = vunpack.c.l.s4 1983009808
    %v205 = vunpack.c.0.s8 %v204
    %v206 = vlaneseq
    %v207 = vshrl.u32 %v206, 7
    %v208 = vsub.s32 %v205, %v207
    %v209 = vrot.slane %v183, %v208
    %v211 = vunpack.c.l.s4 1983009808
    %v212 = vunpack.c.0.s8 %v211
    %v213 = vlaneseq
    %v214 = vshrl.u32 %v213, 7
    %v215 = vsub.s32 %v212, %v214
    %v216 = vrot.slane %v184, %v215
    %v218 = vunpack.c.l.s4 1983009808
    %v219 = vunpack.c.0.s8 %v218
    %v220 = vlaneseq
    %v221 = vshrl.u32 %v220, 7
    %v222 = vsub.s32 %v219, %v221
    %v223 = vrot.slane %v195, %v222
    %v225 = vunpack.c.l.s4 1983009808
    %v226 = vunpack.c.0.s8 %v225
    %v227 = vlaneseq
    %v228 = vshrl.u32 %v227, 7
    %v229 = vsub.s32 %v226, %v228
    %v230 = vrot.slane %v202, %v229
    %v232 = vunpack.c.l.s4 1983009808
    %v233 = vunpack.c.0.s8 %v232
    %v234 = vlaneseq
    %v235 = vshrl.u32 %v234, 7
    %v236 = vsub.s32 %v233, %v235
    %v237 = vrot.slane %v209, %v236
    %v239 = vunpack.c.l.s4 1983009808
    %v240 = vunpack.c.0.s8 %v239
    %v241 = vlaneseq
    %v242 = vshrl.u32 %v241, 7
    %v243 = vsub.s32 %v240, %v242
    %v244 = vrot.slane %v216, %v243
    %v245 = vunpack.c.l.b16 %v223
    %v246 = vunpack.c.l.b16 %v230
    %v247 = vunpack.c.l.b16 %v237
    %v248 = vunpack.c.l.b16 %v244
    %v249 = vrot.slane %v245, 1
    %v250 = vsel %vm160, %v246, %v249
    %v251 = vrot.slane %v247, 7
    %v252 = vsel %vm163, %v251, %v250
    %v253 = vrot.slane %v248, 6
    %v254 = vsel %vm166, %v253, %v252
    %v255 = vpack.c.b16 %v254, %v254
    %v257 = vunpack.c.l.s4 1983009808
    %v258 = vunpack.c.0.s8 %v257
    %v259 = vlaneseq
    %v260 = vshrl.u32 %v259, 7
    %v261 = vsub.s32 %v258, %v260
    %v262 = vrot.slane %v255, %v261
    %263 = vrot.lane.b32.xlu0 %v262, 62
    %v264 = vpop.permute.xlu0 %263
    %vm266 = vcmask 632304
    %267 = vst.msk [vmem:[#allocation2] sm:$0x3] %vm266, %v264
    %v268 = vld [vmem:[#allocation4] sm:$0x2]
    %v269 = vld [vmem:[#allocation4 + $0x8] sm:$0x2]
    %v270 = vld [vmem:[#allocation4 + $0x10] sm:$0x2]
    %v271 = vld [vmem:[#allocation4 + $0x18] sm:$0x2]
    %v277 = vunpack.c.l.s4 1983009808
    %v278 = vunpack.c.0.s8 %v277
    %v279 = vlaneseq
    %v280 = vshrl.u32 %v279, 7
    %v281 = vsub.s32 %v278, %v280
    %v282 = vrot.slane %v268, %v281
    %v284 = vunpack.c.l.s4 1983009808
    %v285 = vunpack.c.0.s8 %v284
    %v286 = vlaneseq
    %v287 = vshrl.u32 %v286, 7
    %v288 = vsub.s32 %v285, %v287
    %v289 = vrot.slane %v269, %v288
    %v291 = vunpack.c.l.s4 1983009808
    %v292 = vunpack.c.0.s8 %v291
    %v293 = vlaneseq
    %v294 = vshrl.u32 %v293, 7
    %v295 = vsub.s32 %v292, %v294
    %v296 = vrot.slane %v270, %v295
    %v298 = vunpack.c.l.s4 1983009808
    %v299 = vunpack.c.0.s8 %v298
    %v300 = vlaneseq
    %v301 = vshrl.u32 %v300, 7
    %v302 = vsub.s32 %v299, %v301
    %v303 = vrot.slane %v271, %v302
    %v305 = vunpack.c.l.s4 1983009808
    %v306 = vunpack.c.0.s8 %v305
    %v307 = vlaneseq
    %v308 = vshrl.u32 %v307, 7
    %v309 = vsub.s32 %v306, %v308
    %v310 = vrot.slane %v282, %v309
    %v312 = vunpack.c.l.s4 1983009808
    %v313 = vunpack.c.0.s8 %v312
    %v314 = vlaneseq
    %v315 = vshrl.u32 %v314, 7
    %v316 = vsub.s32 %v313, %v315
    %v317 = vrot.slane %v289, %v316
    %v319 = vunpack.c.l.s4 1983009808
    %v320 = vunpack.c.0.s8 %v319
    %v321 = vlaneseq
    %v322 = vshrl.u32 %v321, 7
    %v323 = vsub.s32 %v320, %v322
    %v324 = vrot.slane %v296, %v323
    %v326 = vunpack.c.l.s4 1983009808
    %v327 = vunpack.c.0.s8 %v326
    %v328 = vlaneseq
    %v329 = vshrl.u32 %v328, 7
    %v330 = vsub.s32 %v327, %v329
    %v331 = vrot.slane %v303, %v330
    %v332 = vunpack.c.l.b16 %v310
    %v333 = vunpack.c.l.b16 %v317
    %v334 = vunpack.c.l.b16 %v324
    %v335 = vunpack.c.l.b16 %v331
    %v336 = vrot.slane %v332, 2
    %v337 = vrot.slane %v333, 1
    %v338 = vsel %vm160, %v337, %v336
    %v339 = vsel %vm163, %v334, %v338
    %v340 = vrot.slane %v335, 7
    %v341 = vsel %vm166, %v340, %v339
    %v342 = vpack.c.b16 %v341, %v341
    %v344 = vunpack.c.l.s4 1983009808
    %v345 = vunpack.c.0.s8 %v344
    %v346 = vlaneseq
    %v347 = vshrl.u32 %v346, 7
    %v348 = vsub.s32 %v345, %v347
    %v349 = vrot.slane %v342, %v348
    %350 = vrot.lane.b32.xlu0 %v349, 82
    %v351 = vpop.permute.xlu0 %350
    %vm353 = vcmask 796304
    %354 = vst.msk [vmem:[#allocation2] sm:$0x3] %vm353, %v351
    %v355 = vld [vmem:[#allocation4] sm:$0x2]
    %v356 = vld [vmem:[#allocation4 + $0x8] sm:$0x2]
    %v357 = vld [vmem:[#allocation4 + $0x10] sm:$0x2]
    %v358 = vld [vmem:[#allocation4 + $0x18] sm:$0x2]
    %v364 = vunpack.c.l.s4 1983009808
    %v365 = vunpack.c.0.s8 %v364
    %v366 = vlaneseq
    %v367 = vshrl.u32 %v366, 7
    %v368 = vsub.s32 %v365, %v367
    %v369 = vrot.slane %v355, %v368
    %v371 = vunpack.c.l.s4 1983009808
    %v372 = vunpack.c.0.s8 %v371
    %v373 = vlaneseq
    %v374 = vshrl.u32 %v373, 7
    %v375 = vsub.s32 %v372, %v374
    %v376 = vrot.slane %v356, %v375
    %v378 = vunpack.c.l.s4 1983009808
    %v379 = vunpack.c.0.s8 %v378
    %v380 = vlaneseq
    %v381 = vshrl.u32 %v380, 7
    %v382 = vsub.s32 %v379, %v381
    %v383 = vrot.slane %v357, %v382
    %v385 = vunpack.c.l.s4 1983009808
    %v386 = vunpack.c.0.s8 %v385
    %v387 = vlaneseq
    %v388 = vshrl.u32 %v387, 7
    %v389 = vsub.s32 %v386, %v388
    %v390 = vrot.slane %v358, %v389
    %v392 = vunpack.c.l.s4 1983009808
    %v393 = vunpack.c.0.s8 %v392
    %v394 = vlaneseq
    %v395 = vshrl.u32 %v394, 7
    %v396 = vsub.s32 %v393, %v395
    %v397 = vrot.slane %v369, %v396
    %v399 = vunpack.c.l.s4 1983009808
    %v400 = vunpack.c.0.s8 %v399
    %v401 = vlaneseq
    %v402 = vshrl.u32 %v401, 7
    %v403 = vsub.s32 %v400, %v402
    %v404 = vrot.slane %v376, %v403
    %v406 = vunpack.c.l.s4 1983009808
    %v407 = vunpack.c.0.s8 %v406
    %v408 = vlaneseq
    %v409 = vshrl.u32 %v408, 7
    %v410 = vsub.s32 %v407, %v409
    %v411 = vrot.slane %v383, %v410
    %v413 = vunpack.c.l.s4 1983009808
    %v414 = vunpack.c.0.s8 %v413
    %v415 = vlaneseq
    %v416 = vshrl.u32 %v415, 7
    %v417 = vsub.s32 %v414, %v416
    %v418 = vrot.slane %v390, %v417
    %v419 = vunpack.c.l.b16 %v397
    %v420 = vunpack.c.l.b16 %v404
    %v421 = vunpack.c.l.b16 %v411
    %v422 = vunpack.c.l.b16 %v418
    %v423 = vrot.slane %v419, 3
    %v424 = vrot.slane %v420, 2
    %v425 = vsel %vm160, %v424, %v423
    %v426 = vrot.slane %v421, 1
    %v427 = vsel %vm163, %v426, %v425
    %v428 = vsel %vm166, %v422, %v427
    %v429 = vpack.c.b16 %v428, %v428
    %v431 = vunpack.c.l.s4 1983009808
    %v432 = vunpack.c.0.s8 %v431
    %v433 = vlaneseq
    %v434 = vshrl.u32 %v433, 7
    %v435 = vsub.s32 %v432, %v434
    %v436 = vrot.slane %v429, %v435
    %437 = vrot.lane.b32.xlu0 %v436, 102
    %v438 = vpop.permute.xlu0 %437
    %vm440 = vcmask 960304
    %441 = vst.msk [vmem:[#allocation2] sm:$0x3] %vm440, %v438
    %v442 = vld [vmem:[#allocation4] sm:$0x4]
    %v443 = vld [vmem:[#allocation4 + $0x8] sm:$0x4]
    %v444 = vld [vmem:[#allocation4 + $0x10] sm:$0x4]
    %v445 = vld [vmem:[#allocation4 + $0x18] sm:$0x4]
    %v451 = vunpack.c.l.s4 1983009808
    %v452 = vunpack.c.0.s8 %v451
    %v453 = vlaneseq
    %v454 = vshrl.u32 %v453, 7
    %v455 = vsub.s32 %v452, %v454
    %v456 = vrot.slane %v442, %v455
    %v457 = vcombine.high %v456, %v456
    %v459 = vunpack.c.l.s4 1983009808
    %v460 = vunpack.c.0.s8 %v459
    %v461 = vlaneseq
    %v462 = vshrl.u32 %v461, 7
    %v463 = vsub.s32 %v460, %v462
    %v464 = vrot.slane %v443, %v463
    %v465 = vcombine.high %v464, %v464
    %v467 = vunpack.c.l.s4 1983009808
    %v468 = vunpack.c.0.s8 %v467
    %v469 = vlaneseq
    %v470 = vshrl.u32 %v469, 7
    %v471 = vsub.s32 %v468, %v470
    %v472 = vrot.slane %v444, %v471
    %v473 = vcombine.high %v472, %v472
    %v475 = vunpack.c.l.s4 1983009808
    %v476 = vunpack.c.0.s8 %v475
    %v477 = vlaneseq
    %v478 = vshrl.u32 %v477, 7
    %v479 = vsub.s32 %v476, %v478
    %v480 = vrot.slane %v445, %v479
    %v481 = vcombine.high %v480, %v480
    %v483 = vunpack.c.l.s4 1983009808
    %v484 = vunpack.c.0.s8 %v483
    %v485 = vlaneseq
    %v486 = vshrl.u32 %v485, 7
    %v487 = vsub.s32 %v484, %v486
    %v488 = vrot.slane %v457, %v487
    %v490 = vunpack.c.l.s4 1983009808
    %v491 = vunpack.c.0.s8 %v490
    %v492 = vlaneseq
    %v493 = vshrl.u32 %v492, 7
    %v494 = vsub.s32 %v491, %v493
    %v495 = vrot.slane %v465, %v494
    %v497 = vunpack.c.l.s4 1983009808
    %v498 = vunpack.c.0.s8 %v497
    %v499 = vlaneseq
    %v500 = vshrl.u32 %v499, 7
    %v501 = vsub.s32 %v498, %v500
    %v502 = vrot.slane %v473, %v501
    %v504 = vunpack.c.l.s4 1983009808
    %v505 = vunpack.c.0.s8 %v504
    %v506 = vlaneseq
    %v507 = vshrl.u32 %v506, 7
    %v508 = vsub.s32 %v505, %v507
    %v509 = vrot.slane %v481, %v508
    %v510 = vunpack.c.l.b16 %v488
    %v511 = vunpack.c.l.b16 %v495
    %v512 = vunpack.c.l.b16 %v502
    %v513 = vunpack.c.l.b16 %v509
    %v514 = vrot.slane %v511, 7
    %v515 = vsel %vm160, %v514, %v510
    %v516 = vrot.slane %v512, 6
    %v517 = vsel %vm163, %v516, %v515
    %v518 = vrot.slane %v513, 5
    %v519 = vsel %vm166, %v518, %v517
    %v520 = vpack.c.b16 %v519, %v519
    %v522 = vunpack.c.l.s4 1983009808
    %v523 = vunpack.c.0.s8 %v522
    %v524 = vlaneseq
    %v525 = vshrl.u32 %v524, 7
    %v526 = vsub.s32 %v523, %v525
    %v527 = vrot.slane %v520, %v526
    %528 = vrot.lane.b32.xlu0 %v527, 122
    %v529 = vpop.permute.xlu0 %528
    %v530 = vrot.slane %v529, 6
    %vm531 = vcmask 998400
    %v532 = vsel %vm531, %v530, %v529
    %vm534 = vcmask 1042384
    %vm535 = vcmask 76802
    %vm536 = vmor %vm535, %vm534
    %537 = vst.msk [vmem:[#allocation2] sm:$0xf] %vm536, %v532
    %v538 = vld [vmem:[#allocation4] sm:$0x4]
    %v539 = vld [vmem:[#allocation4 + $0x8] sm:$0x4]
    %v540 = vld [vmem:[#allocation4 + $0x10] sm:$0x4]
    %v541 = vld [vmem:[#allocation4 + $0x18] sm:$0x4]
    %v547 = vunpack.c.l.s4 1983009808
    %v548 = vunpack.c.0.s8 %v547
    %v549 = vlaneseq
    %v550 = vshrl.u32 %v549, 7
    %v551 = vsub.s32 %v548, %v550
    %v552 = vrot.slane %v538, %v551
    %v553 = vcombine.high %v552, %v552
    %v555 = vunpack.c.l.s4 1983009808
    %v556 = vunpack.c.0.s8 %v555
    %v557 = vlaneseq
    %v558 = vshrl.u32 %v557, 7
    %v559 = vsub.s32 %v556, %v558
    %v560 = vrot.slane %v539, %v559
    %v561 = vcombine.high %v560, %v560
    %v563 = vunpack.c.l.s4 1983009808
    %v564 = vunpack.c.0.s8 %v563
    %v565 = vlaneseq
    %v566 = vshrl.u32 %v565, 7
    %v567 = vsub.s32 %v564, %v566
    %v568 = vrot.slane %v540, %v567
    %v569 = vcombine.high %v568, %v568
    %v571 = vunpack.c.l.s4 1983009808
    %v572 = vunpack.c.0.s8 %v571
    %v573 = vlaneseq
    %v574 = vshrl.u32 %v573, 7
    %v575 = vsub.s32 %v572, %v574
    %v576 = vrot.slane %v541, %v575
    %v577 = vcombine.high %v576, %v576
    %v579 = vunpack.c.l.s4 1983009808
    %v580 = vunpack.c.0.s8 %v579
    %v581 = vlaneseq
    %v582 = vshrl.u32 %v581, 7
    %v583 = vsub.s32 %v580, %v582
    %v584 = vrot.slane %v553, %v583
    %v586 = vunpack.c.l.s4 1983009808
    %v587 = vunpack.c.0.s8 %v586
    %v588 = vlaneseq
    %v589 = vshrl.u32 %v588, 7
    %v590 = vsub.s32 %v587, %v589
    %v591 = vrot.slane %v561, %v590
    %v593 = vunpack.c.l.s4 1983009808
    %v594 = vunpack.c.0.s8 %v593
    %v595 = vlaneseq
    %v596 = vshrl.u32 %v595, 7
    %v597 = vsub.s32 %v594, %v596
    %v598 = vrot.slane %v569, %v597
    %v600 = vunpack.c.l.s4 1983009808
    %v601 = vunpack.c.0.s8 %v600
    %v602 = vlaneseq
    %v603 = vshrl.u32 %v602, 7
    %v604 = vsub.s32 %v601, %v603
    %v605 = vrot.slane %v577, %v604
    %v606 = vunpack.c.l.b16 %v584
    %v607 = vunpack.c.l.b16 %v591
    %v608 = vunpack.c.l.b16 %v598
    %v609 = vunpack.c.l.b16 %v605
    %v610 = vrot.slane %v606, 1
    %v611 = vsel %vm160, %v607, %v610
    %v612 = vrot.slane %v608, 7
    %v613 = vsel %vm163, %v612, %v611
    %v614 = vrot.slane %v609, 6
    %v615 = vsel %vm166, %v614, %v613
    %v616 = vpack.c.b16 %v615, %v615
    %v618 = vunpack.c.l.s4 1983009808
    %v619 = vunpack.c.0.s8 %v618
    %v620 = vlaneseq
    %v621 = vshrl.u32 %v620, 7
    %v622 = vsub.s32 %v619, %v621
    %v623 = vrot.slane %v616, %v622
    %624 = vrot.lane.b32.xlu0 %v623, 14
    %v625 = vpop.permute.xlu0 %624
    %vm627 = vcmask 238704
    %628 = vst.msk [vmem:[#allocation2 + $0x2] sm:$0x3] %vm627, %v625
    %v629 = vld [vmem:[#allocation4] sm:$0x8]
    %v630 = vld [vmem:[#allocation4 + $0x8] sm:$0x8]
    %v631 = vld [vmem:[#allocation4 + $0x10] sm:$0x8]
    %v632 = vld [vmem:[#allocation4 + $0x18] sm:$0x8]
    %v638 = vunpack.c.l.s4 1983009808
    %v639 = vunpack.c.0.s8 %v638
    %v640 = vlaneseq
    %v641 = vshrl.u32 %v640, 7
    %v642 = vsub.s32 %v639, %v641
    %v643 = vrot.slane %v629, %v642
    %v644 = vcombine.high %v643, %v643
    %v646 = vunpack.c.l.s4 1983009808
    %v647 = vunpack.c.0.s8 %v646
    %v648 = vlaneseq
    %v649 = vshrl.u32 %v648, 7
    %v650 = vsub.s32 %v647, %v649
    %v651 = vrot.slane %v630, %v650
    %v652 = vcombine.high %v651, %v651
    %v654 = vunpack.c.l.s4 1983009808
    %v655 = vunpack.c.0.s8 %v654
    %v656 = vlaneseq
    %v657 = vshrl.u32 %v656, 7
    %v658 = vsub.s32 %v655, %v657
    %v659 = vrot.slane %v631, %v658
    %v660 = vcombine.high %v659, %v659
    %v662 = vunpack.c.l.s4 1983009808
    %v663 = vunpack.c.0.s8 %v662
    %v664 = vlaneseq
    %v665 = vshrl.u32 %v664, 7
    %v666 = vsub.s32 %v663, %v665
    %v667 = vrot.slane %v632, %v666
    %v668 = vcombine.high %v667, %v667
    %v670 = vunpack.c.l.s4 1983009808
    %v671 = vunpack.c.0.s8 %v670
    %v672 = vlaneseq
    %v673 = vshrl.u32 %v672, 7
    %v674 = vsub.s32 %v671, %v673
    %v675 = vrot.slane %v644, %v674
    %v677 = vunpack.c.l.s4 1983009808
    %v678 = vunpack.c.0.s8 %v677
    %v679 = vlaneseq
    %v680 = vshrl.u32 %v679, 7
    %v681 = vsub.s32 %v678, %v680
    %v682 = vrot.slane %v652, %v681
    %v684 = vunpack.c.l.s4 1983009808
    %v685 = vunpack.c.0.s8 %v684
    %v686 = vlaneseq
    %v687 = vshrl.u32 %v686, 7
    %v688 = vsub.s32 %v685, %v687
    %v689 = vrot.slane %v660, %v688
    %v691 = vunpack.c.l.s4 1983009808
    %v692 = vunpack.c.0.s8 %v691
    %v693 = vlaneseq
    %v694 = vshrl.u32 %v693, 7
    %v695 = vsub.s32 %v692, %v694
    %v696 = vrot.slane %v668, %v695
    %v697 = vunpack.c.l.b16 %v675
    %v698 = vunpack.c.l.b16 %v682
    %v699 = vunpack.c.l.b16 %v689
    %v700 = vunpack.c.l.b16 %v696
    %v701 = vrot.slane %v697, 2
    %v702 = vrot.slane %v698, 1
    %v703 = vsel %vm160, %v702, %v701
    %v704 = vsel %vm163, %v699, %v703
    %v705 = vrot.slane %v700, 7
    %v706 = vsel %vm166, %v705, %v704
    %v707 = vpack.c.b16 %v706, %v706
    %v709 = vunpack.c.l.s4 1983009808
    %v710 = vunpack.c.0.s8 %v709
    %v711 = vlaneseq
    %v712 = vshrl.u32 %v711, 7
    %v713 = vsub.s32 %v710, %v712
    %v714 = vrot.slane %v707, %v713
    %715 = vrot.lane.b32.xlu0 %v714, 34
    %v716 = vpop.permute.xlu0 %715
    %vm718 = vcmask 402704
    %719 = vst.msk [vmem:[#allocation2 + $0x2] sm:$0x3] %vm718, %v716
    %v720 = vld [vmem:[#allocation4] sm:$0x8]
    %v721 = vld [vmem:[#allocation4 + $0x8] sm:$0x8]
    %v722 = vld [vmem:[#allocation4 + $0x10] sm:$0x8]
    %v723 = vld [vmem:[#allocation4 + $0x18] sm:$0x8]
    %v729 = vunpack.c.l.s4 1983009808
    %v730 = vunpack.c.0.s8 %v729
    %v731 = vlaneseq
    %v732 = vshrl.u32 %v731, 7
    %v733 = vsub.s32 %v730, %v732
    %v734 = vrot.slane %v720, %v733
    %v735 = vcombine.high %v734, %v734
    %v737 = vunpack.c.l.s4 1983009808
    %v738 = vunpack.c.0.s8 %v737
    %v739 = vlaneseq
    %v740 = vshrl.u32 %v739, 7
    %v741 = vsub.s32 %v738, %v740
    %v742 = vrot.slane %v721, %v741
    %v743 = vcombine.high %v742, %v742
    %v745 = vunpack.c.l.s4 1983009808
    %v746 = vunpack.c.0.s8 %v745
    %v747 = vlaneseq
    %v748 = vshrl.u32 %v747, 7
    %v749 = vsub.s32 %v746, %v748
    %v750 = vrot.slane %v722, %v749
    %v751 = vcombine.high %v750, %v750
    %v753 = vunpack.c.l.s4 1983009808
    %v754 = vunpack.c.0.s8 %v753
    %v755 = vlaneseq
    %v756 = vshrl.u32 %v755, 7
    %v757 = vsub.s32 %v754, %v756
    %v758 = vrot.slane %v723, %v757
    %v759 = vcombine.high %v758, %v758
    %v761 = vunpack.c.l.s4 1983009808
    %v762 = vunpack.c.0.s8 %v761
    %v763 = vlaneseq
    %v764 = vshrl.u32 %v763, 7
    %v765 = vsub.s32 %v762, %v764
    %v766 = vrot.slane %v735, %v765
    %v768 = vunpack.c.l.s4 1983009808
    %v769 = vunpack.c.0.s8 %v768
    %v770 = vlaneseq
    %v771 = vshrl.u32 %v770, 7
    %v772 = vsub.s32 %v769, %v771
    %v773 = vrot.slane %v743, %v772
    %v775 = vunpack.c.l.s4 1983009808
    %v776 = vunpack.c.0.s8 %v775
    %v777 = vlaneseq
    %v778 = vshrl.u32 %v777, 7
    %v779 = vsub.s32 %v776, %v778
    %v780 = vrot.slane %v751, %v779
    %v782 = vunpack.c.l.s4 1983009808
    %v783 = vunpack.c.0.s8 %v782
    %v784 = vlaneseq
    %v785 = vshrl.u32 %v784, 7
    %v786 = vsub.s32 %v783, %v785
    %v787 = vrot.slane %v759, %v786
    %v788 = vunpack.c.l.b16 %v766
    %v789 = vunpack.c.l.b16 %v773
    %v790 = vunpack.c.l.b16 %v780
    %v791 = vunpack.c.l.b16 %v787
    %v792 = vrot.slane %v788, 3
    %v793 = vrot.slane %v789, 2
    %v794 = vsel %vm160, %v793, %v792
    %v795 = vrot.slane %v790, 1
    %v796 = vsel %vm163, %v795, %v794
    %v797 = vsel %vm166, %v791, %v796
    %v798 = vpack.c.b16 %v797, %v797
    %v800 = vunpack.c.l.s4 1983009808
    %v801 = vunpack.c.0.s8 %v800
    %v802 = vlaneseq
    %v803 = vshrl.u32 %v802, 7
    %v804 = vsub.s32 %v801, %v803
    %v805 = vrot.slane %v798, %v804
    %806 = vrot.lane.b32.xlu0 %v805, 54
    %v807 = vpop.permute.xlu0 %806
    %vm809 = vcmask 566704
    %810 = vst.msk [vmem:[#allocation2 + $0x2] sm:$0x3] %vm809, %v807
    %v811 = vld [vmem:[#allocation4 + $0x4] sm:$0x1]
    %v812 = vld [vmem:[#allocation4 + $0xc] sm:$0x1]
    %v813 = vld [vmem:[#allocation4 + $0x14] sm:$0x1]
    %v814 = vld [vmem:[#allocation4 + $0x1c] sm:$0x1]
    %v820 = vunpack.c.l.s4 1983009808
    %v821 = vunpack.c.0.s8 %v820
    %v822 = vlaneseq
    %v823 = vshrl.u32 %v822, 7
    %v824 = vsub.s32 %v821, %v823
    %v825 = vrot.slane %v811, %v824
    %v827 = vunpack.c.l.s4 1983009808
    %v828 = vunpack.c.0.s8 %v827
    %v829 = vlaneseq
    %v830 = vshrl.u32 %v829, 7
    %v831 = vsub.s32 %v828, %v830
    %v832 = vrot.slane %v812, %v831
    %v834 = vunpack.c.l.s4 1983009808
    %v835 = vunpack.c.0.s8 %v834
    %v836 = vlaneseq
    %v837 = vshrl.u32 %v836, 7
    %v838 = vsub.s32 %v835, %v837
    %v839 = vrot.slane %v813, %v838
    %v841 = vunpack.c.l.s4 1983009808
    %v842 = vunpack.c.0.s8 %v841
    %v843 = vlaneseq
    %v844 = vshrl.u32 %v843, 7
    %v845 = vsub.s32 %v842, %v844
    %v846 = vrot.slane %v814, %v845
    %v848 = vunpack.c.l.s4 1983009808
    %v849 = vunpack.c.0.s8 %v848
    %v850 = vlaneseq
    %v851 = vshrl.u32 %v850, 7
    %v852 = vsub.s32 %v849, %v851
    %v853 = vrot.slane %v825, %v852
    %v855 = vunpack.c.l.s4 1983009808
    %v856 = vunpack.c.0.s8 %v855
    %v857 = vlaneseq
    %v858 = vshrl.u32 %v857, 7
    %v859 = vsub.s32 %v856, %v858
    %v860 = vrot.slane %v832, %v859
    %v862 = vunpack.c.l.s4 1983009808
    %v863 = vunpack.c.0.s8 %v862
    %v864 = vlaneseq
    %v865 = vshrl.u32 %v864, 7
    %v866 = vsub.s32 %v863, %v865
    %v867 = vrot.slane %v839, %v866
    %v869 = vunpack.c.l.s4 1983009808
    %v870 = vunpack.c.0.s8 %v869
    %v871 = vlaneseq
    %v872 = vshrl.u32 %v871, 7
    %v873 = vsub.s32 %v870, %v872
    %v874 = vrot.slane %v846, %v873
    %v875 = vunpack.c.l.b16 %v853
    %v876 = vunpack.c.l.b16 %v860
    %v877 = vunpack.c.l.b16 %v867
    %v878 = vunpack.c.l.b16 %v874
    %v879 = vrot.slane %v876, 7
    %v880 = vsel %vm160, %v879, %v875
    %v881 = vrot.slane %v877, 6
    %v882 = vsel %vm163, %v881, %v880
    %v883 = vrot.slane %v878, 5
    %v884 = vsel %vm166, %v883, %v882
    %v885 = vpack.c.b16 %v884, %v884
    %v887 = vunpack.c.l.s4 1983009808
    %v888 = vunpack.c.0.s8 %v887
    %v889 = vlaneseq
    %v890 = vshrl.u32 %v889, 7
    %v891 = vsub.s32 %v888, %v890
    %v892 = vrot.slane %v885, %v891
    %893 = vrot.lane.b32.xlu0 %v892, 74
    %v894 = vpop.permute.xlu0 %893
    %vm896 = vcmask 730704
    %897 = vst.msk [vmem:[#allocation2 + $0x2] sm:$0x3] %vm896, %v894
    %v898 = vld [vmem:[#allocation4 + $0x4] sm:$0x1]
    %v899 = vld [vmem:[#allocation4 + $0xc] sm:$0x1]
    %v900 = vld [vmem:[#allocation4 + $0x14] sm:$0x1]
    %v901 = vld [vmem:[#allocation4 + $0x1c] sm:$0x1]
    %v907 = vunpack.c.l.s4 1983009808
    %v908 = vunpack.c.0.s8 %v907
    %v909 = vlaneseq
    %v910 = vshrl.u32 %v909, 7
    %v911 = vsub.s32 %v908, %v910
    %v912 = vrot.slane %v898, %v911
    %v914 = vunpack.c.l.s4 1983009808
    %v915 = vunpack.c.0.s8 %v914
    %v916 = vlaneseq
    %v917 = vshrl.u32 %v916, 7
    %v918 = vsub.s32 %v915, %v917
    %v919 = vrot.slane %v899, %v918
    %v921 = vunpack.c.l.s4 1983009808
    %v922 = vunpack.c.0.s8 %v921
    %v923 = vlaneseq
    %v924 = vshrl.u32 %v923, 7
    %v925 = vsub.s32 %v922, %v924
    %v926 = vrot.slane %v900, %v925
    %v928 = vunpack.c.l.s4 1983009808
    %v929 = vunpack.c.0.s8 %v928
    %v930 = vlaneseq
    %v931 = vshrl.u32 %v930, 7
    %v932 = vsub.s32 %v929, %v931
    %v933 = vrot.slane %v901, %v932
    %v935 = vunpack.c.l.s4 1983009808
    %v936 = vunpack.c.0.s8 %v935
    %v937 = vlaneseq
    %v938 = vshrl.u32 %v937, 7
    %v939 = vsub.s32 %v936, %v938
    %v940 = vrot.slane %v912, %v939
    %v942 = vunpack.c.l.s4 1983009808
    %v943 = vunpack.c.0.s8 %v942
    %v944 = vlaneseq
    %v945 = vshrl.u32 %v944, 7
    %v946 = vsub.s32 %v943, %v945
    %v947 = vrot.slane %v919, %v946
    %v949 = vunpack.c.l.s4 1983009808
    %v950 = vunpack.c.0.s8 %v949
    %v951 = vlaneseq
    %v952 = vshrl.u32 %v951, 7
    %v953 = vsub.s32 %v950, %v952
    %v954 = vrot.slane %v926, %v953
    %v956 = vunpack.c.l.s4 1983009808
    %v957 = vunpack.c.0.s8 %v956
    %v958 = vlaneseq
    %v959 = vshrl.u32 %v958, 7
    %v960 = vsub.s32 %v957, %v959
    %v961 = vrot.slane %v933, %v960
    %v962 = vunpack.c.l.b16 %v940
    %v963 = vunpack.c.l.b16 %v947
    %v964 = vunpack.c.l.b16 %v954
    %v965 = vunpack.c.l.b16 %v961
    %v966 = vrot.slane %v962, 1
    %v967 = vsel %vm160, %v963, %v966
    %v968 = vrot.slane %v964, 7
    %v969 = vsel %vm163, %v968, %v967
    %v970 = vrot.slane %v965, 6
    %v971 = vsel %vm166, %v970, %v969
    %v972 = vpack.c.b16 %v971, %v971
    %v974 = vunpack.c.l.s4 1983009808
    %v975 = vunpack.c.0.s8 %v974
    %v976 = vlaneseq
    %v977 = vshrl.u32 %v976, 7
    %v978 = vsub.s32 %v975, %v977
    %v979 = vrot.slane %v972, %v978
    %980 = vrot.lane.b32.xlu0 %v979, 94
    %v981 = vpop.permute.xlu0 %980
    %vm983 = vcmask 894704
    %984 = vst.msk [vmem:[#allocation2 + $0x2] sm:$0x3] %vm983, %v981
    %v985 = vld [vmem:[#allocation4 + $0x4] sm:$0x2]
    %v986 = vld [vmem:[#allocation4 + $0xc] sm:$0x2]
    %v987 = vld [vmem:[#allocation4 + $0x14] sm:$0x2]
    %v988 = vld [vmem:[#allocation4 + $0x1c] sm:$0x2]
    %v994 = vunpack.c.l.s4 1983009808
    %v995 = vunpack.c.0.s8 %v994
    %v996 = vlaneseq
    %v997 = vshrl.u32 %v996, 7
    %v998 = vsub.s32 %v995, %v997
    %v999 = vrot.slane %v985, %v998
    %v1001 = vunpack.c.l.s4 1983009808
    %v1002 = vunpack.c.0.s8 %v1001
    %v1003 = vlaneseq
    %v1004 = vshrl.u32 %v1003, 7
    %v1005 = vsub.s32 %v1002, %v1004
    %v1006 = vrot.slane %v986, %v1005
    %v1008 = vunpack.c.l.s4 1983009808
    %v1009 = vunpack.c.0.s8 %v1008
    %v1010 = vlaneseq
    %v1011 = vshrl.u32 %v1010, 7
    %v1012 = vsub.s32 %v1009, %v1011
    %v1013 = vrot.slane %v987, %v1012
    %v1015 = vunpack.c.l.s4 1983009808
    %v1016 = vunpack.c.0.s8 %v1015
    %v1017 = vlaneseq
    %v1018 = vshrl.u32 %v1017, 7
    %v1019 = vsub.s32 %v1016, %v1018
    %v1020 = vrot.slane %v988, %v1019
    %v1022 = vunpack.c.l.s4 1983009808
    %v1023 = vunpack.c.0.s8 %v1022
    %v1024 = vlaneseq
    %v1025 = vshrl.u32 %v1024, 7
    %v1026 = vsub.s32 %v1023, %v1025
    %v1027 = vrot.slane %v999, %v1026
    %v1029 = vunpack.c.l.s4 1983009808
    %v1030 = vunpack.c.0.s8 %v1029
    %v1031 = vlaneseq
    %v1032 = vshrl.u32 %v1031, 7
    %v1033 = vsub.s32 %v1030, %v1032
    %v1034 = vrot.slane %v1006, %v1033
    %v1036 = vunpack.c.l.s4 1983009808
    %v1037 = vunpack.c.0.s8 %v1036
    %v1038 = vlaneseq
    %v1039 = vshrl.u32 %v1038, 7
    %v1040 = vsub.s32 %v1037, %v1039
    %v1041 = vrot.slane %v1013, %v1040
    %v1043 = vunpack.c.l.s4 1983009808
    %v1044 = vunpack.c.0.s8 %v1043
    %v1045 = vlaneseq
    %v1046 = vshrl.u32 %v1045, 7
    %v1047 = vsub.s32 %v1044, %v1046
    %v1048 = vrot.slane %v1020, %v1047
    %v1049 = vunpack.c.l.b16 %v1027
    %v1050 = vunpack.c.l.b16 %v1034
    %v1051 = vunpack.c.l.b16 %v1041
    %v1052 = vunpack.c.l.b16 %v1048
    %v1053 = vrot.slane %v1049, 2
    %v1054 = vrot.slane %v1050, 1
    %v1055 = vsel %vm160, %v1054, %v1053
    %v1056 = vsel %vm163, %v1051, %v1055
    %v1057 = vrot.slane %v1052, 7
    %v1058 = vsel %vm166, %v1057, %v1056
    %v1059 = vpack.c.b16 %v1058, %v1058
    %v1061 = vunpack.c.l.s4 1983009808
    %v1062 = vunpack.c.0.s8 %v1061
    %v1063 = vlaneseq
    %v1064 = vshrl.u32 %v1063, 7
    %v1065 = vsub.s32 %v1062, %v1064
    %v1066 = vrot.slane %v1059, %v1065
    %1067 = vrot.lane.b32.xlu0 %v1066, 114
    %v1068 = vpop.permute.xlu0 %1067
    %v1069 = vrot.slane %v1068, 6
    %vm1070 = vcmask 932864
    %v1071 = vsel %vm1070, %v1069, %v1068
    %vm1073 = vcmask 1042320
    %vm1074 = vcmask 11266
    %vm1075 = vmor %vm1074, %vm1073
    %1076 = vst.msk [vmem:[#allocation2 + $0x2] sm:$0xf] %vm1075, %v1071
    %v1077 = vld [vmem:[#allocation4 + $0x4] sm:$0x2]
    %v1078 = vld [vmem:[#allocation4 + $0xc] sm:$0x2]
    %v1079 = vld [vmem:[#allocation4 + $0x14] sm:$0x2]
    %v1080 = vld [vmem:[#allocation4 + $0x1c] sm:$0x2]
    %v1086 = vunpack.c.l.s4 1983009808
    %v1087 = vunpack.c.0.s8 %v1086
    %v1088 = vlaneseq
    %v1089 = vshrl.u32 %v1088, 7
    %v1090 = vsub.s32 %v1087, %v1089
    %v1091 = vrot.slane %v1077, %v1090
    %v1093 = vunpack.c.l.s4 1983009808
    %v1094 = vunpack.c.0.s8 %v1093
    %v1095 = vlaneseq
    %v1096 = vshrl.u32 %v1095, 7
    %v1097 = vsub.s32 %v1094, %v1096
    %v1098 = vrot.slane %v1078, %v1097
    %v1100 = vunpack.c.l.s4 1983009808
    %v1101 = vunpack.c.0.s8 %v1100
    %v1102 = vlaneseq
    %v1103 = vshrl.u32 %v1102, 7
    %v1104 = vsub.s32 %v1101, %v1103
    %v1105 = vrot.slane %v1079, %v1104
    %v1107 = vunpack.c.l.s4 1983009808
    %v1108 = vunpack.c.0.s8 %v1107
    %v1109 = vlaneseq
    %v1110 = vshrl.u32 %v1109, 7
    %v1111 = vsub.s32 %v1108, %v1110
    %v1112 = vrot.slane %v1080, %v1111
    %v1114 = vunpack.c.l.s4 1983009808
    %v1115 = vunpack.c.0.s8 %v1114
    %v1116 = vlaneseq
    %v1117 = vshrl.u32 %v1116, 7
    %v1118 = vsub.s32 %v1115, %v1117
    %v1119 = vrot.slane %v1091, %v1118
    %v1121 = vunpack.c.l.s4 1983009808
    %v1122 = vunpack.c.0.s8 %v1121
    %v1123 = vlaneseq
    %v1124 = vshrl.u32 %v1123, 7
    %v1125 = vsub.s32 %v1122, %v1124
    %v1126 = vrot.slane %v1098, %v1125
    %v1128 = vunpack.c.l.s4 1983009808
    %v1129 = vunpack.c.0.s8 %v1128
    %v1130 = vlaneseq
    %v1131 = vshrl.u32 %v1130, 7
    %v1132 = vsub.s32 %v1129, %v1131
    %v1133 = vrot.slane %v1105, %v1132
    %v1135 = vunpack.c.l.s4 1983009808
    %v1136 = vunpack.c.0.s8 %v1135
    %v1137 = vlaneseq
    %v1138 = vshrl.u32 %v1137, 7
    %v1139 = vsub.s32 %v1136, %v1138
    %v1140 = vrot.slane %v1112, %v1139
    %v1141 = vunpack.c.l.b16 %v1119
    %v1142 = vunpack.c.l.b16 %v1126
    %v1143 = vunpack.c.l.b16 %v1133
    %v1144 = vunpack.c.l.b16 %v1140
    %v1145 = vrot.slane %v1141, 3
    %v1146 = vrot.slane %v1142, 2
    %v1147 = vsel %vm160, %v1146, %v1145
    %v1148 = vrot.slane %v1143, 1
    %v1149 = vsel %vm163, %v1148, %v1147
    %v1150 = vsel %vm166, %v1144, %v1149
    %v1151 = vpack.c.b16 %v1150, %v1150
    %v1153 = vunpack.c.l.s4 1983009808
    %v1154 = vunpack.c.0.s8 %v1153
    %v1155 = vlaneseq
    %v1156 = vshrl.u32 %v1155, 7
    %v1157 = vsub.s32 %v1154, %v1156
    %v1158 = vrot.slane %v1151, %v1157
    %1159 = vrot.lane.b32.xlu0 %v1158, 6
    %v1160 = vpop.permute.xlu0 %1159
    %vm1162 = vcmask 173104
    %1163 = vst.msk [vmem:[#allocation2 + $0x4] sm:$0x3] %vm1162, %v1160
    %v1164 = vld [vmem:[#allocation4 + $0x4] sm:$0x4]
    %v1165 = vld [vmem:[#allocation4 + $0xc] sm:$0x4]
    %v1166 = vld [vmem:[#allocation4 + $0x14] sm:$0x4]
    %v1167 = vld [vmem:[#allocation4 + $0x1c] sm:$0x4]
    %v1173 = vunpack.c.l.s4 1983009808
    %v1174 = vunpack.c.0.s8 %v1173
    %v1175 = vlaneseq
    %v1176 = vshrl.u32 %v1175, 7
    %v1177 = vsub.s32 %v1174, %v1176
    %v1178 = vrot.slane %v1164, %v1177
    %v1179 = vcombine.high %v1178, %v1178
    %v1181 = vunpack.c.l.s4 1983009808
    %v1182 = vunpack.c.0.s8 %v1181
    %v1183 = vlaneseq
    %v1184 = vshrl.u32 %v1183, 7
    %v1185 = vsub.s32 %v1182, %v1184
    %v1186 = vrot.slane %v1165, %v1185
    %v1187 = vcombine.high %v1186, %v1186
    %v1189 = vunpack.c.l.s4 1983009808
    %v1190 = vunpack.c.0.s8 %v1189
    %v1191 = vlaneseq
    %v1192 = vshrl.u32 %v1191, 7
    %v1193 = vsub.s32 %v1190, %v1192
    %v1194 = vrot.slane %v1166, %v1193
    %v1195 = vcombine.high %v1194, %v1194
    %v1197 = vunpack.c.l.s4 1983009808
    %v1198 = vunpack.c.0.s8 %v1197
    %v1199 = vlaneseq
    %v1200 = vshrl.u32 %v1199, 7
    %v1201 = vsub.s32 %v1198, %v1200
    %v1202 = vrot.slane %v1167, %v1201
    %v1203 = vcombine.high %v1202, %v1202
    %v1205 = vunpack.c.l.s4 1983009808
    %v1206 = vunpack.c.0.s8 %v1205
    %v1207 = vlaneseq
    %v1208 = vshrl.u32 %v1207, 7
    %v1209 = vsub.s32 %v1206, %v1208
    %v1210 = vrot.slane %v1179, %v1209
    %v1212 = vunpack.c.l.s4 1983009808
    %v1213 = vunpack.c.0.s8 %v1212
    %v1214 = vlaneseq
    %v1215 = vshrl.u32 %v1214, 7
    %v1216 = vsub.s32 %v1213, %v1215
    %v1217 = vrot.slane %v1187, %v1216
    %v1219 = vunpack.c.l.s4 1983009808
    %v1220 = vunpack.c.0.s8 %v1219
    %v1221 = vlaneseq
    %v1222 = vshrl.u32 %v1221, 7
    %v1223 = vsub.s32 %v1220, %v1222
    %v1224 = vrot.slane %v1195, %v1223
    %v1226 = vunpack.c.l.s4 1983009808
    %v1227 = vunpack.c.0.s8 %v1226
    %v1228 = vlaneseq
    %v1229 = vshrl.u32 %v1228, 7
    %v1230 = vsub.s32 %v1227, %v1229
    %v1231 = vrot.slane %v1203, %v1230
    %v1232 = vunpack.c.l.b16 %v1210
    %v1233 = vunpack.c.l.b16 %v1217
    %v1234 = vunpack.c.l.b16 %v1224
    %v1235 = vunpack.c.l.b16 %v1231
    %v1236 = vrot.slane %v1233, 7
    %v1237 = vsel %vm160, %v1236, %v1232
    %v1238 = vrot.slane %v1234, 6
    %v1239 = vsel %vm163, %v1238, %v1237
    %v1240 = vrot.slane %v1235, 5
    %v1241 = vsel %vm166, %v1240, %v1239
    %v1242 = vpack.c.b16 %v1241, %v1241
    %v1244 = vunpack.c.l.s4 1983009808
    %v1245 = vunpack.c.0.s8 %v1244
    %v1246 = vlaneseq
    %v1247 = vshrl.u32 %v1246, 7
    %v1248 = vsub.s32 %v1245, %v1247
    %v1249 = vrot.slane %v1242, %v1248
    %1250 = vrot.lane.b32.xlu0 %v1249, 26
    %v1251 = vpop.permute.xlu0 %1250
    %vm1253 = vcmask 337104
    %1254 = vst.msk [vmem:[#allocation2 + $0x4] sm:$0x3] %vm1253, %v1251
    %v1255 = vld [vmem:[#allocation4 + $0x4] sm:$0x4]
    %v1256 = vld [vmem:[#allocation4 + $0xc] sm:$0x4]
    %v1257 = vld [vmem:[#allocation4 + $0x14] sm:$0x4]
    %v1258 = vld [vmem:[#allocation4 + $0x1c] sm:$0x4]
    %v1264 = vunpack.c.l.s4 1983009808
    %v1265 = vunpack.c.0.s8 %v1264
    %v1266 = vlaneseq
    %v1267 = vshrl.u32 %v1266, 7
    %v1268 = vsub.s32 %v1265, %v1267
    %v1269 = vrot.slane %v1255, %v1268
    %v1270 = vcombine.high %v1269, %v1269
    %v1272 = vunpack.c.l.s4 1983009808
    %v1273 = vunpack.c.0.s8 %v1272
    %v1274 = vlaneseq
    %v1275 = vshrl.u32 %v1274, 7
    %v1276 = vsub.s32 %v1273, %v1275
    %v1277 = vrot.slane %v1256, %v1276
    %v1278 = vcombine.high %v1277, %v1277
    %v1280 = vunpack.c.l.s4 1983009808
    %v1281 = vunpack.c.0.s8 %v1280
    %v1282 = vlaneseq
    %v1283 = vshrl.u32 %v1282, 7
    %v1284 = vsub.s32 %v1281, %v1283
    %v1285 = vrot.slane %v1257, %v1284
    %v1286 = vcombine.high %v1285, %v1285
    %v1288 = vunpack.c.l.s4 1983009808
    %v1289 = vunpack.c.0.s8 %v1288
    %v1290 = vlaneseq
    %v1291 = vshrl.u32 %v1290, 7
    %v1292 = vsub.s32 %v1289, %v1291
    %v1293 = vrot.slane %v1258, %v1292
    %v1294 = vcombine.high %v1293, %v1293
    %v1296 = vunpack.c.l.s4 1983009808
    %v1297 = vunpack.c.0.s8 %v1296
    %v1298 = vlaneseq
    %v1299 = vshrl.u32 %v1298, 7
    %v1300 = vsub.s32 %v1297, %v1299
    %v1301 = vrot.slane %v1270, %v1300
    %v1303 = vunpack.c.l.s4 1983009808
    %v1304 = vunpack.c.0.s8 %v1303
    %v1305 = vlaneseq
    %v1306 = vshrl.u32 %v1305, 7
    %v1307 = vsub.s32 %v1304, %v1306
    %v1308 = vrot.slane %v1278, %v1307
    %v1310 = vunpack.c.l.s4 1983009808
    %v1311 = vunpack.c.0.s8 %v1310
    %v1312 = vlaneseq
    %v1313 = vshrl.u32 %v1312, 7
    %v1314 = vsub.s32 %v1311, %v1313
    %v1315 = vrot.slane %v1286, %v1314
    %v1317 = vunpack.c.l.s4 1983009808
    %v1318 = vunpack.c.0.s8 %v1317
    %v1319 = vlaneseq
    %v1320 = vshrl.u32 %v1319, 7
    %v1321 = vsub.s32 %v1318, %v1320
    %v1322 = vrot.slane %v1294, %v1321
    %v1323 = vunpack.c.l.b16 %v1301
    %v1324 = vunpack.c.l.b16 %v1308
    %v1325 = vunpack.c.l.b16 %v1315
    %v1326 = vunpack.c.l.b16 %v1322
    %v1327 = vrot.slane %v1323, 1
    %v1328 = vsel %vm160, %v1324, %v1327
    %v1329 = vrot.slane %v1325, 7
    %v1330 = vsel %vm163, %v1329, %v1328
    %v1331 = vrot.slane %v1326, 6
    %v1332 = vsel %vm166, %v1331, %v1330
    %v1333 = vpack.c.b16 %v1332, %v1332
    %v1335 = vunpack.c.l.s4 1983009808
    %v1336 = vunpack.c.0.s8 %v1335
    %v1337 = vlaneseq
    %v1338 = vshrl.u32 %v1337, 7
    %v1339 = vsub.s32 %v1336, %v1338
    %v1340 = vrot.slane %v1333, %v1339
    %1341 = vrot.lane.b32.xlu0 %v1340, 46
    %v1342 = vpop.permute.xlu0 %1341
    %vm1344 = vcmask 501104
    %1345 = vst.msk [vmem:[#allocation2 + $0x4] sm:$0x3] %vm1344, %v1342
    %v1346 = vld [vmem:[#allocation4 + $0x4] sm:$0x8]
    %v1347 = vld [vmem:[#allocation4 + $0xc] sm:$0x8]
    %v1348 = vld [vmem:[#allocation4 + $0x14] sm:$0x8]
    %v1349 = vld [vmem:[#allocation4 + $0x1c] sm:$0x8]
    %v1355 = vunpack.c.l.s4 1983009808
    %v1356 = vunpack.c.0.s8 %v1355
    %v1357 = vlaneseq
    %v1358 = vshrl.u32 %v1357, 7
    %v1359 = vsub.s32 %v1356, %v1358
    %v1360 = vrot.slane %v1346, %v1359
    %v1361 = vcombine.high %v1360, %v1360
    %v1363 = vunpack.c.l.s4 1983009808
    %v1364 = vunpack.c.0.s8 %v1363
    %v1365 = vlaneseq
    %v1366 = vshrl.u32 %v1365, 7
    %v1367 = vsub.s32 %v1364, %v1366
    %v1368 = vrot.slane %v1347, %v1367
    %v1369 = vcombine.high %v1368, %v1368
    %v1371 = vunpack.c.l.s4 1983009808
    %v1372 = vunpack.c.0.s8 %v1371
    %v1373 = vlaneseq
    %v1374 = vshrl.u32 %v1373, 7
    %v1375 = vsub.s32 %v1372, %v1374
    %v1376 = vrot.slane %v1348, %v1375
    %v1377 = vcombine.high %v1376, %v1376
    %v1379 = vunpack.c.l.s4 1983009808
    %v1380 = vunpack.c.0.s8 %v1379
    %v1381 = vlaneseq
    %v1382 = vshrl.u32 %v1381, 7
    %v1383 = vsub.s32 %v1380, %v1382
    %v1384 = vrot.slane %v1349, %v1383
    %v1385 = vcombine.high %v1384, %v1384
    %v1387 = vunpack.c.l.s4 1983009808
    %v1388 = vunpack.c.0.s8 %v1387
    %v1389 = vlaneseq
    %v1390 = vshrl.u32 %v1389, 7
    %v1391 = vsub.s32 %v1388, %v1390
    %v1392 = vrot.slane %v1361, %v1391
    %v1394 = vunpack.c.l.s4 1983009808
    %v1395 = vunpack.c.0.s8 %v1394
    %v1396 = vlaneseq
    %v1397 = vshrl.u32 %v1396, 7
    %v1398 = vsub.s32 %v1395, %v1397
    %v1399 = vrot.slane %v1369, %v1398
    %v1401 = vunpack.c.l.s4 1983009808
    %v1402 = vunpack.c.0.s8 %v1401
    %v1403 = vlaneseq
    %v1404 = vshrl.u32 %v1403, 7
    %v1405 = vsub.s32 %v1402, %v1404
    %v1406 = vrot.slane %v1377, %v1405
    %v1408 = vunpack.c.l.s4 1983009808
    %v1409 = vunpack.c.0.s8 %v1408
    %v1410 = vlaneseq
    %v1411 = vshrl.u32 %v1410, 7
    %v1412 = vsub.s32 %v1409, %v1411
    %v1413 = vrot.slane %v1385, %v1412
    %v1414 = vunpack.c.l.b16 %v1392
    %v1415 = vunpack.c.l.b16 %v1399
    %v1416 = vunpack.c.l.b16 %v1406
    %v1417 = vunpack.c.l.b16 %v1413
    %v1418 = vrot.slane %v1414, 2
    %v1419 = vrot.slane %v1415, 1
    %v1420 = vsel %vm160, %v1419, %v1418
    %v1421 = vsel %vm163, %v1416, %v1420
    %v1422 = vrot.slane %v1417, 7
    %v1423 = vsel %vm166, %v1422, %v1421
    %v1424 = vpack.c.b16 %v1423, %v1423
    %v1426 = vunpack.c.l.s4 1983009808
    %v1427 = vunpack.c.0.s8 %v1426
    %v1428 = vlaneseq
    %v1429 = vshrl.u32 %v1428, 7
    %v1430 = vsub.s32 %v1427, %v1429
    %v1431 = vrot.slane %v1424, %v1430
    %1432 = vrot.lane.b32.xlu0 %v1431, 66
    %v1433 = vpop.permute.xlu0 %1432
    %vm1435 = vcmask 665104
    %1436 = vst.msk [vmem:[#allocation2 + $0x4] sm:$0x3] %vm1435, %v1433
    %v1437 = vld [vmem:[#allocation4 + $0x4] sm:$0x8]
    %v1438 = vld [vmem:[#allocation4 + $0xc] sm:$0x8]
    %v1439 = vld [vmem:[#allocation4 + $0x14] sm:$0x8]
    %v1440 = vld [vmem:[#allocation4 + $0x1c] sm:$0x8]
    %v1446 = vunpack.c.l.s4 1983009808
    %v1447 = vunpack.c.0.s8 %v1446
    %v1448 = vlaneseq
    %v1449 = vshrl.u32 %v1448, 7
    %v1450 = vsub.s32 %v1447, %v1449
    %v1451 = vrot.slane %v1437, %v1450
    %v1452 = vcombine.high %v1451, %v1451
    %v1454 = vunpack.c.l.s4 1983009808
    %v1455 = vunpack.c.0.s8 %v1454
    %v1456 = vlaneseq
    %v1457 = vshrl.u32 %v1456, 7
    %v1458 = vsub.s32 %v1455, %v1457
    %v1459 = vrot.slane %v1438, %v1458
    %v1460 = vcombine.high %v1459, %v1459
    %v1462 = vunpack.c.l.s4 1983009808
    %v1463 = vunpack.c.0.s8 %v1462
    %v1464 = vlaneseq
    %v1465 = vshrl.u32 %v1464, 7
    %v1466 = vsub.s32 %v1463, %v1465
    %v1467 = vrot.slane %v1439, %v1466
    %v1468 = vcombine.high %v1467, %v1467
    %v1470 = vunpack.c.l.s4 1983009808
    %v1471 = vunpack.c.0.s8 %v1470
    %v1472 = vlaneseq
    %v1473 = vshrl.u32 %v1472, 7
    %v1474 = vsub.s32 %v1471, %v1473
    %v1475 = vrot.slane %v1440, %v1474
    %v1476 = vcombine.high %v1475, %v1475
    %v1478 = vunpack.c.l.s4 1983009808
    %v1479 = vunpack.c.0.s8 %v1478
    %v1480 = vlaneseq
    %v1481 = vshrl.u32 %v1480, 7
    %v1482 = vsub.s32 %v1479, %v1481
    %v1483 = vrot.slane %v1452, %v1482
    %v1485 = vunpack.c.l.s4 1983009808
    %v1486 = vunpack.c.0.s8 %v1485
    %v1487 = vlaneseq
    %v1488 = vshrl.u32 %v1487, 7
    %v1489 = vsub.s32 %v1486, %v1488
    %v1490 = vrot.slane %v1460, %v1489
    %v1492 = vunpack.c.l.s4 1983009808
    %v1493 = vunpack.c.0.s8 %v1492
    %v1494 = vlaneseq
    %v1495 = vshrl.u32 %v1494, 7
    %v1496 = vsub.s32 %v1493, %v1495
    %v1497 = vrot.slane %v1468, %v1496
    %v1499 = vunpack.c.l.s4 1983009808
    %v1500 = vunpack.c.0.s8 %v1499
    %v1501 = vlaneseq
    %v1502 = vshrl.u32 %v1501, 7
    %v1503 = vsub.s32 %v1500, %v1502
    %v1504 = vrot.slane %v1476, %v1503
    %v1505 = vunpack.c.l.b16 %v1483
    %v1506 = vunpack.c.l.b16 %v1490
    %v1507 = vunpack.c.l.b16 %v1497
    %v1508 = vunpack.c.l.b16 %v1504
    %v1509 = vrot.slane %v1505, 3
    %v1510 = vrot.slane %v1506, 2
    %v1511 = vsel %vm160, %v1510, %v1509
    %v1512 = vrot.slane %v1507, 1
    %v1513 = vsel %vm163, %v1512, %v1511
    %v1514 = vsel %vm166, %v1508, %v1513
    %v1515 = vpack.c.b16 %v1514, %v1514
    %v1517 = vunpack.c.l.s4 1983009808
    %v1518 = vunpack.c.0.s8 %v1517
    %v1519 = vlaneseq
    %v1520 = vshrl.u32 %v1519, 7
    %v1521 = vsub.s32 %v1518, %v1520
    %v1522 = vrot.slane %v1515, %v1521
    %1523 = vrot.lane.b32.xlu0 %v1522, 86
    %v1524 = vpop.permute.xlu0 %1523
    %vm1526 = vcmask 829104
    %1527 = vst.msk [vmem:[#allocation2 + $0x4] sm:$0x3] %vm1526, %v1524
    %v1528 = vld [vmem:[#allocation2] sm:$0x3f]
    %v1530 = vcombine.high %v1528, %v1528
    %v1532 = vunpack.c.l.s4 1983009808
    %v1533 = vunpack.c.0.s8 %v1532
    %v1534 = vlaneseq
    %v1535 = vshrl.u32 %v1534, 7
    %v1536 = vsub.s32 %v1533, %v1535
    %v1537 = vrot.slane %v1528, %v1536
    %v1539 = vunpack.c.l.s4 1983009808
    %v1540 = vunpack.c.0.s8 %v1539
    %v1541 = vlaneseq
    %v1542 = vshrl.u32 %v1541, 7
    %v1543 = vsub.s32 %v1540, %v1542
    %v1544 = vrot.slane %v1530, %v1543
    %1547 = vst [vmem:[#allocation3] sm:$0x33] %v1537
    %vm1548 = vcmask 517120
    %1549 = vst.msk [vmem:[#allocation3 + $0x8] sm:$0x3] %vm1548, %v1544
    %v1550 = vld [vmem:[#allocation2] sm:$0x3f]
    %v1552 = vcombine.low %v1550, %v1550
    %v1554 = vunpack.c.l.s4 1983009808
    %v1555 = vunpack.c.0.s8 %v1554
    %v1556 = vlaneseq
    %v1557 = vshrl.u32 %v1556, 7
    %v1558 = vsub.s32 %v1555, %v1557
    %v1559 = vrot.slane %v1552, %v1558
    %v1561 = vunpack.c.l.s4 1983009808
    %v1562 = vunpack.c.0.s8 %v1561
    %v1563 = vlaneseq
    %v1564 = vshrl.u32 %v1563, 7
    %v1565 = vsub.s32 %v1562, %v1564
    %v1566 = vrot.slane %v1550, %v1565
    %1567 = vrot.lane.b32.xlu0 %v1559, 127
    %v1568 = vpop.permute.xlu0 %1567
    %1569 = vrot.lane.b32.xlu0 %v1566, 127
    %v1570 = vpop.permute.xlu0 %1569
    %v1571 = vrot.slane %v1568, 4
    %v1572 = vrot.slane %v1570, 4
    %vm1573 = vcmask 1043456
    %v1574 = vsel %vm1573, %v1571, %v1572
    %vm1575 = vcmask 1039360
    %v1576 = vsel %vm1575, %v1568, %v1574
    %1579 = vst [vmem:[#allocation3] sm:$0xcc] %v1576
    %vm1580 = vcmask 519170
    %1581 = vst.msk [vmem:[#allocation3 + $0x8] sm:$0xc] %vm1580, %v1570
    %v1582 = vld [vmem:[#allocation2] sm:$0x3f]
    %v1584 = vcombine.high %v1582, %v1582
    %v1586 = vunpack.c.l.s4 1983009808
    %v1587 = vunpack.c.0.s8 %v1586
    %v1588 = vlaneseq
    %v1589 = vshrl.u32 %v1588, 7
    %v1590 = vsub.s32 %v1587, %v1589
    %v1591 = vrot.slane %v1582, %v1590
    %v1593 = vunpack.c.l.s4 1983009808
    %v1594 = vunpack.c.0.s8 %v1593
    %v1595 = vlaneseq
    %v1596 = vshrl.u32 %v1595, 7
    %v1597 = vsub.s32 %v1594, %v1596
    %v1598 = vrot.slane %v1584, %v1597
    %1599 = vrot.lane.b32.xlu0 %v1591, 126
    %v1600 = vpop.permute.xlu0 %1599
    %1601 = vrot.lane.b32.xlu0 %v1598, 126
    %v1602 = vpop.permute.xlu0 %1601
    %v1603 = vrot.slane %v1600, 4
    %v1604 = vrot.slane %v1602, 4
    %v1605 = vsel %vm1573, %v1603, %v1604
    %vm1606 = vcmask 1031168
    %v1607 = vsel %vm1606, %v1600, %v1605
    %1610 = vst [vmem:[#allocation3 + $0x18] sm:$0x33] %v1607
    %1611 = vst.msk [vmem:[#allocation3 + $0x20] sm:$0x3] %vm1548, %v1602
    %v1612 = vld [vmem:[#allocation2] sm:$0x3f]
    %v1614 = vcombine.low %v1612, %v1612
    %v1616 = vunpack.c.l.s4 1983009808
    %v1617 = vunpack.c.0.s8 %v1616
    %v1618 = vlaneseq
    %v1619 = vshrl.u32 %v1618, 7
    %v1620 = vsub.s32 %v1617, %v1619
    %v1621 = vrot.slane %v1614, %v1620
    %v1623 = vunpack.c.l.s4 1983009808
    %v1624 = vunpack.c.0.s8 %v1623
    %v1625 = vlaneseq
    %v1626 = vshrl.u32 %v1625, 7
    %v1627 = vsub.s32 %v1624, %v1626
    %v1628 = vrot.slane %v1612, %v1627
    %1629 = vrot.lane.b32.xlu0 %v1621, 125
    %v1630 = vpop.permute.xlu0 %1629
    %1631 = vrot.lane.b32.xlu0 %v1628, 125
    %v1632 = vpop.permute.xlu0 %1631
    %v1633 = vrot.slane %v1630, 4
    %v1634 = vrot.slane %v1632, 4
    %v1635 = vsel %vm1573, %v1633, %v1634
    %vm1636 = vcmask 1022976
    %v1637 = vsel %vm1636, %v1630, %v1635
    %1640 = vst [vmem:[#allocation3 + $0x18] sm:$0xcc] %v1637
    %1641 = vst.msk [vmem:[#allocation3 + $0x20] sm:$0xc] %vm1580, %v1632
    %v1642 = vld [vmem:[#allocation2] sm:$0x3f]
    %v1644 = vcombine.high %v1642, %v1642
    %v1646 = vunpack.c.l.s4 1983009808
    %v1647 = vunpack.c.0.s8 %v1646
    %v1648 = vlaneseq
    %v1649 = vshrl.u32 %v1648, 7
    %v1650 = vsub.s32 %v1647, %v1649
    %v1651 = vrot.slane %v1642, %v1650
    %v1653 = vunpack.c.l.s4 1983009808
    %v1654 = vunpack.c.0.s8 %v1653
    %v1655 = vlaneseq
    %v1656 = vshrl.u32 %v1655, 7
    %v1657 = vsub.s32 %v1654, %v1656
    %v1658 = vrot.slane %v1644, %v1657
    %1659 = vrot.lane.b32.xlu0 %v1651, 124
    %v1660 = vpop.permute.xlu0 %1659
    %1661 = vrot.lane.b32.xlu0 %v1658, 124
    %v1662 = vpop.permute.xlu0 %1661
    %v1663 = vrot.slane %v1660, 4
    %v1664 = vrot.slane %v1662, 4
    %v1665 = vsel %vm1573, %v1663, %v1664
    %vm1666 = vcmask 1014784
    %v1667 = vsel %vm1666, %v1660, %v1665
    %1670 = vst [vmem:[#allocation3 + $0x30] sm:$0x33] %v1667
    %1671 = vst.msk [vmem:[#allocation3 + $0x38] sm:$0x3] %vm1548, %v1662
    %v1672 = vld [vmem:[#allocation2] sm:$0x3f]
    %v1674 = vcombine.low %v1672, %v1672
    %v1676 = vunpack.c.l.s4 1983009808
    %v1677 = vunpack.c.0.s8 %v1676
    %v1678 = vlaneseq
    %v1679 = vshrl.u32 %v1678, 7
    %v1680 = vsub.s32 %v1677, %v1679
    %v1681 = vrot.slane %v1674, %v1680
    %v1683 = vunpack.c.l.s4 1983009808
    %v1684 = vunpack.c.0.s8 %v1683
    %v1685 = vlaneseq
    %v1686 = vshrl.u32 %v1685, 7
    %v1687 = vsub.s32 %v1684, %v1686
    %v1688 = vrot.slane %v1672, %v1687
    %1689 = vrot.lane.b32.xlu0 %v1681, 108
    %v1690 = vpop.permute.xlu0 %1689
    %1691 = vrot.lane.b32.xlu0 %v1688, 108
    %v1692 = vpop.permute.xlu0 %1691
    %v1693 = vrot.slane %v1690, 4
    %v1694 = vrot.slane %v1692, 4
    %v1695 = vsel %vm1573, %v1693, %v1694
    %vm1696 = vcmask 883712
    %v1697 = vsel %vm1696, %v1690, %v1695
    %1700 = vst [vmem:[#allocation3 + $0x30] sm:$0xcc] %v1697
    %1701 = vst.msk [vmem:[#allocation3 + $0x38] sm:$0xc] %vm1580, %v1692
    %v1702 = vld [vmem:[#allocation2] sm:$0x3f]
    %v1704 = vcombine.high %v1702, %v1702
    %v1706 = vunpack.c.l.s4 1983009808
    %v1707 = vunpack.c.0.s8 %v1706
    %v1708 = vlaneseq
    %v1709 = vshrl.u32 %v1708, 7
    %v1710 = vsub.s32 %v1707, %v1709
    %v1711 = vrot.slane %v1702, %v1710
    %v1713 = vunpack.c.l.s4 1983009808
    %v1714 = vunpack.c.0.s8 %v1713
    %v1715 = vlaneseq
    %v1716 = vshrl.u32 %v1715, 7
    %v1717 = vsub.s32 %v1714, %v1716
    %v1718 = vrot.slane %v1704, %v1717
    %1719 = vrot.lane.b32.xlu0 %v1711, 107
    %v1720 = vpop.permute.xlu0 %1719
    %1721 = vrot.lane.b32.xlu0 %v1718, 107
    %v1722 = vpop.permute.xlu0 %1721
    %v1723 = vrot.slane %v1720, 4
    %v1724 = vrot.slane %v1722, 4
    %v1725 = vsel %vm1573, %v1723, %v1724
    %vm1726 = vcmask 875520
    %v1727 = vsel %vm1726, %v1720, %v1725
    %1730 = vst [vmem:[#allocation3 + $0x48] sm:$0x33] %v1727
    %1731 = vst.msk [vmem:[#allocation3 + $0x50] sm:$0x3] %vm1548, %v1722
    %v1732 = vld [vmem:[#allocation2] sm:$0x3f]
    %v1734 = vcombine.low %v1732, %v1732
    %v1736 = vunpack.c.l.s4 1983009808
    %v1737 = vunpack.c.0.s8 %v1736
    %v1738 = vlaneseq
    %v1739 = vshrl.u32 %v1738, 7
    %v1740 = vsub.s32 %v1737, %v1739
    %v1741 = vrot.slane %v1734, %v1740
    %v1743 = vunpack.c.l.s4 1983009808
    %v1744 = vunpack.c.0.s8 %v1743
    %v1745 = vlaneseq
    %v1746 = vshrl.u32 %v1745, 7
    %v1747 = vsub.s32 %v1744, %v1746
    %v1748 = vrot.slane %v1732, %v1747
    %1749 = vrot.lane.b32.xlu0 %v1741, 106
    %v1750 = vpop.permute.xlu0 %1749
    %1751 = vrot.lane.b32.xlu0 %v1748, 106
    %v1752 = vpop.permute.xlu0 %1751
    %v1753 = vrot.slane %v1750, 4
    %v1754 = vrot.slane %v1752, 4
    %v1755 = vsel %vm1573, %v1753, %v1754
    %vm1756 = vcmask 867328
    %v1757 = vsel %vm1756, %v1750, %v1755
    %1760 = vst [vmem:[#allocation3 + $0x48] sm:$0xcc] %v1757
    %1761 = vst.msk [vmem:[#allocation3 + $0x50] sm:$0xc] %vm1580, %v1752
    %v1762 = vld [vmem:[#allocation2] sm:$0x3f]
    %v1764 = vcombine.high %v1762, %v1762
    %v1766 = vunpack.c.l.s4 1983009808
    %v1767 = vunpack.c.0.s8 %v1766
    %v1768 = vlaneseq
    %v1769 = vshrl.u32 %v1768, 7
    %v1770 = vsub.s32 %v1767, %v1769
    %v1771 = vrot.slane %v1762, %v1770
    %v1773 = vunpack.c.l.s4 1983009808
    %v1774 = vunpack.c.0.s8 %v1773
    %v1775 = vlaneseq
    %v1776 = vshrl.u32 %v1775, 7
    %v1777 = vsub.s32 %v1774, %v1776
    %v1778 = vrot.slane %v1764, %v1777
    %1779 = vrot.lane.b32.xlu0 %v1771, 105
    %v1780 = vpop.permute.xlu0 %1779
    %1781 = vrot.lane.b32.xlu0 %v1778, 105
    %v1782 = vpop.permute.xlu0 %1781
    %v1783 = vrot.slane %v1780, 4
    %v1784 = vrot.slane %v1782, 4
    %v1785 = vsel %vm1573, %v1783, %v1784
    %vm1786 = vcmask 859136
    %v1787 = vsel %vm1786, %v1780, %v1785
    %1790 = vst [vmem:[#allocation3 + $0x60] sm:$0x33] %v1787
    %1791 = vst.msk [vmem:[#allocation3 + $0x68] sm:$0x3] %vm1548, %v1782
    %v1792 = vld [vmem:[#allocation2] sm:$0x3f]
    %v1794 = vcombine.low %v1792, %v1792
    %v1796 = vunpack.c.l.s4 1983009808
    %v1797 = vunpack.c.0.s8 %v1796
    %v1798 = vlaneseq
    %v1799 = vshrl.u32 %v1798, 7
    %v1800 = vsub.s32 %v1797, %v1799
    %v1801 = vrot.slane %v1794, %v1800
    %v1803 = vunpack.c.l.s4 1983009808
    %v1804 = vunpack.c.0.s8 %v1803
    %v1805 = vlaneseq
    %v1806 = vshrl.u32 %v1805, 7
    %v1807 = vsub.s32 %v1804, %v1806
    %v1808 = vrot.slane %v1792, %v1807
    %1809 = vrot.lane.b32.xlu0 %v1801, 104
    %v1810 = vpop.permute.xlu0 %1809
    %1811 = vrot.lane.b32.xlu0 %v1808, 104
    %v1812 = vpop.permute.xlu0 %1811
    %v1813 = vrot.slane %v1810, 4
    %v1814 = vrot.slane %v1812, 4
    %v1815 = vsel %vm1573, %v1813, %v1814
    %vm1816 = vcmask 850944
    %v1817 = vsel %vm1816, %v1810, %v1815
    %1820 = vst [vmem:[#allocation3 + $0x60] sm:$0xcc] %v1817
    %1821 = vst.msk [vmem:[#allocation3 + $0x68] sm:$0xc] %vm1580, %v1812
    %v1822 = vld [vmem:[#allocation2] sm:$0x3f]
    %v1824 = vcombine.high %v1822, %v1822
    %v1826 = vunpack.c.l.s4 1983009808
    %v1827 = vunpack.c.0.s8 %v1826
    %v1828 = vlaneseq
    %v1829 = vshrl.u32 %v1828, 7
    %v1830 = vsub.s32 %v1827, %v1829
    %v1831 = vrot.slane %v1822, %v1830
    %v1833 = vunpack.c.l.s4 1983009808
    %v1834 = vunpack.c.0.s8 %v1833
    %v1835 = vlaneseq
    %v1836 = vshrl.u32 %v1835, 7
    %v1837 = vsub.s32 %v1834, %v1836
    %v1838 = vrot.slane %v1824, %v1837
    %1839 = vrot.lane.b32.xlu0 %v1831, 88
    %v1840 = vpop.permute.xlu0 %1839
    %1841 = vrot.lane.b32.xlu0 %v1838, 88
    %v1842 = vpop.permute.xlu0 %1841
    %v1843 = vrot.slane %v1840, 4
    %v1844 = vrot.slane %v1842, 4
    %v1845 = vsel %vm1573, %v1843, %v1844
    %vm1846 = vcmask 719872
    %v1847 = vsel %vm1846, %v1840, %v1845
    %1850 = vst [vmem:[#allocation3 + $0x78] sm:$0x33] %v1847
    %1851 = vst.msk [vmem:[#allocation3 + $0x80] sm:$0x3] %vm1548, %v1842
    %v1852 = vld [vmem:[#allocation2] sm:$0x3f]
    %v1854 = vcombine.low %v1852, %v1852
    %v1856 = vunpack.c.l.s4 1983009808
    %v1857 = vunpack.c.0.s8 %v1856
    %v1858 = vlaneseq
    %v1859 = vshrl.u32 %v1858, 7
    %v1860 = vsub.s32 %v1857, %v1859
    %v1861 = vrot.slane %v1854, %v1860
    %v1863 = vunpack.c.l.s4 1983009808
    %v1864 = vunpack.c.0.s8 %v1863
    %v1865 = vlaneseq
    %v1866 = vshrl.u32 %v1865, 7
    %v1867 = vsub.s32 %v1864, %v1866
    %v1868 = vrot.slane %v1852, %v1867
    %1869 = vrot.lane.b32.xlu0 %v1861, 87
    %v1870 = vpop.permute.xlu0 %1869
    %1871 = vrot.lane.b32.xlu0 %v1868, 87
    %v1872 = vpop.permute.xlu0 %1871
    %v1873 = vrot.slane %v1870, 4
    %v1874 = vrot.slane %v1872, 4
    %v1875 = vsel %vm1573, %v1873, %v1874
    %vm1876 = vcmask 711680
    %v1877 = vsel %vm1876, %v1870, %v1875
    %1880 = vst [vmem:[#allocation3 + $0x78] sm:$0xcc] %v1877
    %1881 = vst.msk [vmem:[#allocation3 + $0x80] sm:$0xc] %vm1580, %v1872
    %v1882 = vld [vmem:[#allocation2] sm:$0x3f]
    %v1884 = vcombine.high %v1882, %v1882
    %v1886 = vunpack.c.l.s4 1983009808
    %v1887 = vunpack.c.0.s8 %v1886
    %v1888 = vlaneseq
    %v1889 = vshrl.u32 %v1888, 7
    %v1890 = vsub.s32 %v1887, %v1889
    %v1891 = vrot.slane %v1882, %v1890
    %v1893 = vunpack.c.l.s4 1983009808
    %v1894 = vunpack.c.0.s8 %v1893
    %v1895 = vlaneseq
    %v1896 = vshrl.u32 %v1895, 7
    %v1897 = vsub.s32 %v1894, %v1896
    %v1898 = vrot.slane %v1884, %v1897
    %1899 = vrot.lane.b32.xlu0 %v1891, 86
    %v1900 = vpop.permute.xlu0 %1899
    %1901 = vrot.lane.b32.xlu0 %v1898, 86
    %v1902 = vpop.permute.xlu0 %1901
    %v1903 = vrot.slane %v1900, 4
    %v1904 = vrot.slane %v1902, 4
    %v1905 = vsel %vm1573, %v1903, %v1904
    %vm1906 = vcmask 703488
    %v1907 = vsel %vm1906, %v1900, %v1905
    %1910 = vst [vmem:[#allocation3 + $0x90] sm:$0x33] %v1907
    %1911 = vst.msk [vmem:[#allocation3 + $0x98] sm:$0x3] %vm1548, %v1902
    %v1912 = vld [vmem:[#allocation2] sm:$0x3f]
    %v1914 = vcombine.low %v1912, %v1912
    %v1916 = vunpack.c.l.s4 1983009808
    %v1917 = vunpack.c.0.s8 %v1916
    %v1918 = vlaneseq
    %v1919 = vshrl.u32 %v1918, 7
    %v1920 = vsub.s32 %v1917, %v1919
    %v1921 = vrot.slane %v1914, %v1920
    %v1923 = vunpack.c.l.s4 1983009808
    %v1924 = vunpack.c.0.s8 %v1923
    %v1925 = vlaneseq
    %v1926 = vshrl.u32 %v1925, 7
    %v1927 = vsub.s32 %v1924, %v1926
    %v1928 = vrot.slane %v1912, %v1927
    %1929 = vrot.lane.b32.xlu0 %v1921, 85
    %v1930 = vpop.permute.xlu0 %1929
    %1931 = vrot.lane.b32.xlu0 %v1928, 85
    %v1932 = vpop.permute.xlu0 %1931
    %v1933 = vrot.slane %v1930, 4
    %v1934 = vrot.slane %v1932, 4
    %v1935 = vsel %vm1573, %v1933, %v1934
    %vm1936 = vcmask 695296
    %v1937 = vsel %vm1936, %v1930, %v1935
    %1940 = vst [vmem:[#allocation3 + $0x90] sm:$0xcc] %v1937
    %1941 = vst.msk [vmem:[#allocation3 + $0x98] sm:$0xc] %vm1580, %v1932
    %v1942 = vld [vmem:[#allocation2] sm:$0x3f]
    %v1944 = vcombine.high %v1942, %v1942
    %v1946 = vunpack.c.l.s4 1983009808
    %v1947 = vunpack.c.0.s8 %v1946
    %v1948 = vlaneseq
    %v1949 = vshrl.u32 %v1948, 7
    %v1950 = vsub.s32 %v1947, %v1949
    %v1951 = vrot.slane %v1942, %v1950
    %v1953 = vunpack.c.l.s4 1983009808
    %v1954 = vunpack.c.0.s8 %v1953
    %v1955 = vlaneseq
    %v1956 = vshrl.u32 %v1955, 7
    %v1957 = vsub.s32 %v1954, %v1956
    %v1958 = vrot.slane %v1944, %v1957
    %1959 = vrot.lane.b32.xlu0 %v1951, 84
    %v1960 = vpop.permute.xlu0 %1959
    %1961 = vrot.lane.b32.xlu0 %v1958, 84
    %v1962 = vpop.permute.xlu0 %1961
    %v1963 = vrot.slane %v1960, 4
    %v1964 = vrot.slane %v1962, 4
    %v1965 = vsel %vm1573, %v1963, %v1964
    %vm1966 = vcmask 687104
    %v1967 = vsel %vm1966, %v1960, %v1965
    %1970 = vst [vmem:[#allocation3 + $0xa8] sm:$0x33] %v1967
    %1971 = vst.msk [vmem:[#allocation3 + $0xb0] sm:$0x3] %vm1548, %v1962
    %v1972 = vld [vmem:[#allocation2] sm:$0x3f]
    %v1974 = vcombine.low %v1972, %v1972
    %v1976 = vunpack.c.l.s4 1983009808
    %v1977 = vunpack.c.0.s8 %v1976
    %v1978 = vlaneseq
    %v1979 = vshrl.u32 %v1978, 7
    %v1980 = vsub.s32 %v1977, %v1979
    %v1981 = vrot.slane %v1974, %v1980
    %v1983 = vunpack.c.l.s4 1983009808
    %v1984 = vunpack.c.0.s8 %v1983
    %v1985 = vlaneseq
    %v1986 = vshrl.u32 %v1985, 7
    %v1987 = vsub.s32 %v1984, %v1986
    %v1988 = vrot.slane %v1972, %v1987
    %1989 = vrot.lane.b32.xlu0 %v1981, 68
    %v1990 = vpop.permute.xlu0 %1989
    %1991 = vrot.lane.b32.xlu0 %v1988, 68
    %v1992 = vpop.permute.xlu0 %1991
    %v1993 = vrot.slane %v1990, 4
    %v1994 = vrot.slane %v1992, 4
    %v1995 = vsel %vm1573, %v1993, %v1994
    %vm1996 = vcmask 556032
    %v1997 = vsel %vm1996, %v1990, %v1995
    %2000 = vst [vmem:[#allocation3 + $0xa8] sm:$0xcc] %v1997
    %2001 = vst.msk [vmem:[#allocation3 + $0xb0] sm:$0xc] %vm1580, %v1992
    %v2002 = vld [vmem:[#allocation2] sm:$0x3f]
    %v2004 = vcombine.high %v2002, %v2002
    %v2006 = vunpack.c.l.s4 1983009808
    %v2007 = vunpack.c.0.s8 %v2006
    %v2008 = vlaneseq
    %v2009 = vshrl.u32 %v2008, 7
    %v2010 = vsub.s32 %v2007, %v2009
    %v2011 = vrot.slane %v2002, %v2010
    %v2013 = vunpack.c.l.s4 1983009808
    %v2014 = vunpack.c.0.s8 %v2013
    %v2015 = vlaneseq
    %v2016 = vshrl.u32 %v2015, 7
    %v2017 = vsub.s32 %v2014, %v2016
    %v2018 = vrot.slane %v2004, %v2017
    %2019 = vrot.lane.b32.xlu0 %v2011, 67
    %v2020 = vpop.permute.xlu0 %2019
    %2021 = vrot.lane.b32.xlu0 %v2018, 67
    %v2022 = vpop.permute.xlu0 %2021
    %v2023 = vrot.slane %v2020, 4
    %v2024 = vrot.slane %v2022, 4
    %v2025 = vsel %vm1573, %v2023, %v2024
    %vm2026 = vcmask 547840
    %v2027 = vsel %vm2026, %v2020, %v2025
    %2030 = vst [vmem:[#allocation3 + $0xc0] sm:$0x33] %v2027
    %2031 = vst.msk [vmem:[#allocation3 + $0xc8] sm:$0x3] %vm1548, %v2022
    %v2032 = vld [vmem:[#allocation2] sm:$0x3f]
    %v2034 = vcombine.low %v2032, %v2032
    %v2036 = vunpack.c.l.s4 1983009808
    %v2037 = vunpack.c.0.s8 %v2036
    %v2038 = vlaneseq
    %v2039 = vshrl.u32 %v2038, 7
    %v2040 = vsub.s32 %v2037, %v2039
    %v2041 = vrot.slane %v2034, %v2040
    %v2043 = vunpack.c.l.s4 1983009808
    %v2044 = vunpack.c.0.s8 %v2043
    %v2045 = vlaneseq
    %v2046 = vshrl.u32 %v2045, 7
    %v2047 = vsub.s32 %v2044, %v2046
    %v2048 = vrot.slane %v2032, %v2047
    %2049 = vrot.lane.b32.xlu0 %v2041, 66
    %v2050 = vpop.permute.xlu0 %2049
    %2051 = vrot.lane.b32.xlu0 %v2048, 66
    %v2052 = vpop.permute.xlu0 %2051
    %v2053 = vrot.slane %v2050, 4
    %v2054 = vrot.slane %v2052, 4
    %v2055 = vsel %vm1573, %v2053, %v2054
    %vm2056 = vcmask 539648
    %v2057 = vsel %vm2056, %v2050, %v2055
    %2060 = vst [vmem:[#allocation3 + $0xc0] sm:$0xcc] %v2057
    %2061 = vst.msk [vmem:[#allocation3 + $0xc8] sm:$0xc] %vm1580, %v2052
    %v2062 = vld [vmem:[#allocation2] sm:$0x3f]
    %v2064 = vcombine.high %v2062, %v2062
    %v2066 = vunpack.c.l.s4 1983009808
    %v2067 = vunpack.c.0.s8 %v2066
    %v2068 = vlaneseq
    %v2069 = vshrl.u32 %v2068, 7
    %v2070 = vsub.s32 %v2067, %v2069
    %v2071 = vrot.slane %v2062, %v2070
    %v2073 = vunpack.c.l.s4 1983009808
    %v2074 = vunpack.c.0.s8 %v2073
    %v2075 = vlaneseq
    %v2076 = vshrl.u32 %v2075, 7
    %v2077 = vsub.s32 %v2074, %v2076
    %v2078 = vrot.slane %v2064, %v2077
    %2079 = vrot.lane.b32.xlu0 %v2071, 65
    %v2080 = vpop.permute.xlu0 %2079
    %2081 = vrot.lane.b32.xlu0 %v2078, 65
    %v2082 = vpop.permute.xlu0 %2081
    %v2083 = vrot.slane %v2080, 4
    %v2084 = vrot.slane %v2082, 4
    %v2085 = vsel %vm1573, %v2083, %v2084
    %vm2086 = vcmask 531456
    %v2087 = vsel %vm2086, %v2080, %v2085
    %2090 = vst [vmem:[#allocation3 + $0xd8] sm:$0x33] %v2087
    %2091 = vst.msk [vmem:[#allocation3 + $0xe0] sm:$0x3] %vm1548, %v2082
    %v2092 = vld [vmem:[#allocation2] sm:$0x3f]
    %v2094 = vcombine.low %v2092, %v2092
    %v2096 = vunpack.c.l.s4 1983009808
    %v2097 = vunpack.c.0.s8 %v2096
    %v2098 = vlaneseq
    %v2099 = vshrl.u32 %v2098, 7
    %v2100 = vsub.s32 %v2097, %v2099
    %v2101 = vrot.slane %v2094, %v2100
    %v2103 = vunpack.c.l.s4 1983009808
    %v2104 = vunpack.c.0.s8 %v2103
    %v2105 = vlaneseq
    %v2106 = vshrl.u32 %v2105, 7
    %v2107 = vsub.s32 %v2104, %v2106
    %v2108 = vrot.slane %v2092, %v2107
    %2109 = vrot.lane.b32.xlu0 %v2101, 64
    %v2110 = vpop.permute.xlu0 %2109
    %2111 = vrot.lane.b32.xlu0 %v2108, 64
    %v2112 = vpop.permute.xlu0 %2111
    %v2113 = vrot.slane %v2110, 4
    %v2114 = vrot.slane %v2112, 4
    %v2115 = vsel %vm1573, %v2113, %v2114
    %vm2116 = vcmask 523264
    %v2117 = vsel %vm2116, %v2110, %v2115
    %2120 = vst [vmem:[#allocation3 + $0xd8] sm:$0xcc] %v2117
    %2121 = vst.msk [vmem:[#allocation3 + $0xe0] sm:$0xc] %vm1580, %v2112
    %v2122 = vld [vmem:[#allocation2] sm:$0xff]
    %v2124 = vcombine.high %v2122, %v2122
    %v2126 = vunpack.c.l.s4 1983009808
    %v2127 = vunpack.c.0.s8 %v2126
    %v2128 = vlaneseq
    %v2129 = vshrl.u32 %v2128, 7
    %v2130 = vsub.s32 %v2127, %v2129
    %v2131 = vrot.slane %v2122, %v2130
    %v2133 = vunpack.c.l.s4 1983009808
    %v2134 = vunpack.c.0.s8 %v2133
    %v2135 = vlaneseq
    %v2136 = vshrl.u32 %v2135, 7
    %v2137 = vsub.s32 %v2134, %v2136
    %v2138 = vrot.slane %v2124, %v2137
    %2139 = vrot.lane.b32.xlu0 %v2131, 48
    %v2140 = vpop.permute.xlu0 %2139
    %2141 = vrot.lane.b32.xlu0 %v2138, 48
    %v2142 = vpop.permute.xlu0 %2141
    %v2143 = vrot.slane %v2140, 4
    %v2144 = vrot.slane %v2142, 4
    %v2145 = vsel %vm1573, %v2143, %v2144
    %vm2146 = vcmask 392192
    %v2147 = vsel %vm2146, %v2140, %v2145
    %v2148 = vsel %vm2146, %v2142, %v2144
    %2151 = vst [vmem:[#allocation3 + $0xf0] sm:$0x33] %v2147
    %2152 = vst.msk [vmem:[#allocation3 + $0xf8] sm:$0x3] %vm1548, %v2148
    %v2153 = vld [vmem:[#allocation2] sm:$0xff]
    %v2155 = vcombine.low %v2153, %v2153
    %v2157 = vunpack.c.l.s4 1983009808
    %v2158 = vunpack.c.0.s8 %v2157
    %v2159 = vlaneseq
    %v2160 = vshrl.u32 %v2159, 7
    %v2161 = vsub.s32 %v2158, %v2160
    %v2162 = vrot.slane %v2155, %v2161
    %v2164 = vunpack.c.l.s4 1983009808
    %v2165 = vunpack.c.0.s8 %v2164
    %v2166 = vlaneseq
    %v2167 = vshrl.u32 %v2166, 7
    %v2168 = vsub.s32 %v2165, %v2167
    %v2169 = vrot.slane %v2153, %v2168
    %2170 = vrot.lane.b32.xlu0 %v2162, 47
    %v2171 = vpop.permute.xlu0 %2170
    %2172 = vrot.lane.b32.xlu0 %v2169, 47
    %v2173 = vpop.permute.xlu0 %2172
    %v2174 = vrot.slane %v2171, 4
    %v2175 = vrot.slane %v2173, 4
    %v2176 = vsel %vm1573, %v2174, %v2175
    %vm2177 = vcmask 384000
    %v2178 = vsel %vm2177, %v2171, %v2176
    %v2179 = vsel %vm2177, %v2173, %v2175
    %2182 = vst [vmem:[#allocation3 + $0xf0] sm:$0xcc] %v2178
    %2183 = vst.msk [vmem:[#allocation3 + $0xf8] sm:$0xc] %vm1580, %v2179
    %v2184 = vld [vmem:[#allocation2] sm:$0xff]
    %v2186 = vcombine.high %v2184, %v2184
    %v2188 = vunpack.c.l.s4 1983009808
    %v2189 = vunpack.c.0.s8 %v2188
    %v2190 = vlaneseq
    %v2191 = vshrl.u32 %v2190, 7
    %v2192 = vsub.s32 %v2189, %v2191
    %v2193 = vrot.slane %v2184, %v2192
    %v2195 = vunpack.c.l.s4 1983009808
    %v2196 = vunpack.c.0.s8 %v2195
    %v2197 = vlaneseq
    %v2198 = vshrl.u32 %v2197, 7
    %v2199 = vsub.s32 %v2196, %v2198
    %v2200 = vrot.slane %v2186, %v2199
    %2201 = vrot.lane.b32.xlu0 %v2193, 46
    %v2202 = vpop.permute.xlu0 %2201
    %2203 = vrot.lane.b32.xlu0 %v2200, 46
    %v2204 = vpop.permute.xlu0 %2203
    %v2205 = vrot.slane %v2202, 4
    %v2206 = vrot.slane %v2204, 4
    %v2207 = vsel %vm1573, %v2205, %v2206
    %vm2208 = vcmask 375808
    %v2209 = vsel %vm2208, %v2202, %v2207
    %v2210 = vsel %vm2208, %v2204, %v2206
    %2213 = vst [vmem:[#allocation3 + $0x108] sm:$0x33] %v2209
    %2214 = vst.msk [vmem:[#allocation3 + $0x110] sm:$0x3] %vm1548, %v2210
    %v2215 = vld [vmem:[#allocation2] sm:$0xff]
    %v2217 = vcombine.low %v2215, %v2215
    %v2219 = vunpack.c.l.s4 1983009808
    %v2220 = vunpack.c.0.s8 %v2219
    %v2221 = vlaneseq
    %v2222 = vshrl.u32 %v2221, 7
    %v2223 = vsub.s32 %v2220, %v2222
    %v2224 = vrot.slane %v2217, %v2223
    %v2226 = vunpack.c.l.s4 1983009808
    %v2227 = vunpack.c.0.s8 %v2226
    %v2228 = vlaneseq
    %v2229 = vshrl.u32 %v2228, 7
    %v2230 = vsub.s32 %v2227, %v2229
    %v2231 = vrot.slane %v2215, %v2230
    %2232 = vrot.lane.b32.xlu0 %v2224, 45
    %v2233 = vpop.permute.xlu0 %2232
    %2234 = vrot.lane.b32.xlu0 %v2231, 45
    %v2235 = vpop.permute.xlu0 %2234
    %v2236 = vrot.slane %v2233, 4
    %v2237 = vrot.slane %v2235, 4
    %v2238 = vsel %vm1573, %v2236, %v2237
    %vm2239 = vcmask 367616
    %v2240 = vsel %vm2239, %v2233, %v2238
    %v2241 = vsel %vm2239, %v2235, %v2237
    %2244 = vst [vmem:[#allocation3 + $0x108] sm:$0xcc] %v2240
    %2245 = vst.msk [vmem:[#allocation3 + $0x110] sm:$0xc] %vm1580, %v2241
    %v2246 = vld [vmem:[#allocation2] sm:$0xff]
    %v2248 = vcombine.high %v2246, %v2246
    %v2250 = vunpack.c.l.s4 1983009808
    %v2251 = vunpack.c.0.s8 %v2250
    %v2252 = vlaneseq
    %v2253 = vshrl.u32 %v2252, 7
    %v2254 = vsub.s32 %v2251, %v2253
    %v2255 = vrot.slane %v2246, %v2254
    %v2257 = vunpack.c.l.s4 1983009808
    %v2258 = vunpack.c.0.s8 %v2257
    %v2259 = vlaneseq
    %v2260 = vshrl.u32 %v2259, 7
    %v2261 = vsub.s32 %v2258, %v2260
    %v2262 = vrot.slane %v2248, %v2261
    %2263 = vrot.lane.b32.xlu0 %v2255, 44
    %v2264 = vpop.permute.xlu0 %2263
    %2265 = vrot.lane.b32.xlu0 %v2262, 44
    %v2266 = vpop.permute.xlu0 %2265
    %v2267 = vrot.slane %v2264, 4
    %v2268 = vrot.slane %v2266, 4
    %v2269 = vsel %vm1573, %v2267, %v2268
    %vm2270 = vcmask 359424
    %v2271 = vsel %vm2270, %v2264, %v2269
    %v2272 = vsel %vm2270, %v2266, %v2268
    %2275 = vst [vmem:[#allocation3 + $0x120] sm:$0x33] %v2271
    %2276 = vst.msk [vmem:[#allocation3 + $0x128] sm:$0x3] %vm1548, %v2272
    %s2277 = scalar_lea.vmem [#allocation4], 32
    %v2278 = vld [vmem:[%s2277] sm:$0x1]
    %v2279 = vld [vmem:[%s2277 + $0x8] sm:$0x1]
    %v2280 = vld [vmem:[%s2277 + $0x10] sm:$0x1]
    %v2281 = vld [vmem:[%s2277 + $0x18] sm:$0x1]
    %v2287 = vunpack.c.l.s4 1983009808
    %v2288 = vunpack.c.0.s8 %v2287
    %v2289 = vlaneseq
    %v2290 = vshrl.u32 %v2289, 7
    %v2291 = vsub.s32 %v2288, %v2290
    %v2292 = vrot.slane %v2278, %v2291
    %v2294 = vunpack.c.l.s4 1983009808
    %v2295 = vunpack.c.0.s8 %v2294
    %v2296 = vlaneseq
    %v2297 = vshrl.u32 %v2296, 7
    %v2298 = vsub.s32 %v2295, %v2297
    %v2299 = vrot.slane %v2279, %v2298
    %v2301 = vunpack.c.l.s4 1983009808
    %v2302 = vunpack.c.0.s8 %v2301
    %v2303 = vlaneseq
    %v2304 = vshrl.u32 %v2303, 7
    %v2305 = vsub.s32 %v2302, %v2304
    %v2306 = vrot.slane %v2280, %v2305
    %v2308 = vunpack.c.l.s4 1983009808
    %v2309 = vunpack.c.0.s8 %v2308
    %v2310 = vlaneseq
    %v2311 = vshrl.u32 %v2310, 7
    %v2312 = vsub.s32 %v2309, %v2311
    %v2313 = vrot.slane %v2281, %v2312
    %v2315 = vunpack.c.l.s4 1983009808
    %v2316 = vunpack.c.0.s8 %v2315
    %v2317 = vlaneseq
    %v2318 = vshrl.u32 %v2317, 7
    %v2319 = vsub.s32 %v2316, %v2318
    %v2320 = vrot.slane %v2292, %v2319
    %v2322 = vunpack.c.l.s4 1983009808
    %v2323 = vunpack.c.0.s8 %v2322
    %v2324 = vlaneseq
    %v2325 = vshrl.u32 %v2324, 7
    %v2326 = vsub.s32 %v2323, %v2325
    %v2327 = vrot.slane %v2299, %v2326
    %v2329 = vunpack.c.l.s4 1983009808
    %v2330 = vunpack.c.0.s8 %v2329
    %v2331 = vlaneseq
    %v2332 = vshrl.u32 %v2331, 7
    %v2333 = vsub.s32 %v2330, %v2332
    %v2334 = vrot.slane %v2306, %v2333
    %v2336 = vunpack.c.l.s4 1983009808
    %v2337 = vunpack.c.0.s8 %v2336
    %v2338 = vlaneseq
    %v2339 = vshrl.u32 %v2338, 7
    %v2340 = vsub.s32 %v2337, %v2339
    %v2341 = vrot.slane %v2313, %v2340
    %v2342 = vunpack.c.l.b16 %v2320
    %v2343 = vunpack.c.l.b16 %v2327
    %v2344 = vunpack.c.l.b16 %v2334
    %v2345 = vunpack.c.l.b16 %v2341
    %v2346 = vrot.slane %v2343, 7
    %v2347 = vsel %vm160, %v2346, %v2342
    %v2348 = vrot.slane %v2344, 6
    %v2349 = vsel %vm163, %v2348, %v2347
    %v2350 = vrot.slane %v2345, 5
    %v2351 = vsel %vm166, %v2350, %v2349
    %v2352 = vpack.c.b16 %v2351, %v2351
    %v2354 = vunpack.c.l.s4 1983009808
    %v2355 = vunpack.c.0.s8 %v2354
    %v2356 = vlaneseq
    %v2357 = vshrl.u32 %v2356, 7
    %v2358 = vsub.s32 %v2355, %v2357
    %v2359 = vrot.slane %v2352, %v2358
    %2360 = vrot.lane.b32.xlu0 %v2359, 42
    %v2361 = vpop.permute.xlu0 %2360
    %s2363 = scalar_lea.vmem [#allocation2], 8
    %2364 = vst.msk [vmem:[%s2363] sm:$0x3] %vm179, %v2361
    %v2365 = vld [vmem:[%s2277] sm:$0x1]
    %v2366 = vld [vmem:[%s2277 + $0x8] sm:$0x1]
    %v2367 = vld [vmem:[%s2277 + $0x10] sm:$0x1]
    %v2368 = vld [vmem:[%s2277 + $0x18] sm:$0x1]
    %v2374 = vunpack.c.l.s4 1983009808
    %v2375 = vunpack.c.0.s8 %v2374
    %v2376 = vlaneseq
    %v2377 = vshrl.u32 %v2376, 7
    %v2378 = vsub.s32 %v2375, %v2377
    %v2379 = vrot.slane %v2365, %v2378
    %v2381 = vunpack.c.l.s4 1983009808
    %v2382 = vunpack.c.0.s8 %v2381
    %v2383 = vlaneseq
    %v2384 = vshrl.u32 %v2383, 7
    %v2385 = vsub.s32 %v2382, %v2384
    %v2386 = vrot.slane %v2366, %v2385
    %v2388 = vunpack.c.l.s4 1983009808
    %v2389 = vunpack.c.0.s8 %v2388
    %v2390 = vlaneseq
    %v2391 = vshrl.u32 %v2390, 7
    %v2392 = vsub.s32 %v2389, %v2391
    %v2393 = vrot.slane %v2367, %v2392
    %v2395 = vunpack.c.l.s4 1983009808
    %v2396 = vunpack.c.0.s8 %v2395
    %v2397 = vlaneseq
    %v2398 = vshrl.u32 %v2397, 7
    %v2399 = vsub.s32 %v2396, %v2398
    %v2400 = vrot.slane %v2368, %v2399
    %v2402 = vunpack.c.l.s4 1983009808
    %v2403 = vunpack.c.0.s8 %v2402
    %v2404 = vlaneseq
    %v2405 = vshrl.u32 %v2404, 7
    %v2406 = vsub.s32 %v2403, %v2405
    %v2407 = vrot.slane %v2379, %v2406
    %v2409 = vunpack.c.l.s4 1983009808
    %v2410 = vunpack.c.0.s8 %v2409
    %v2411 = vlaneseq
    %v2412 = vshrl.u32 %v2411, 7
    %v2413 = vsub.s32 %v2410, %v2412
    %v2414 = vrot.slane %v2386, %v2413
    %v2416 = vunpack.c.l.s4 1983009808
    %v2417 = vunpack.c.0.s8 %v2416
    %v2418 = vlaneseq
    %v2419 = vshrl.u32 %v2418, 7
    %v2420 = vsub.s32 %v2417, %v2419
    %v2421 = vrot.slane %v2393, %v2420
    %v2423 = vunpack.c.l.s4 1983009808
    %v2424 = vunpack.c.0.s8 %v2423
    %v2425 = vlaneseq
    %v2426 = vshrl.u32 %v2425, 7
    %v2427 = vsub.s32 %v2424, %v2426
    %v2428 = vrot.slane %v2400, %v2427
    %v2429 = vunpack.c.l.b16 %v2407
    %v2430 = vunpack.c.l.b16 %v2414
    %v2431 = vunpack.c.l.b16 %v2421
    %v2432 = vunpack.c.l.b16 %v2428
    %v2433 = vrot.slane %v2429, 1
    %v2434 = vsel %vm160, %v2430, %v2433
    %v2435 = vrot.slane %v2431, 7
    %v2436 = vsel %vm163, %v2435, %v2434
    %v2437 = vrot.slane %v2432, 6
    %v2438 = vsel %vm166, %v2437, %v2436
    %v2439 = vpack.c.b16 %v2438, %v2438
    %v2441 = vunpack.c.l.s4 1983009808
    %v2442 = vunpack.c.0.s8 %v2441
    %v2443 = vlaneseq
    %v2444 = vshrl.u32 %v2443, 7
    %v2445 = vsub.s32 %v2442, %v2444
    %v2446 = vrot.slane %v2439, %v2445
    %2447 = vrot.lane.b32.xlu0 %v2446, 62
    %v2448 = vpop.permute.xlu0 %2447
    %2450 = vst.msk [vmem:[%s2363] sm:$0x3] %vm266, %v2448
    %v2451 = vld [vmem:[%s2277] sm:$0x2]
    %v2452 = vld [vmem:[%s2277 + $0x8] sm:$0x2]
    %v2453 = vld [vmem:[%s2277 + $0x10] sm:$0x2]
    %v2454 = vld [vmem:[%s2277 + $0x18] sm:$0x2]
    %v2460 = vunpack.c.l.s4 1983009808
    %v2461 = vunpack.c.0.s8 %v2460
    %v2462 = vlaneseq
    %v2463 = vshrl.u32 %v2462, 7
    %v2464 = vsub.s32 %v2461, %v2463
    %v2465 = vrot.slane %v2451, %v2464
    %v2467 = vunpack.c.l.s4 1983009808
    %v2468 = vunpack.c.0.s8 %v2467
    %v2469 = vlaneseq
    %v2470 = vshrl.u32 %v2469, 7
    %v2471 = vsub.s32 %v2468, %v2470
    %v2472 = vrot.slane %v2452, %v2471
    %v2474 = vunpack.c.l.s4 1983009808
    %v2475 = vunpack.c.0.s8 %v2474
    %v2476 = vlaneseq
    %v2477 = vshrl.u32 %v2476, 7
    %v2478 = vsub.s32 %v2475, %v2477
    %v2479 = vrot.slane %v2453, %v2478
    %v2481 = vunpack.c.l.s4 1983009808
    %v2482 = vunpack.c.0.s8 %v2481
    %v2483 = vlaneseq
    %v2484 = vshrl.u32 %v2483, 7
    %v2485 = vsub.s32 %v2482, %v2484
    %v2486 = vrot.slane %v2454, %v2485
    %v2488 = vunpack.c.l.s4 1983009808
    %v2489 = vunpack.c.0.s8 %v2488
    %v2490 = vlaneseq
    %v2491 = vshrl.u32 %v2490, 7
    %v2492 = vsub.s32 %v2489, %v2491
    %v2493 = vrot.slane %v2465, %v2492
    %v2495 = vunpack.c.l.s4 1983009808
    %v2496 = vunpack.c.0.s8 %v2495
    %v2497 = vlaneseq
    %v2498 = vshrl.u32 %v2497, 7
    %v2499 = vsub.s32 %v2496, %v2498
    %v2500 = vrot.slane %v2472, %v2499
    %v2502 = vunpack.c.l.s4 1983009808
    %v2503 = vunpack.c.0.s8 %v2502
    %v2504 = vlaneseq
    %v2505 = vshrl.u32 %v2504, 7
    %v2506 = vsub.s32 %v2503, %v2505
    %v2507 = vrot.slane %v2479, %v2506
    %v2509 = vunpack.c.l.s4 1983009808
    %v2510 = vunpack.c.0.s8 %v2509
    %v2511 = vlaneseq
    %v2512 = vshrl.u32 %v2511, 7
    %v2513 = vsub.s32 %v2510, %v2512
    %v2514 = vrot.slane %v2486, %v2513
    %v2515 = vunpack.c.l.b16 %v2493
    %v2516 = vunpack.c.l.b16 %v2500
    %v2517 = vunpack.c.l.b16 %v2507
    %v2518 = vunpack.c.l.b16 %v2514
    %v2519 = vrot.slane %v2515, 2
    %v2520 = vrot.slane %v2516, 1
    %v2521 = vsel %vm160, %v2520, %v2519
    %v2522 = vsel %vm163, %v2517, %v2521
    %v2523 = vrot.slane %v2518, 7
    %v2524 = vsel %vm166, %v2523, %v2522
    %v2525 = vpack.c.b16 %v2524, %v2524
    %v2527 = vunpack.c.l.s4 1983009808
    %v2528 = vunpack.c.0.s8 %v2527
    %v2529 = vlaneseq
    %v2530 = vshrl.u32 %v2529, 7
    %v2531 = vsub.s32 %v2528, %v2530
    %v2532 = vrot.slane %v2525, %v2531
    %2533 = vrot.lane.b32.xlu0 %v2532, 82
    %v2534 = vpop.permute.xlu0 %2533
    %2536 = vst.msk [vmem:[%s2363] sm:$0x3] %vm353, %v2534
    %v2537 = vld [vmem:[%s2277] sm:$0x2]
    %v2538 = vld [vmem:[%s2277 + $0x8] sm:$0x2]
    %v2539 = vld [vmem:[%s2277 + $0x10] sm:$0x2]
    %v2540 = vld [vmem:[%s2277 + $0x18] sm:$0x2]
    %v2546 = vunpack.c.l.s4 1983009808
    %v2547 = vunpack.c.0.s8 %v2546
    %v2548 = vlaneseq
    %v2549 = vshrl.u32 %v2548, 7
    %v2550 = vsub.s32 %v2547, %v2549
    %v2551 = vrot.slane %v2537, %v2550
    %v2553 = vunpack.c.l.s4 1983009808
    %v2554 = vunpack.c.0.s8 %v2553
    %v2555 = vlaneseq
    %v2556 = vshrl.u32 %v2555, 7
    %v2557 = vsub.s32 %v2554, %v2556
    %v2558 = vrot.slane %v2538, %v2557
    %v2560 = vunpack.c.l.s4 1983009808
    %v2561 = vunpack.c.0.s8 %v2560
    %v2562 = vlaneseq
    %v2563 = vshrl.u32 %v2562, 7
    %v2564 = vsub.s32 %v2561, %v2563
    %v2565 = vrot.slane %v2539, %v2564
    %v2567 = vunpack.c.l.s4 1983009808
    %v2568 = vunpack.c.0.s8 %v2567
    %v2569 = vlaneseq
    %v2570 = vshrl.u32 %v2569, 7
    %v2571 = vsub.s32 %v2568, %v2570
    %v2572 = vrot.slane %v2540, %v2571
    %v2574 = vunpack.c.l.s4 1983009808
    %v2575 = vunpack.c.0.s8 %v2574
    %v2576 = vlaneseq
    %v2577 = vshrl.u32 %v2576, 7
    %v2578 = vsub.s32 %v2575, %v2577
    %v2579 = vrot.slane %v2551, %v2578
    %v2581 = vunpack.c.l.s4 1983009808
    %v2582 = vunpack.c.0.s8 %v2581
    %v2583 = vlaneseq
    %v2584 = vshrl.u32 %v2583, 7
    %v2585 = vsub.s32 %v2582, %v2584
    %v2586 = vrot.slane %v2558, %v2585
    %v2588 = vunpack.c.l.s4 1983009808
    %v2589 = vunpack.c.0.s8 %v2588
    %v2590 = vlaneseq
    %v2591 = vshrl.u32 %v2590, 7
    %v2592 = vsub.s32 %v2589, %v2591
    %v2593 = vrot.slane %v2565, %v2592
    %v2595 = vunpack.c.l.s4 1983009808
    %v2596 = vunpack.c.0.s8 %v2595
    %v2597 = vlaneseq
    %v2598 = vshrl.u32 %v2597, 7
    %v2599 = vsub.s32 %v2596, %v2598
    %v2600 = vrot.slane %v2572, %v2599
    %v2601 = vunpack.c.l.b16 %v2579
    %v2602 = vunpack.c.l.b16 %v2586
    %v2603 = vunpack.c.l.b16 %v2593
    %v2604 = vunpack.c.l.b16 %v2600
    %v2605 = vrot.slane %v2601, 3
    %v2606 = vrot.slane %v2602, 2
    %v2607 = vsel %vm160, %v2606, %v2605
    %v2608 = vrot.slane %v2603, 1
    %v2609 = vsel %vm163, %v2608, %v2607
    %v2610 = vsel %vm166, %v2604, %v2609
    %v2611 = vpack.c.b16 %v2610, %v2610
    %v2613 = vunpack.c.l.s4 1983009808
    %v2614 = vunpack.c.0.s8 %v2613
    %v2615 = vlaneseq
    %v2616 = vshrl.u32 %v2615, 7
    %v2617 = vsub.s32 %v2614, %v2616
    %v2618 = vrot.slane %v2611, %v2617
    %2619 = vrot.lane.b32.xlu0 %v2618, 102
    %v2620 = vpop.permute.xlu0 %2619
    %2622 = vst.msk [vmem:[%s2363] sm:$0x3] %vm440, %v2620
    %v2623 = vld [vmem:[%s2277] sm:$0x4]
    %v2624 = vld [vmem:[%s2277 + $0x8] sm:$0x4]
    %v2625 = vld [vmem:[%s2277 + $0x10] sm:$0x4]
    %v2626 = vld [vmem:[%s2277 + $0x18] sm:$0x4]
    %v2632 = vunpack.c.l.s4 1983009808
    %v2633 = vunpack.c.0.s8 %v2632
    %v2634 = vlaneseq
    %v2635 = vshrl.u32 %v2634, 7
    %v2636 = vsub.s32 %v2633, %v2635
    %v2637 = vrot.slane %v2623, %v2636
    %v2638 = vcombine.high %v2637, %v2637
    %v2640 = vunpack.c.l.s4 1983009808
    %v2641 = vunpack.c.0.s8 %v2640
    %v2642 = vlaneseq
    %v2643 = vshrl.u32 %v2642, 7
    %v2644 = vsub.s32 %v2641, %v2643
    %v2645 = vrot.slane %v2624, %v2644
    %v2646 = vcombine.high %v2645, %v2645
    %v2648 = vunpack.c.l.s4 1983009808
    %v2649 = vunpack.c.0.s8 %v2648
    %v2650 = vlaneseq
    %v2651 = vshrl.u32 %v2650, 7
    %v2652 = vsub.s32 %v2649, %v2651
    %v2653 = vrot.slane %v2625, %v2652
    %v2654 = vcombine.high %v2653, %v2653
    %v2656 = vunpack.c.l.s4 1983009808
    %v2657 = vunpack.c.0.s8 %v2656
    %v2658 = vlaneseq
    %v2659 = vshrl.u32 %v2658, 7
    %v2660 = vsub.s32 %v2657, %v2659
    %v2661 = vrot.slane %v2626, %v2660
    %v2662 = vcombine.high %v2661, %v2661
    %v2664 = vunpack.c.l.s4 1983009808
    %v2665 = vunpack.c.0.s8 %v2664
    %v2666 = vlaneseq
    %v2667 = vshrl.u32 %v2666, 7
    %v2668 = vsub.s32 %v2665, %v2667
    %v2669 = vrot.slane %v2638, %v2668
    %v2671 = vunpack.c.l.s4 1983009808
    %v2672 = vunpack.c.0.s8 %v2671
    %v2673 = vlaneseq
    %v2674 = vshrl.u32 %v2673, 7
    %v2675 = vsub.s32 %v2672, %v2674
    %v2676 = vrot.slane %v2646, %v2675
    %v2678 = vunpack.c.l.s4 1983009808
    %v2679 = vunpack.c.0.s8 %v2678
    %v2680 = vlaneseq
    %v2681 = vshrl.u32 %v2680, 7
    %v2682 = vsub.s32 %v2679, %v2681
    %v2683 = vrot.slane %v2654, %v2682
    %v2685 = vunpack.c.l.s4 1983009808
    %v2686 = vunpack.c.0.s8 %v2685
    %v2687 = vlaneseq
    %v2688 = vshrl.u32 %v2687, 7
    %v2689 = vsub.s32 %v2686, %v2688
    %v2690 = vrot.slane %v2662, %v2689
    %v2691 = vunpack.c.l.b16 %v2669
    %v2692 = vunpack.c.l.b16 %v2676
    %v2693 = vunpack.c.l.b16 %v2683
    %v2694 = vunpack.c.l.b16 %v2690
    %v2695 = vrot.slane %v2692, 7
    %v2696 = vsel %vm160, %v2695, %v2691
    %v2697 = vrot.slane %v2693, 6
    %v2698 = vsel %vm163, %v2697, %v2696
    %v2699 = vrot.slane %v2694, 5
    %v2700 = vsel %vm166, %v2699, %v2698
    %v2701 = vpack.c.b16 %v2700, %v2700
    %v2703 = vunpack.c.l.s4 1983009808
    %v2704 = vunpack.c.0.s8 %v2703
    %v2705 = vlaneseq
    %v2706 = vshrl.u32 %v2705, 7
    %v2707 = vsub.s32 %v2704, %v2706
    %v2708 = vrot.slane %v2701, %v2707
    %2709 = vrot.lane.b32.xlu0 %v2708, 122
    %v2710 = vpop.permute.xlu0 %2709
    %v2711 = vrot.slane %v2710, 6
    %v2712 = vsel %vm531, %v2711, %v2710
    %2714 = vst.msk [vmem:[%s2363] sm:$0xf] %vm536, %v2712
    %v2715 = vld [vmem:[%s2277] sm:$0x4]
    %v2716 = vld [vmem:[%s2277 + $0x8] sm:$0x4]
    %v2717 = vld [vmem:[%s2277 + $0x10] sm:$0x4]
    %v2718 = vld [vmem:[%s2277 + $0x18] sm:$0x4]
    %v2724 = vunpack.c.l.s4 1983009808
    %v2725 = vunpack.c.0.s8 %v2724
    %v2726 = vlaneseq
    %v2727 = vshrl.u32 %v2726, 7
    %v2728 = vsub.s32 %v2725, %v2727
    %v2729 = vrot.slane %v2715, %v2728
    %v2730 = vcombine.high %v2729, %v2729
    %v2732 = vunpack.c.l.s4 1983009808
    %v2733 = vunpack.c.0.s8 %v2732
    %v2734 = vlaneseq
    %v2735 = vshrl.u32 %v2734, 7
    %v2736 = vsub.s32 %v2733, %v2735
    %v2737 = vrot.slane %v2716, %v2736
    %v2738 = vcombine.high %v2737, %v2737
    %v2740 = vunpack.c.l.s4 1983009808
    %v2741 = vunpack.c.0.s8 %v2740
    %v2742 = vlaneseq
    %v2743 = vshrl.u32 %v2742, 7
    %v2744 = vsub.s32 %v2741, %v2743
    %v2745 = vrot.slane %v2717, %v2744
    %v2746 = vcombine.high %v2745, %v2745
    %v2748 = vunpack.c.l.s4 1983009808
    %v2749 = vunpack.c.0.s8 %v2748
    %v2750 = vlaneseq
    %v2751 = vshrl.u32 %v2750, 7
    %v2752 = vsub.s32 %v2749, %v2751
    %v2753 = vrot.slane %v2718, %v2752
    %v2754 = vcombine.high %v2753, %v2753
    %v2756 = vunpack.c.l.s4 1983009808
    %v2757 = vunpack.c.0.s8 %v2756
    %v2758 = vlaneseq
    %v2759 = vshrl.u32 %v2758, 7
    %v2760 = vsub.s32 %v2757, %v2759
    %v2761 = vrot.slane %v2730, %v2760
    %v2763 = vunpack.c.l.s4 1983009808
    %v2764 = vunpack.c.0.s8 %v2763
    %v2765 = vlaneseq
    %v2766 = vshrl.u32 %v2765, 7
    %v2767 = vsub.s32 %v2764, %v2766
    %v2768 = vrot.slane %v2738, %v2767
    %v2770 = vunpack.c.l.s4 1983009808
    %v2771 = vunpack.c.0.s8 %v2770
    %v2772 = vlaneseq
    %v2773 = vshrl.u32 %v2772, 7
    %v2774 = vsub.s32 %v2771, %v2773
    %v2775 = vrot.slane %v2746, %v2774
    %v2777 = vunpack.c.l.s4 1983009808
    %v2778 = vunpack.c.0.s8 %v2777
    %v2779 = vlaneseq
    %v2780 = vshrl.u32 %v2779, 7
    %v2781 = vsub.s32 %v2778, %v2780
    %v2782 = vrot.slane %v2754, %v2781
    %v2783 = vunpack.c.l.b16 %v2761
    %v2784 = vunpack.c.l.b16 %v2768
    %v2785 = vunpack.c.l.b16 %v2775
    %v2786 = vunpack.c.l.b16 %v2782
    %v2787 = vrot.slane %v2783, 1
    %v2788 = vsel %vm160, %v2784, %v2787
    %v2789 = vrot.slane %v2785, 7
    %v2790 = vsel %vm163, %v2789, %v2788
    %v2791 = vrot.slane %v2786, 6
    %v2792 = vsel %vm166, %v2791, %v2790
    %v2793 = vpack.c.b16 %v2792, %v2792
    %v2795 = vunpack.c.l.s4 1983009808
    %v2796 = vunpack.c.0.s8 %v2795
    %v2797 = vlaneseq
    %v2798 = vshrl.u32 %v2797, 7
    %v2799 = vsub.s32 %v2796, %v2798
    %v2800 = vrot.slane %v2793, %v2799
    %2801 = vrot.lane.b32.xlu0 %v2800, 14
    %v2802 = vpop.permute.xlu0 %2801
    %2804 = vst.msk [vmem:[%s2363 + $0x2] sm:$0x3] %vm627, %v2802
    %v2805 = vld [vmem:[%s2277] sm:$0x8]
    %v2806 = vld [vmem:[%s2277 + $0x8] sm:$0x8]
    %v2807 = vld [vmem:[%s2277 + $0x10] sm:$0x8]
    %v2808 = vld [vmem:[%s2277 + $0x18] sm:$0x8]
    %v2814 = vunpack.c.l.s4 1983009808
    %v2815 = vunpack.c.0.s8 %v2814
    %v2816 = vlaneseq
    %v2817 = vshrl.u32 %v2816, 7
    %v2818 = vsub.s32 %v2815, %v2817
    %v2819 = vrot.slane %v2805, %v2818
    %v2820 = vcombine.high %v2819, %v2819
    %v2822 = vunpack.c.l.s4 1983009808
    %v2823 = vunpack.c.0.s8 %v2822
    %v2824 = vlaneseq
    %v2825 = vshrl.u32 %v2824, 7
    %v2826 = vsub.s32 %v2823, %v2825
    %v2827 = vrot.slane %v2806, %v2826
    %v2828 = vcombine.high %v2827, %v2827
    %v2830 = vunpack.c.l.s4 1983009808
    %v2831 = vunpack.c.0.s8 %v2830
    %v2832 = vlaneseq
    %v2833 = vshrl.u32 %v2832, 7
    %v2834 = vsub.s32 %v2831, %v2833
    %v2835 = vrot.slane %v2807, %v2834
    %v2836 = vcombine.high %v2835, %v2835
    %v2838 = vunpack.c.l.s4 1983009808
    %v2839 = vunpack.c.0.s8 %v2838
    %v2840 = vlaneseq
    %v2841 = vshrl.u32 %v2840, 7
    %v2842 = vsub.s32 %v2839, %v2841
    %v2843 = vrot.slane %v2808, %v2842
    %v2844 = vcombine.high %v2843, %v2843
    %v2846 = vunpack.c.l.s4 1983009808
    %v2847 = vunpack.c.0.s8 %v2846
    %v2848 = vlaneseq
    %v2849 = vshrl.u32 %v2848, 7
    %v2850 = vsub.s32 %v2847, %v2849
    %v2851 = vrot.slane %v2820, %v2850
    %v2853 = vunpack.c.l.s4 1983009808
    %v2854 = vunpack.c.0.s8 %v2853
    %v2855 = vlaneseq
    %v2856 = vshrl.u32 %v2855, 7
    %v2857 = vsub.s32 %v2854, %v2856
    %v2858 = vrot.slane %v2828, %v2857
    %v2860 = vunpack.c.l.s4 1983009808
    %v2861 = vunpack.c.0.s8 %v2860
    %v2862 = vlaneseq
    %v2863 = vshrl.u32 %v2862, 7
    %v2864 = vsub.s32 %v2861, %v2863
    %v2865 = vrot.slane %v2836, %v2864
    %v2867 = vunpack.c.l.s4 1983009808
    %v2868 = vunpack.c.0.s8 %v2867
    %v2869 = vlaneseq
    %v2870 = vshrl.u32 %v2869, 7
    %v2871 = vsub.s32 %v2868, %v2870
    %v2872 = vrot.slane %v2844, %v2871
    %v2873 = vunpack.c.l.b16 %v2851
    %v2874 = vunpack.c.l.b16 %v2858
    %v2875 = vunpack.c.l.b16 %v2865
    %v2876 = vunpack.c.l.b16 %v2872
    %v2877 = vrot.slane %v2873, 2
    %v2878 = vrot.slane %v2874, 1
    %v2879 = vsel %vm160, %v2878, %v2877
    %v2880 = vsel %vm163, %v2875, %v2879
    %v2881 = vrot.slane %v2876, 7
    %v2882 = vsel %vm166, %v2881, %v2880
    %v2883 = vpack.c.b16 %v2882, %v2882
    %v2885 = vunpack.c.l.s4 1983009808
    %v2886 = vunpack.c.0.s8 %v2885
    %v2887 = vlaneseq
    %v2888 = vshrl.u32 %v2887, 7
    %v2889 = vsub.s32 %v2886, %v2888
    %v2890 = vrot.slane %v2883, %v2889
    %2891 = vrot.lane.b32.xlu0 %v2890, 34
    %v2892 = vpop.permute.xlu0 %2891
    %2894 = vst.msk [vmem:[%s2363 + $0x2] sm:$0x3] %vm718, %v2892
    %v2895 = vld [vmem:[%s2277] sm:$0x8]
    %v2896 = vld [vmem:[%s2277 + $0x8] sm:$0x8]
    %v2897 = vld [vmem:[%s2277 + $0x10] sm:$0x8]
    %v2898 = vld [vmem:[%s2277 + $0x18] sm:$0x8]
    %v2904 = vunpack.c.l.s4 1983009808
    %v2905 = vunpack.c.0.s8 %v2904
    %v2906 = vlaneseq
    %v2907 = vshrl.u32 %v2906, 7
    %v2908 = vsub.s32 %v2905, %v2907
    %v2909 = vrot.slane %v2895, %v2908
    %v2910 = vcombine.high %v2909, %v2909
    %v2912 = vunpack.c.l.s4 1983009808
    %v2913 = vunpack.c.0.s8 %v2912
    %v2914 = vlaneseq
    %v2915 = vshrl.u32 %v2914, 7
    %v2916 = vsub.s32 %v2913, %v2915
    %v2917 = vrot.slane %v2896, %v2916
    %v2918 = vcombine.high %v2917, %v2917
    %v2920 = vunpack.c.l.s4 1983009808
    %v2921 = vunpack.c.0.s8 %v2920
    %v2922 = vlaneseq
    %v2923 = vshrl.u32 %v2922, 7
    %v2924 = vsub.s32 %v2921, %v2923
    %v2925 = vrot.slane %v2897, %v2924
    %v2926 = vcombine.high %v2925, %v2925
    %v2928 = vunpack.c.l.s4 1983009808
    %v2929 = vunpack.c.0.s8 %v2928
    %v2930 = vlaneseq
    %v2931 = vshrl.u32 %v2930, 7
    %v2932 = vsub.s32 %v2929, %v2931
    %v2933 = vrot.slane %v2898, %v2932
    %v2934 = vcombine.high %v2933, %v2933
    %v2936 = vunpack.c.l.s4 1983009808
    %v2937 = vunpack.c.0.s8 %v2936
    %v2938 = vlaneseq
    %v2939 = vshrl.u32 %v2938, 7
    %v2940 = vsub.s32 %v2937, %v2939
    %v2941 = vrot.slane %v2910, %v2940
    %v2943 = vunpack.c.l.s4 1983009808
    %v2944 = vunpack.c.0.s8 %v2943
    %v2945 = vlaneseq
    %v2946 = vshrl.u32 %v2945, 7
    %v2947 = vsub.s32 %v2944, %v2946
    %v2948 = vrot.slane %v2918, %v2947
    %v2950 = vunpack.c.l.s4 1983009808
    %v2951 = vunpack.c.0.s8 %v2950
    %v2952 = vlaneseq
    %v2953 = vshrl.u32 %v2952, 7
    %v2954 = vsub.s32 %v2951, %v2953
    %v2955 = vrot.slane %v2926, %v2954
    %v2957 = vunpack.c.l.s4 1983009808
    %v2958 = vunpack.c.0.s8 %v2957
    %v2959 = vlaneseq
    %v2960 = vshrl.u32 %v2959, 7
    %v2961 = vsub.s32 %v2958, %v2960
    %v2962 = vrot.slane %v2934, %v2961
    %v2963 = vunpack.c.l.b16 %v2941
    %v2964 = vunpack.c.l.b16 %v2948
    %v2965 = vunpack.c.l.b16 %v2955
    %v2966 = vunpack.c.l.b16 %v2962
    %v2967 = vrot.slane %v2963, 3
    %v2968 = vrot.slane %v2964, 2
    %v2969 = vsel %vm160, %v2968, %v2967
    %v2970 = vrot.slane %v2965, 1
    %v2971 = vsel %vm163, %v2970, %v2969
    %v2972 = vsel %vm166, %v2966, %v2971
    %v2973 = vpack.c.b16 %v2972, %v2972
    %v2975 = vunpack.c.l.s4 1983009808
    %v2976 = vunpack.c.0.s8 %v2975
    %v2977 = vlaneseq
    %v2978 = vshrl.u32 %v2977, 7
    %v2979 = vsub.s32 %v2976, %v2978
    %v2980 = vrot.slane %v2973, %v2979
    %2981 = vrot.lane.b32.xlu0 %v2980, 54
    %v2982 = vpop.permute.xlu0 %2981
    %2984 = vst.msk [vmem:[%s2363 + $0x2] sm:$0x3] %vm809, %v2982
    %v2985 = vld [vmem:[%s2277 + $0x4] sm:$0x1]
    %v2986 = vld [vmem:[%s2277 + $0xc] sm:$0x1]
    %v2987 = vld [vmem:[%s2277 + $0x14] sm:$0x1]
    %v2988 = vld [vmem:[%s2277 + $0x1c] sm:$0x1]
    %v2994 = vunpack.c.l.s4 1983009808
    %v2995 = vunpack.c.0.s8 %v2994
    %v2996 = vlaneseq
    %v2997 = vshrl.u32 %v2996, 7
    %v2998 = vsub.s32 %v2995, %v2997
    %v2999 = vrot.slane %v2985, %v2998
    %v3001 = vunpack.c.l.s4 1983009808
    %v3002 = vunpack.c.0.s8 %v3001
    %v3003 = vlaneseq
    %v3004 = vshrl.u32 %v3003, 7
    %v3005 = vsub.s32 %v3002, %v3004
    %v3006 = vrot.slane %v2986, %v3005
    %v3008 = vunpack.c.l.s4 1983009808
    %v3009 = vunpack.c.0.s8 %v3008
    %v3010 = vlaneseq
    %v3011 = vshrl.u32 %v3010, 7
    %v3012 = vsub.s32 %v3009, %v3011
    %v3013 = vrot.slane %v2987, %v3012
    %v3015 = vunpack.c.l.s4 1983009808
    %v3016 = vunpack.c.0.s8 %v3015
    %v3017 = vlaneseq
    %v3018 = vshrl.u32 %v3017, 7
    %v3019 = vsub.s32 %v3016, %v3018
    %v3020 = vrot.slane %v2988, %v3019
    %v3022 = vunpack.c.l.s4 1983009808
    %v3023 = vunpack.c.0.s8 %v3022
    %v3024 = vlaneseq
    %v3025 = vshrl.u32 %v3024, 7
    %v3026 = vsub.s32 %v3023, %v3025
    %v3027 = vrot.slane %v2999, %v3026
    %v3029 = vunpack.c.l.s4 1983009808
    %v3030 = vunpack.c.0.s8 %v3029
    %v3031 = vlaneseq
    %v3032 = vshrl.u32 %v3031, 7
    %v3033 = vsub.s32 %v3030, %v3032
    %v3034 = vrot.slane %v3006, %v3033
    %v3036 = vunpack.c.l.s4 1983009808
    %v3037 = vunpack.c.0.s8 %v3036
    %v3038 = vlaneseq
    %v3039 = vshrl.u32 %v3038, 7
    %v3040 = vsub.s32 %v3037, %v3039
    %v3041 = vrot.slane %v3013, %v3040
    %v3043 = vunpack.c.l.s4 1983009808
    %v3044 = vunpack.c.0.s8 %v3043
    %v3045 = vlaneseq
    %v3046 = vshrl.u32 %v3045, 7
    %v3047 = vsub.s32 %v3044, %v3046
    %v3048 = vrot.slane %v3020, %v3047
    %v3049 = vunpack.c.l.b16 %v3027
    %v3050 = vunpack.c.l.b16 %v3034
    %v3051 = vunpack.c.l.b16 %v3041
    %v3052 = vunpack.c.l.b16 %v3048
    %v3053 = vrot.slane %v3050, 7
    %v3054 = vsel %vm160, %v3053, %v3049
    %v3055 = vrot.slane %v3051, 6
    %v3056 = vsel %vm163, %v3055, %v3054
    %v3057 = vrot.slane %v3052, 5
    %v3058 = vsel %vm166, %v3057, %v3056
    %v3059 = vpack.c.b16 %v3058, %v3058
    %v3061 = vunpack.c.l.s4 1983009808
    %v3062 = vunpack.c.0.s8 %v3061
    %v3063 = vlaneseq
    %v3064 = vshrl.u32 %v3063, 7
    %v3065 = vsub.s32 %v3062, %v3064
    %v3066 = vrot.slane %v3059, %v3065
    %3067 = vrot.lane.b32.xlu0 %v3066, 74
    %v3068 = vpop.permute.xlu0 %3067
    %3070 = vst.msk [vmem:[%s2363 + $0x2] sm:$0x3] %vm896, %v3068
    %v3071 = vld [vmem:[%s2277 + $0x4] sm:$0x1]
    %v3072 = vld [vmem:[%s2277 + $0xc] sm:$0x1]
    %v3073 = vld [vmem:[%s2277 + $0x14] sm:$0x1]
    %v3074 = vld [vmem:[%s2277 + $0x1c] sm:$0x1]
    %v3080 = vunpack.c.l.s4 1983009808
    %v3081 = vunpack.c.0.s8 %v3080
    %v3082 = vlaneseq
    %v3083 = vshrl.u32 %v3082, 7
    %v3084 = vsub.s32 %v3081, %v3083
    %v3085 = vrot.slane %v3071, %v3084
    %v3087 = vunpack.c.l.s4 1983009808
    %v3088 = vunpack.c.0.s8 %v3087
    %v3089 = vlaneseq
    %v3090 = vshrl.u32 %v3089, 7
    %v3091 = vsub.s32 %v3088, %v3090
    %v3092 = vrot.slane %v3072, %v3091
    %v3094 = vunpack.c.l.s4 1983009808
    %v3095 = vunpack.c.0.s8 %v3094
    %v3096 = vlaneseq
    %v3097 = vshrl.u32 %v3096, 7
    %v3098 = vsub.s32 %v3095, %v3097
    %v3099 = vrot.slane %v3073, %v3098
    %v3101 = vunpack.c.l.s4 1983009808
    %v3102 = vunpack.c.0.s8 %v3101
    %v3103 = vlaneseq
    %v3104 = vshrl.u32 %v3103, 7
    %v3105 = vsub.s32 %v3102, %v3104
    %v3106 = vrot.slane %v3074, %v3105
    %v3108 = vunpack.c.l.s4 1983009808
    %v3109 = vunpack.c.0.s8 %v3108
    %v3110 = vlaneseq
    %v3111 = vshrl.u32 %v3110, 7
    %v3112 = vsub.s32 %v3109, %v3111
    %v3113 = vrot.slane %v3085, %v3112
    %v3115 = vunpack.c.l.s4 1983009808
    %v3116 = vunpack.c.0.s8 %v3115
    %v3117 = vlaneseq
    %v3118 = vshrl.u32 %v3117, 7
    %v3119 = vsub.s32 %v3116, %v3118
    %v3120 = vrot.slane %v3092, %v3119
    %v3122 = vunpack.c.l.s4 1983009808
    %v3123 = vunpack.c.0.s8 %v3122
    %v3124 = vlaneseq
    %v3125 = vshrl.u32 %v3124, 7
    %v3126 = vsub.s32 %v3123, %v3125
    %v3127 = vrot.slane %v3099, %v3126
    %v3129 = vunpack.c.l.s4 1983009808
    %v3130 = vunpack.c.0.s8 %v3129
    %v3131 = vlaneseq
    %v3132 = vshrl.u32 %v3131, 7
    %v3133 = vsub.s32 %v3130, %v3132
    %v3134 = vrot.slane %v3106, %v3133
    %v3135 = vunpack.c.l.b16 %v3113
    %v3136 = vunpack.c.l.b16 %v3120
    %v3137 = vunpack.c.l.b16 %v3127
    %v3138 = vunpack.c.l.b16 %v3134
    %v3139 = vrot.slane %v3135, 1
    %v3140 = vsel %vm160, %v3136, %v3139
    %v3141 = vrot.slane %v3137, 7
    %v3142 = vsel %vm163, %v3141, %v3140
    %v3143 = vrot.slane %v3138, 6
    %v3144 = vsel %vm166, %v3143, %v3142
    %v3145 = vpack.c.b16 %v3144, %v3144
    %v3147 = vunpack.c.l.s4 1983009808
    %v3148 = vunpack.c.0.s8 %v3147
    %v3149 = vlaneseq
    %v3150 = vshrl.u32 %v3149, 7
    %v3151 = vsub.s32 %v3148, %v3150
    %v3152 = vrot.slane %v3145, %v3151
    %3153 = vrot.lane.b32.xlu0 %v3152, 94
    %v3154 = vpop.permute.xlu0 %3153
    %3156 = vst.msk [vmem:[%s2363 + $0x2] sm:$0x3] %vm983, %v3154
    %v3157 = vld [vmem:[%s2277 + $0x4] sm:$0x2]
    %v3158 = vld [vmem:[%s2277 + $0xc] sm:$0x2]
    %v3159 = vld [vmem:[%s2277 + $0x14] sm:$0x2]
    %v3160 = vld [vmem:[%s2277 + $0x1c] sm:$0x2]
    %v3166 = vunpack.c.l.s4 1983009808
    %v3167 = vunpack.c.0.s8 %v3166
    %v3168 = vlaneseq
    %v3169 = vshrl.u32 %v3168, 7
    %v3170 = vsub.s32 %v3167, %v3169
    %v3171 = vrot.slane %v3157, %v3170
    %v3173 = vunpack.c.l.s4 1983009808
    %v3174 = vunpack.c.0.s8 %v3173
    %v3175 = vlaneseq
    %v3176 = vshrl.u32 %v3175, 7
    %v3177 = vsub.s32 %v3174, %v3176
    %v3178 = vrot.slane %v3158, %v3177
    %v3180 = vunpack.c.l.s4 1983009808
    %v3181 = vunpack.c.0.s8 %v3180
    %v3182 = vlaneseq
    %v3183 = vshrl.u32 %v3182, 7
    %v3184 = vsub.s32 %v3181, %v3183
    %v3185 = vrot.slane %v3159, %v3184
    %v3187 = vunpack.c.l.s4 1983009808
    %v3188 = vunpack.c.0.s8 %v3187
    %v3189 = vlaneseq
    %v3190 = vshrl.u32 %v3189, 7
    %v3191 = vsub.s32 %v3188, %v3190
    %v3192 = vrot.slane %v3160, %v3191
    %v3194 = vunpack.c.l.s4 1983009808
    %v3195 = vunpack.c.0.s8 %v3194
    %v3196 = vlaneseq
    %v3197 = vshrl.u32 %v3196, 7
    %v3198 = vsub.s32 %v3195, %v3197
    %v3199 = vrot.slane %v3171, %v3198
    %v3201 = vunpack.c.l.s4 1983009808
    %v3202 = vunpack.c.0.s8 %v3201
    %v3203 = vlaneseq
    %v3204 = vshrl.u32 %v3203, 7
    %v3205 = vsub.s32 %v3202, %v3204
    %v3206 = vrot.slane %v3178, %v3205
    %v3208 = vunpack.c.l.s4 1983009808
    %v3209 = vunpack.c.0.s8 %v3208
    %v3210 = vlaneseq
    %v3211 = vshrl.u32 %v3210, 7
    %v3212 = vsub.s32 %v3209, %v3211
    %v3213 = vrot.slane %v3185, %v3212
    %v3215 = vunpack.c.l.s4 1983009808
    %v3216 = vunpack.c.0.s8 %v3215
    %v3217 = vlaneseq
    %v3218 = vshrl.u32 %v3217, 7
    %v3219 = vsub.s32 %v3216, %v3218
    %v3220 = vrot.slane %v3192, %v3219
    %v3221 = vunpack.c.l.b16 %v3199
    %v3222 = vunpack.c.l.b16 %v3206
    %v3223 = vunpack.c.l.b16 %v3213
    %v3224 = vunpack.c.l.b16 %v3220
    %v3225 = vrot.slane %v3221, 2
    %v3226 = vrot.slane %v3222, 1
    %v3227 = vsel %vm160, %v3226, %v3225
    %v3228 = vsel %vm163, %v3223, %v3227
    %v3229 = vrot.slane %v3224, 7
    %v3230 = vsel %vm166, %v3229, %v3228
    %v3231 = vpack.c.b16 %v3230, %v3230
    %v3233 = vunpack.c.l.s4 1983009808
    %v3234 = vunpack.c.0.s8 %v3233
    %v3235 = vlaneseq
    %v3236 = vshrl.u32 %v3235, 7
    %v3237 = vsub.s32 %v3234, %v3236
    %v3238 = vrot.slane %v3231, %v3237
    %3239 = vrot.lane.b32.xlu0 %v3238, 114
    %v3240 = vpop.permute.xlu0 %3239
    %v3241 = vrot.slane %v3240, 6
    %v3242 = vsel %vm1070, %v3241, %v3240
    %3244 = vst.msk [vmem:[%s2363 + $0x2] sm:$0xf] %vm1075, %v3242
    %v3245 = vld [vmem:[%s2277 + $0x4] sm:$0x2]
    %v3246 = vld [vmem:[%s2277 + $0xc] sm:$0x2]
    %v3247 = vld [vmem:[%s2277 + $0x14] sm:$0x2]
    %v3248 = vld [vmem:[%s2277 + $0x1c] sm:$0x2]
    %v3254 = vunpack.c.l.s4 1983009808
    %v3255 = vunpack.c.0.s8 %v3254
    %v3256 = vlaneseq
    %v3257 = vshrl.u32 %v3256, 7
    %v3258 = vsub.s32 %v3255, %v3257
    %v3259 = vrot.slane %v3245, %v3258
    %v3261 = vunpack.c.l.s4 1983009808
    %v3262 = vunpack.c.0.s8 %v3261
    %v3263 = vlaneseq
    %v3264 = vshrl.u32 %v3263, 7
    %v3265 = vsub.s32 %v3262, %v3264
    %v3266 = vrot.slane %v3246, %v3265
    %v3268 = vunpack.c.l.s4 1983009808
    %v3269 = vunpack.c.0.s8 %v3268
    %v3270 = vlaneseq
    %v3271 = vshrl.u32 %v3270, 7
    %v3272 = vsub.s32 %v3269, %v3271
    %v3273 = vrot.slane %v3247, %v3272
    %v3275 = vunpack.c.l.s4 1983009808
    %v3276 = vunpack.c.0.s8 %v3275
    %v3277 = vlaneseq
    %v3278 = vshrl.u32 %v3277, 7
    %v3279 = vsub.s32 %v3276, %v3278
    %v3280 = vrot.slane %v3248, %v3279
    %v3282 = vunpack.c.l.s4 1983009808
    %v3283 = vunpack.c.0.s8 %v3282
    %v3284 = vlaneseq
    %v3285 = vshrl.u32 %v3284, 7
    %v3286 = vsub.s32 %v3283, %v3285
    %v3287 = vrot.slane %v3259, %v3286
    %v3289 = vunpack.c.l.s4 1983009808
    %v3290 = vunpack.c.0.s8 %v3289
    %v3291 = vlaneseq
    %v3292 = vshrl.u32 %v3291, 7
    %v3293 = vsub.s32 %v3290, %v3292
    %v3294 = vrot.slane %v3266, %v3293
    %v3296 = vunpack.c.l.s4 1983009808
    %v3297 = vunpack.c.0.s8 %v3296
    %v3298 = vlaneseq
    %v3299 = vshrl.u32 %v3298, 7
    %v3300 = vsub.s32 %v3297, %v3299
    %v3301 = vrot.slane %v3273, %v3300
    %v3303 = vunpack.c.l.s4 1983009808
    %v3304 = vunpack.c.0.s8 %v3303
    %v3305 = vlaneseq
    %v3306 = vshrl.u32 %v3305, 7
    %v3307 = vsub.s32 %v3304, %v3306
    %v3308 = vrot.slane %v3280, %v3307
    %v3309 = vunpack.c.l.b16 %v3287
    %v3310 = vunpack.c.l.b16 %v3294
    %v3311 = vunpack.c.l.b16 %v3301
    %v3312 = vunpack.c.l.b16 %v3308
    %v3313 = vrot.slane %v3309, 3
    %v3314 = vrot.slane %v3310, 2
    %v3315 = vsel %vm160, %v3314, %v3313
    %v3316 = vrot.slane %v3311, 1
    %v3317 = vsel %vm163, %v3316, %v3315
    %v3318 = vsel %vm166, %v3312, %v3317
    %v3319 = vpack.c.b16 %v3318, %v3318
    %v3321 = vunpack.c.l.s4 1983009808
    %v3322 = vunpack.c.0.s8 %v3321
    %v3323 = vlaneseq
    %v3324 = vshrl.u32 %v3323, 7
    %v3325 = vsub.s32 %v3322, %v3324
    %v3326 = vrot.slane %v3319, %v3325
    %3327 = vrot.lane.b32.xlu0 %v3326, 6
    %v3328 = vpop.permute.xlu0 %3327
    %3330 = vst.msk [vmem:[%s2363 + $0x4] sm:$0x3] %vm1162, %v3328
    %v3331 = vld [vmem:[%s2277 + $0x4] sm:$0x4]
    %v3332 = vld [vmem:[%s2277 + $0xc] sm:$0x4]
    %v3333 = vld [vmem:[%s2277 + $0x14] sm:$0x4]
    %v3334 = vld [vmem:[%s2277 + $0x1c] sm:$0x4]
    %v3340 = vunpack.c.l.s4 1983009808
    %v3341 = vunpack.c.0.s8 %v3340
    %v3342 = vlaneseq
    %v3343 = vshrl.u32 %v3342, 7
    %v3344 = vsub.s32 %v3341, %v3343
    %v3345 = vrot.slane %v3331, %v3344
    %v3346 = vcombine.high %v3345, %v3345
    %v3348 = vunpack.c.l.s4 1983009808
    %v3349 = vunpack.c.0.s8 %v3348
    %v3350 = vlaneseq
    %v3351 = vshrl.u32 %v3350, 7
    %v3352 = vsub.s32 %v3349, %v3351
    %v3353 = vrot.slane %v3332, %v3352
    %v3354 = vcombine.high %v3353, %v3353
    %v3356 = vunpack.c.l.s4 1983009808
    %v3357 = vunpack.c.0.s8 %v3356
    %v3358 = vlaneseq
    %v3359 = vshrl.u32 %v3358, 7
    %v3360 = vsub.s32 %v3357, %v3359
    %v3361 = vrot.slane %v3333, %v3360
    %v3362 = vcombine.high %v3361, %v3361
    %v3364 = vunpack.c.l.s4 1983009808
    %v3365 = vunpack.c.0.s8 %v3364
    %v3366 = vlaneseq
    %v3367 = vshrl.u32 %v3366, 7
    %v3368 = vsub.s32 %v3365, %v3367
    %v3369 = vrot.slane %v3334, %v3368
    %v3370 = vcombine.high %v3369, %v3369
    %v3372 = vunpack.c.l.s4 1983009808
    %v3373 = vunpack.c.0.s8 %v3372
    %v3374 = vlaneseq
    %v3375 = vshrl.u32 %v3374, 7
    %v3376 = vsub.s32 %v3373, %v3375
    %v3377 = vrot.slane %v3346, %v3376
    %v3379 = vunpack.c.l.s4 1983009808
    %v3380 = vunpack.c.0.s8 %v3379
    %v3381 = vlaneseq
    %v3382 = vshrl.u32 %v3381, 7
    %v3383 = vsub.s32 %v3380, %v3382
    %v3384 = vrot.slane %v3354, %v3383
    %v3386 = vunpack.c.l.s4 1983009808
    %v3387 = vunpack.c.0.s8 %v3386
    %v3388 = vlaneseq
    %v3389 = vshrl.u32 %v3388, 7
    %v3390 = vsub.s32 %v3387, %v3389
    %v3391 = vrot.slane %v3362, %v3390
    %v3393 = vunpack.c.l.s4 1983009808
    %v3394 = vunpack.c.0.s8 %v3393
    %v3395 = vlaneseq
    %v3396 = vshrl.u32 %v3395, 7
    %v3397 = vsub.s32 %v3394, %v3396
    %v3398 = vrot.slane %v3370, %v3397
    %v3399 = vunpack.c.l.b16 %v3377
    %v3400 = vunpack.c.l.b16 %v3384
    %v3401 = vunpack.c.l.b16 %v3391
    %v3402 = vunpack.c.l.b16 %v3398
    %v3403 = vrot.slane %v3400, 7
    %v3404 = vsel %vm160, %v3403, %v3399
    %v3405 = vrot.slane %v3401, 6
    %v3406 = vsel %vm163, %v3405, %v3404
    %v3407 = vrot.slane %v3402, 5
    %v3408 = vsel %vm166, %v3407, %v3406
    %v3409 = vpack.c.b16 %v3408, %v3408
    %v3411 = vunpack.c.l.s4 1983009808
    %v3412 = vunpack.c.0.s8 %v3411
    %v3413 = vlaneseq
    %v3414 = vshrl.u32 %v3413, 7
    %v3415 = vsub.s32 %v3412, %v3414
    %v3416 = vrot.slane %v3409, %v3415
    %3417 = vrot.lane.b32.xlu0 %v3416, 26
    %v3418 = vpop.permute.xlu0 %3417
    %3420 = vst.msk [vmem:[%s2363 + $0x4] sm:$0x3] %vm1253, %v3418
    %v3421 = vld [vmem:[%s2277 + $0x4] sm:$0x4]
    %v3422 = vld [vmem:[%s2277 + $0xc] sm:$0x4]
    %v3423 = vld [vmem:[%s2277 + $0x14] sm:$0x4]
    %v3424 = vld [vmem:[%s2277 + $0x1c] sm:$0x4]
    %v3430 = vunpack.c.l.s4 1983009808
    %v3431 = vunpack.c.0.s8 %v3430
    %v3432 = vlaneseq
    %v3433 = vshrl.u32 %v3432, 7
    %v3434 = vsub.s32 %v3431, %v3433
    %v3435 = vrot.slane %v3421, %v3434
    %v3436 = vcombine.high %v3435, %v3435
    %v3438 = vunpack.c.l.s4 1983009808
    %v3439 = vunpack.c.0.s8 %v3438
    %v3440 = vlaneseq
    %v3441 = vshrl.u32 %v3440, 7
    %v3442 = vsub.s32 %v3439, %v3441
    %v3443 = vrot.slane %v3422, %v3442
    %v3444 = vcombine.high %v3443, %v3443
    %v3446 = vunpack.c.l.s4 1983009808
    %v3447 = vunpack.c.0.s8 %v3446
    %v3448 = vlaneseq
    %v3449 = vshrl.u32 %v3448, 7
    %v3450 = vsub.s32 %v3447, %v3449
    %v3451 = vrot.slane %v3423, %v3450
    %v3452 = vcombine.high %v3451, %v3451
    %v3454 = vunpack.c.l.s4 1983009808
    %v3455 = vunpack.c.0.s8 %v3454
    %v3456 = vlaneseq
    %v3457 = vshrl.u32 %v3456, 7
    %v3458 = vsub.s32 %v3455, %v3457
    %v3459 = vrot.slane %v3424, %v3458
    %v3460 = vcombine.high %v3459, %v3459
    %v3462 = vunpack.c.l.s4 1983009808
    %v3463 = vunpack.c.0.s8 %v3462
    %v3464 = vlaneseq
    %v3465 = vshrl.u32 %v3464, 7
    %v3466 = vsub.s32 %v3463, %v3465
    %v3467 = vrot.slane %v3436, %v3466
    %v3469 = vunpack.c.l.s4 1983009808
    %v3470 = vunpack.c.0.s8 %v3469
    %v3471 = vlaneseq
    %v3472 = vshrl.u32 %v3471, 7
    %v3473 = vsub.s32 %v3470, %v3472
    %v3474 = vrot.slane %v3444, %v3473
    %v3476 = vunpack.c.l.s4 1983009808
    %v3477 = vunpack.c.0.s8 %v3476
    %v3478 = vlaneseq
    %v3479 = vshrl.u32 %v3478, 7
    %v3480 = vsub.s32 %v3477, %v3479
    %v3481 = vrot.slane %v3452, %v3480
    %v3483 = vunpack.c.l.s4 1983009808
    %v3484 = vunpack.c.0.s8 %v3483
    %v3485 = vlaneseq
    %v3486 = vshrl.u32 %v3485, 7
    %v3487 = vsub.s32 %v3484, %v3486
    %v3488 = vrot.slane %v3460, %v3487
    %v3489 = vunpack.c.l.b16 %v3467
    %v3490 = vunpack.c.l.b16 %v3474
    %v3491 = vunpack.c.l.b16 %v3481
    %v3492 = vunpack.c.l.b16 %v3488
    %v3493 = vrot.slane %v3489, 1
    %v3494 = vsel %vm160, %v3490, %v3493
    %v3495 = vrot.slane %v3491, 7
    %v3496 = vsel %vm163, %v3495, %v3494
    %v3497 = vrot.slane %v3492, 6
    %v3498 = vsel %vm166, %v3497, %v3496
    %v3499 = vpack.c.b16 %v3498, %v3498
    %v3501 = vunpack.c.l.s4 1983009808
    %v3502 = vunpack.c.0.s8 %v3501
    %v3503 = vlaneseq
    %v3504 = vshrl.u32 %v3503, 7
    %v3505 = vsub.s32 %v3502, %v3504
    %v3506 = vrot.slane %v3499, %v3505
    %3507 = vrot.lane.b32.xlu0 %v3506, 46
    %v3508 = vpop.permute.xlu0 %3507
    %3510 = vst.msk [vmem:[%s2363 + $0x4] sm:$0x3] %vm1344, %v3508
    %v3511 = vld [vmem:[%s2277 + $0x4] sm:$0x8]
    %v3512 = vld [vmem:[%s2277 + $0xc] sm:$0x8]
    %v3513 = vld [vmem:[%s2277 + $0x14] sm:$0x8]
    %v3514 = vld [vmem:[%s2277 + $0x1c] sm:$0x8]
    %v3520 = vunpack.c.l.s4 1983009808
    %v3521 = vunpack.c.0.s8 %v3520
    %v3522 = vlaneseq
    %v3523 = vshrl.u32 %v3522, 7
    %v3524 = vsub.s32 %v3521, %v3523
    %v3525 = vrot.slane %v3511, %v3524
    %v3526 = vcombine.high %v3525, %v3525
    %v3528 = vunpack.c.l.s4 1983009808
    %v3529 = vunpack.c.0.s8 %v3528
    %v3530 = vlaneseq
    %v3531 = vshrl.u32 %v3530, 7
    %v3532 = vsub.s32 %v3529, %v3531
    %v3533 = vrot.slane %v3512, %v3532
    %v3534 = vcombine.high %v3533, %v3533
    %v3536 = vunpack.c.l.s4 1983009808
    %v3537 = vunpack.c.0.s8 %v3536
    %v3538 = vlaneseq
    %v3539 = vshrl.u32 %v3538, 7
    %v3540 = vsub.s32 %v3537, %v3539
    %v3541 = vrot.slane %v3513, %v3540
    %v3542 = vcombine.high %v3541, %v3541
    %v3544 = vunpack.c.l.s4 1983009808
    %v3545 = vunpack.c.0.s8 %v3544
    %v3546 = vlaneseq
    %v3547 = vshrl.u32 %v3546, 7
    %v3548 = vsub.s32 %v3545, %v3547
    %v3549 = vrot.slane %v3514, %v3548
    %v3550 = vcombine.high %v3549, %v3549
    %v3552 = vunpack.c.l.s4 1983009808
    %v3553 = vunpack.c.0.s8 %v3552
    %v3554 = vlaneseq
    %v3555 = vshrl.u32 %v3554, 7
    %v3556 = vsub.s32 %v3553, %v3555
    %v3557 = vrot.slane %v3526, %v3556
    %v3559 = vunpack.c.l.s4 1983009808
    %v3560 = vunpack.c.0.s8 %v3559
    %v3561 = vlaneseq
    %v3562 = vshrl.u32 %v3561, 7
    %v3563 = vsub.s32 %v3560, %v3562
    %v3564 = vrot.slane %v3534, %v3563
    %v3566 = vunpack.c.l.s4 1983009808
    %v3567 = vunpack.c.0.s8 %v3566
    %v3568 = vlaneseq
    %v3569 = vshrl.u32 %v3568, 7
    %v3570 = vsub.s32 %v3567, %v3569
    %v3571 = vrot.slane %v3542, %v3570
    %v3573 = vunpack.c.l.s4 1983009808
    %v3574 = vunpack.c.0.s8 %v3573
    %v3575 = vlaneseq
    %v3576 = vshrl.u32 %v3575, 7
    %v3577 = vsub.s32 %v3574, %v3576
    %v3578 = vrot.slane %v3550, %v3577
    %v3579 = vunpack.c.l.b16 %v3557
    %v3580 = vunpack.c.l.b16 %v3564
    %v3581 = vunpack.c.l.b16 %v3571
    %v3582 = vunpack.c.l.b16 %v3578
    %v3583 = vrot.slane %v3579, 2
    %v3584 = vrot.slane %v3580, 1
    %v3585 = vsel %vm160, %v3584, %v3583
    %v3586 = vsel %vm163, %v3581, %v3585
    %v3587 = vrot.slane %v3582, 7
    %v3588 = vsel %vm166, %v3587, %v3586
    %v3589 = vpack.c.b16 %v3588, %v3588
    %v3591 = vunpack.c.l.s4 1983009808
    %v3592 = vunpack.c.0.s8 %v3591
    %v3593 = vlaneseq
    %v3594 = vshrl.u32 %v3593, 7
    %v3595 = vsub.s32 %v3592, %v3594
    %v3596 = vrot.slane %v3589, %v3595
    %3597 = vrot.lane.b32.xlu0 %v3596, 66
    %v3598 = vpop.permute.xlu0 %3597
    %3600 = vst.msk [vmem:[%s2363 + $0x4] sm:$0x3] %vm1435, %v3598
    %v3601 = vld [vmem:[%s2277 + $0x4] sm:$0x8]
    %v3602 = vld [vmem:[%s2277 + $0xc] sm:$0x8]
    %v3603 = vld [vmem:[%s2277 + $0x14] sm:$0x8]
    %v3604 = vld [vmem:[%s2277 + $0x1c] sm:$0x8]
    %v3610 = vunpack.c.l.s4 1983009808
    %v3611 = vunpack.c.0.s8 %v3610
    %v3612 = vlaneseq
    %v3613 = vshrl.u32 %v3612, 7
    %v3614 = vsub.s32 %v3611, %v3613
    %v3615 = vrot.slane %v3601, %v3614
    %v3616 = vcombine.high %v3615, %v3615
    %v3618 = vunpack.c.l.s4 1983009808
    %v3619 = vunpack.c.0.s8 %v3618
    %v3620 = vlaneseq
    %v3621 = vshrl.u32 %v3620, 7
    %v3622 = vsub.s32 %v3619, %v3621
    %v3623 = vrot.slane %v3602, %v3622
    %v3624 = vcombine.high %v3623, %v3623
    %v3626 = vunpack.c.l.s4 1983009808
    %v3627 = vunpack.c.0.s8 %v3626
    %v3628 = vlaneseq
    %v3629 = vshrl.u32 %v3628, 7
    %v3630 = vsub.s32 %v3627, %v3629
    %v3631 = vrot.slane %v3603, %v3630
    %v3632 = vcombine.high %v3631, %v3631
    %v3634 = vunpack.c.l.s4 1983009808
    %v3635 = vunpack.c.0.s8 %v3634
    %v3636 = vlaneseq
    %v3637 = vshrl.u32 %v3636, 7
    %v3638 = vsub.s32 %v3635, %v3637
    %v3639 = vrot.slane %v3604, %v3638
    %v3640 = vcombine.high %v3639, %v3639
    %v3642 = vunpack.c.l.s4 1983009808
    %v3643 = vunpack.c.0.s8 %v3642
    %v3644 = vlaneseq
    %v3645 = vshrl.u32 %v3644, 7
    %v3646 = vsub.s32 %v3643, %v3645
    %v3647 = vrot.slane %v3616, %v3646
    %v3649 = vunpack.c.l.s4 1983009808
    %v3650 = vunpack.c.0.s8 %v3649
    %v3651 = vlaneseq
    %v3652 = vshrl.u32 %v3651, 7
    %v3653 = vsub.s32 %v3650, %v3652
    %v3654 = vrot.slane %v3624, %v3653
    %v3656 = vunpack.c.l.s4 1983009808
    %v3657 = vunpack.c.0.s8 %v3656
    %v3658 = vlaneseq
    %v3659 = vshrl.u32 %v3658, 7
    %v3660 = vsub.s32 %v3657, %v3659
    %v3661 = vrot.slane %v3632, %v3660
    %v3663 = vunpack.c.l.s4 1983009808
    %v3664 = vunpack.c.0.s8 %v3663
    %v3665 = vlaneseq
    %v3666 = vshrl.u32 %v3665, 7
    %v3667 = vsub.s32 %v3664, %v3666
    %v3668 = vrot.slane %v3640, %v3667
    %v3669 = vunpack.c.l.b16 %v3647
    %v3670 = vunpack.c.l.b16 %v3654
    %v3671 = vunpack.c.l.b16 %v3661
    %v3672 = vunpack.c.l.b16 %v3668
    %v3673 = vrot.slane %v3669, 3
    %v3674 = vrot.slane %v3670, 2
    %v3675 = vsel %vm160, %v3674, %v3673
    %v3676 = vrot.slane %v3671, 1
    %v3677 = vsel %vm163, %v3676, %v3675
    %v3678 = vsel %vm166, %v3672, %v3677
    %v3679 = vpack.c.b16 %v3678, %v3678
    %v3681 = vunpack.c.l.s4 1983009808
    %v3682 = vunpack.c.0.s8 %v3681
    %v3683 = vlaneseq
    %v3684 = vshrl.u32 %v3683, 7
    %v3685 = vsub.s32 %v3682, %v3684
    %v3686 = vrot.slane %v3679, %v3685
    %3687 = vrot.lane.b32.xlu0 %v3686, 86
    %v3688 = vpop.permute.xlu0 %3687
    %3690 = vst.msk [vmem:[%s2363 + $0x4] sm:$0x3] %vm1526, %v3688
    %v3691 = vld [vmem:[%s2363] sm:$0x3f]
    %v3693 = vcombine.high %v3691, %v3691
    %v3695 = vunpack.c.l.s4 1983009808
    %v3696 = vunpack.c.0.s8 %v3695
    %v3697 = vlaneseq
    %v3698 = vshrl.u32 %v3697, 7
    %v3699 = vsub.s32 %v3696, %v3698
    %v3700 = vrot.slane %v3691, %v3699
    %v3702 = vunpack.c.l.s4 1983009808
    %v3703 = vunpack.c.0.s8 %v3702
    %v3704 = vlaneseq
    %v3705 = vshrl.u32 %v3704, 7
    %v3706 = vsub.s32 %v3703, %v3705
    %v3707 = vrot.slane %v3693, %v3706
    %3710 = vst [vmem:[#allocation3 + $0xc] sm:$0x33] %v3700
    %3711 = vst.msk [vmem:[#allocation3 + $0x14] sm:$0x3] %vm1548, %v3707
    %v3712 = vld [vmem:[%s2363] sm:$0x3f]
    %v3714 = vcombine.low %v3712, %v3712
    %v3716 = vunpack.c.l.s4 1983009808
    %v3717 = vunpack.c.0.s8 %v3716
    %v3718 = vlaneseq
    %v3719 = vshrl.u32 %v3718, 7
    %v3720 = vsub.s32 %v3717, %v3719
    %v3721 = vrot.slane %v3714, %v3720
    %v3723 = vunpack.c.l.s4 1983009808
    %v3724 = vunpack.c.0.s8 %v3723
    %v3725 = vlaneseq
    %v3726 = vshrl.u32 %v3725, 7
    %v3727 = vsub.s32 %v3724, %v3726
    %v3728 = vrot.slane %v3712, %v3727
    %3729 = vrot.lane.b32.xlu0 %v3721, 127
    %v3730 = vpop.permute.xlu0 %3729
    %3731 = vrot.lane.b32.xlu0 %v3728, 127
    %v3732 = vpop.permute.xlu0 %3731
    %v3733 = vrot.slane %v3730, 4
    %v3734 = vrot.slane %v3732, 4
    %v3735 = vsel %vm1573, %v3733, %v3734
    %v3736 = vsel %vm1575, %v3730, %v3735
    %3739 = vst [vmem:[#allocation3 + $0xc] sm:$0xcc] %v3736
    %3740 = vst.msk [vmem:[#allocation3 + $0x14] sm:$0xc] %vm1580, %v3732
    %v3741 = vld [vmem:[%s2363] sm:$0x3f]
    %v3743 = vcombine.high %v3741, %v3741
    %v3745 = vunpack.c.l.s4 1983009808
    %v3746 = vunpack.c.0.s8 %v3745
    %v3747 = vlaneseq
    %v3748 = vshrl.u32 %v3747, 7
    %v3749 = vsub.s32 %v3746, %v3748
    %v3750 = vrot.slane %v3741, %v3749
    %v3752 = vunpack.c.l.s4 1983009808
    %v3753 = vunpack.c.0.s8 %v3752
    %v3754 = vlaneseq
    %v3755 = vshrl.u32 %v3754, 7
    %v3756 = vsub.s32 %v3753, %v3755
    %v3757 = vrot.slane %v3743, %v3756
    %3758 = vrot.lane.b32.xlu0 %v3750, 126
    %v3759 = vpop.permute.xlu0 %3758
    %3760 = vrot.lane.b32.xlu0 %v3757, 126
    %v3761 = vpop.permute.xlu0 %3760
    %v3762 = vrot.slane %v3759, 4
    %v3763 = vrot.slane %v3761, 4
    %v3764 = vsel %vm1573, %v3762, %v3763
    %v3765 = vsel %vm1606, %v3759, %v3764
    %3768 = vst [vmem:[#allocation3 + $0x24] sm:$0x33] %v3765
    %3769 = vst.msk [vmem:[#allocation3 + $0x2c] sm:$0x3] %vm1548, %v3761
    %v3770 = vld [vmem:[%s2363] sm:$0x3f]
    %v3772 = vcombine.low %v3770, %v3770
    %v3774 = vunpack.c.l.s4 1983009808
    %v3775 = vunpack.c.0.s8 %v3774
    %v3776 = vlaneseq
    %v3777 = vshrl.u32 %v3776, 7
    %v3778 = vsub.s32 %v3775, %v3777
    %v3779 = vrot.slane %v3772, %v3778
    %v3781 = vunpack.c.l.s4 1983009808
    %v3782 = vunpack.c.0.s8 %v3781
    %v3783 = vlaneseq
    %v3784 = vshrl.u32 %v3783, 7
    %v3785 = vsub.s32 %v3782, %v3784
    %v3786 = vrot.slane %v3770, %v3785
    %3787 = vrot.lane.b32.xlu0 %v3779, 125
    %v3788 = vpop.permute.xlu0 %3787
    %3789 = vrot.lane.b32.xlu0 %v3786, 125
    %v3790 = vpop.permute.xlu0 %3789
    %v3791 = vrot.slane %v3788, 4
    %v3792 = vrot.slane %v3790, 4
    %v3793 = vsel %vm1573, %v3791, %v3792
    %v3794 = vsel %vm1636, %v3788, %v3793
    %3797 = vst [vmem:[#allocation3 + $0x24] sm:$0xcc] %v3794
    %3798 = vst.msk [vmem:[#allocation3 + $0x2c] sm:$0xc] %vm1580, %v3790
    %v3799 = vld [vmem:[%s2363] sm:$0x3f]
    %v3801 = vcombine.high %v3799, %v3799
    %v3803 = vunpack.c.l.s4 1983009808
    %v3804 = vunpack.c.0.s8 %v3803
    %v3805 = vlaneseq
    %v3806 = vshrl.u32 %v3805, 7
    %v3807 = vsub.s32 %v3804, %v3806
    %v3808 = vrot.slane %v3799, %v3807
    %v3810 = vunpack.c.l.s4 1983009808
    %v3811 = vunpack.c.0.s8 %v3810
    %v3812 = vlaneseq
    %v3813 = vshrl.u32 %v3812, 7
    %v3814 = vsub.s32 %v3811, %v3813
    %v3815 = vrot.slane %v3801, %v3814
    %3816 = vrot.lane.b32.xlu0 %v3808, 124
    %v3817 = vpop.permute.xlu0 %3816
    %3818 = vrot.lane.b32.xlu0 %v3815, 124
    %v3819 = vpop.permute.xlu0 %3818
    %v3820 = vrot.slane %v3817, 4
    %v3821 = vrot.slane %v3819, 4
    %v3822 = vsel %vm1573, %v3820, %v3821
    %v3823 = vsel %vm1666, %v3817, %v3822
    %3826 = vst [vmem:[#allocation3 + $0x3c] sm:$0x33] %v3823
    %3827 = vst.msk [vmem:[#allocation3 + $0x44] sm:$0x3] %vm1548, %v3819
    %v3828 = vld [vmem:[%s2363] sm:$0x3f]
    %v3830 = vcombine.low %v3828, %v3828
    %v3832 = vunpack.c.l.s4 1983009808
    %v3833 = vunpack.c.0.s8 %v3832
    %v3834 = vlaneseq
    %v3835 = vshrl.u32 %v3834, 7
    %v3836 = vsub.s32 %v3833, %v3835
    %v3837 = vrot.slane %v3830, %v3836
    %v3839 = vunpack.c.l.s4 1983009808
    %v3840 = vunpack.c.0.s8 %v3839
    %v3841 = vlaneseq
    %v3842 = vshrl.u32 %v3841, 7
    %v3843 = vsub.s32 %v3840, %v3842
    %v3844 = vrot.slane %v3828, %v3843
    %3845 = vrot.lane.b32.xlu0 %v3837, 108
    %v3846 = vpop.permute.xlu0 %3845
    %3847 = vrot.lane.b32.xlu0 %v3844, 108
    %v3848 = vpop.permute.xlu0 %3847
    %v3849 = vrot.slane %v3846, 4
    %v3850 = vrot.slane %v3848, 4
    %v3851 = vsel %vm1573, %v3849, %v3850
    %v3852 = vsel %vm1696, %v3846, %v3851
    %3855 = vst [vmem:[#allocation3 + $0x3c] sm:$0xcc] %v3852
    %3856 = vst.msk [vmem:[#allocation3 + $0x44] sm:$0xc] %vm1580, %v3848
    %v3857 = vld [vmem:[%s2363] sm:$0x3f]
    %v3859 = vcombine.high %v3857, %v3857
    %v3861 = vunpack.c.l.s4 1983009808
    %v3862 = vunpack.c.0.s8 %v3861
    %v3863 = vlaneseq
    %v3864 = vshrl.u32 %v3863, 7
    %v3865 = vsub.s32 %v3862, %v3864
    %v3866 = vrot.slane %v3857, %v3865
    %v3868 = vunpack.c.l.s4 1983009808
    %v3869 = vunpack.c.0.s8 %v3868
    %v3870 = vlaneseq
    %v3871 = vshrl.u32 %v3870, 7
    %v3872 = vsub.s32 %v3869, %v3871
    %v3873 = vrot.slane %v3859, %v3872
    %3874 = vrot.lane.b32.xlu0 %v3866, 107
    %v3875 = vpop.permute.xlu0 %3874
    %3876 = vrot.lane.b32.xlu0 %v3873, 107
    %v3877 = vpop.permute.xlu0 %3876
    %v3878 = vrot.slane %v3875, 4
    %v3879 = vrot.slane %v3877, 4
    %v3880 = vsel %vm1573, %v3878, %v3879
    %v3881 = vsel %vm1726, %v3875, %v3880
    %3884 = vst [vmem:[#allocation3 + $0x54] sm:$0x33] %v3881
    %3885 = vst.msk [vmem:[#allocation3 + $0x5c] sm:$0x3] %vm1548, %v3877
    %v3886 = vld [vmem:[%s2363] sm:$0x3f]
    %v3888 = vcombine.low %v3886, %v3886
    %v3890 = vunpack.c.l.s4 1983009808
    %v3891 = vunpack.c.0.s8 %v3890
    %v3892 = vlaneseq
    %v3893 = vshrl.u32 %v3892, 7
    %v3894 = vsub.s32 %v3891, %v3893
    %v3895 = vrot.slane %v3888, %v3894
    %v3897 = vunpack.c.l.s4 1983009808
    %v3898 = vunpack.c.0.s8 %v3897
    %v3899 = vlaneseq
    %v3900 = vshrl.u32 %v3899, 7
    %v3901 = vsub.s32 %v3898, %v3900
    %v3902 = vrot.slane %v3886, %v3901
    %3903 = vrot.lane.b32.xlu0 %v3895, 106
    %v3904 = vpop.permute.xlu0 %3903
    %3905 = vrot.lane.b32.xlu0 %v3902, 106
    %v3906 = vpop.permute.xlu0 %3905
    %v3907 = vrot.slane %v3904, 4
    %v3908 = vrot.slane %v3906, 4
    %v3909 = vsel %vm1573, %v3907, %v3908
    %v3910 = vsel %vm1756, %v3904, %v3909
    %3913 = vst [vmem:[#allocation3 + $0x54] sm:$0xcc] %v3910
    %3914 = vst.msk [vmem:[#allocation3 + $0x5c] sm:$0xc] %vm1580, %v3906
    %v3915 = vld [vmem:[%s2363] sm:$0x3f]
    %v3917 = vcombine.high %v3915, %v3915
    %v3919 = vunpack.c.l.s4 1983009808
    %v3920 = vunpack.c.0.s8 %v3919
    %v3921 = vlaneseq
    %v3922 = vshrl.u32 %v3921, 7
    %v3923 = vsub.s32 %v3920, %v3922
    %v3924 = vrot.slane %v3915, %v3923
    %v3926 = vunpack.c.l.s4 1983009808
    %v3927 = vunpack.c.0.s8 %v3926
    %v3928 = vlaneseq
    %v3929 = vshrl.u32 %v3928, 7
    %v3930 = vsub.s32 %v3927, %v3929
    %v3931 = vrot.slane %v3917, %v3930
    %3932 = vrot.lane.b32.xlu0 %v3924, 105
    %v3933 = vpop.permute.xlu0 %3932
    %3934 = vrot.lane.b32.xlu0 %v3931, 105
    %v3935 = vpop.permute.xlu0 %3934
    %v3936 = vrot.slane %v3933, 4
    %v3937 = vrot.slane %v3935, 4
    %v3938 = vsel %vm1573, %v3936, %v3937
    %v3939 = vsel %vm1786, %v3933, %v3938
    %3942 = vst [vmem:[#allocation3 + $0x6c] sm:$0x33] %v3939
    %3943 = vst.msk [vmem:[#allocation3 + $0x74] sm:$0x3] %vm1548, %v3935
    %v3944 = vld [vmem:[%s2363] sm:$0x3f]
    %v3946 = vcombine.low %v3944, %v3944
    %v3948 = vunpack.c.l.s4 1983009808
    %v3949 = vunpack.c.0.s8 %v3948
    %v3950 = vlaneseq
    %v3951 = vshrl.u32 %v3950, 7
    %v3952 = vsub.s32 %v3949, %v3951
    %v3953 = vrot.slane %v3946, %v3952
    %v3955 = vunpack.c.l.s4 1983009808
    %v3956 = vunpack.c.0.s8 %v3955
    %v3957 = vlaneseq
    %v3958 = vshrl.u32 %v3957, 7
    %v3959 = vsub.s32 %v3956, %v3958
    %v3960 = vrot.slane %v3944, %v3959
    %3961 = vrot.lane.b32.xlu0 %v3953, 104
    %v3962 = vpop.permute.xlu0 %3961
    %3963 = vrot.lane.b32.xlu0 %v3960, 104
    %v3964 = vpop.permute.xlu0 %3963
    %v3965 = vrot.slane %v3962, 4
    %v3966 = vrot.slane %v3964, 4
    %v3967 = vsel %vm1573, %v3965, %v3966
    %v3968 = vsel %vm1816, %v3962, %v3967
    %3971 = vst [vmem:[#allocation3 + $0x6c] sm:$0xcc] %v3968
    %3972 = vst.msk [vmem:[#allocation3 + $0x74] sm:$0xc] %vm1580, %v3964
    %v3973 = vld [vmem:[%s2363] sm:$0x3f]
    %v3975 = vcombine.high %v3973, %v3973
    %v3977 = vunpack.c.l.s4 1983009808
    %v3978 = vunpack.c.0.s8 %v3977
    %v3979 = vlaneseq
    %v3980 = vshrl.u32 %v3979, 7
    %v3981 = vsub.s32 %v3978, %v3980
    %v3982 = vrot.slane %v3973, %v3981
    %v3984 = vunpack.c.l.s4 1983009808
    %v3985 = vunpack.c.0.s8 %v3984
    %v3986 = vlaneseq
    %v3987 = vshrl.u32 %v3986, 7
    %v3988 = vsub.s32 %v3985, %v3987
    %v3989 = vrot.slane %v3975, %v3988
    %3990 = vrot.lane.b32.xlu0 %v3982, 88
    %v3991 = vpop.permute.xlu0 %3990
    %3992 = vrot.lane.b32.xlu0 %v3989, 88
    %v3993 = vpop.permute.xlu0 %3992
    %v3994 = vrot.slane %v3991, 4
    %v3995 = vrot.slane %v3993, 4
    %v3996 = vsel %vm1573, %v3994, %v3995
    %v3997 = vsel %vm1846, %v3991, %v3996
    %4000 = vst [vmem:[#allocation3 + $0x84] sm:$0x33] %v3997
    %4001 = vst.msk [vmem:[#allocation3 + $0x8c] sm:$0x3] %vm1548, %v3993
    %v4002 = vld [vmem:[%s2363] sm:$0x3f]
    %v4004 = vcombine.low %v4002, %v4002
    %v4006 = vunpack.c.l.s4 1983009808
    %v4007 = vunpack.c.0.s8 %v4006
    %v4008 = vlaneseq
    %v4009 = vshrl.u32 %v4008, 7
    %v4010 = vsub.s32 %v4007, %v4009
    %v4011 = vrot.slane %v4004, %v4010
    %v4013 = vunpack.c.l.s4 1983009808
    %v4014 = vunpack.c.0.s8 %v4013
    %v4015 = vlaneseq
    %v4016 = vshrl.u32 %v4015, 7
    %v4017 = vsub.s32 %v4014, %v4016
    %v4018 = vrot.slane %v4002, %v4017
    %4019 = vrot.lane.b32.xlu0 %v4011, 87
    %v4020 = vpop.permute.xlu0 %4019
    %4021 = vrot.lane.b32.xlu0 %v4018, 87
    %v4022 = vpop.permute.xlu0 %4021
    %v4023 = vrot.slane %v4020, 4
    %v4024 = vrot.slane %v4022, 4
    %v4025 = vsel %vm1573, %v4023, %v4024
    %v4026 = vsel %vm1876, %v4020, %v4025
    %4029 = vst [vmem:[#allocation3 + $0x84] sm:$0xcc] %v4026
    %4030 = vst.msk [vmem:[#allocation3 + $0x8c] sm:$0xc] %vm1580, %v4022
    %v4031 = vld [vmem:[%s2363] sm:$0x3f]
    %v4033 = vcombine.high %v4031, %v4031
    %v4035 = vunpack.c.l.s4 1983009808
    %v4036 = vunpack.c.0.s8 %v4035
    %v4037 = vlaneseq
    %v4038 = vshrl.u32 %v4037, 7
    %v4039 = vsub.s32 %v4036, %v4038
    %v4040 = vrot.slane %v4031, %v4039
    %v4042 = vunpack.c.l.s4 1983009808
    %v4043 = vunpack.c.0.s8 %v4042
    %v4044 = vlaneseq
    %v4045 = vshrl.u32 %v4044, 7
    %v4046 = vsub.s32 %v4043, %v4045
    %v4047 = vrot.slane %v4033, %v4046
    %4048 = vrot.lane.b32.xlu0 %v4040, 86
    %v4049 = vpop.permute.xlu0 %4048
    %4050 = vrot.lane.b32.xlu0 %v4047, 86
    %v4051 = vpop.permute.xlu0 %4050
    %v4052 = vrot.slane %v4049, 4
    %v4053 = vrot.slane %v4051, 4
    %v4054 = vsel %vm1573, %v4052, %v4053
    %v4055 = vsel %vm1906, %v4049, %v4054
    %4058 = vst [vmem:[#allocation3 + $0x9c] sm:$0x33] %v4055
    %4059 = vst.msk [vmem:[#allocation3 + $0xa4] sm:$0x3] %vm1548, %v4051
    %v4060 = vld [vmem:[%s2363] sm:$0x3f]
    %v4062 = vcombine.low %v4060, %v4060
    %v4064 = vunpack.c.l.s4 1983009808
    %v4065 = vunpack.c.0.s8 %v4064
    %v4066 = vlaneseq
    %v4067 = vshrl.u32 %v4066, 7
    %v4068 = vsub.s32 %v4065, %v4067
    %v4069 = vrot.slane %v4062, %v4068
    %v4071 = vunpack.c.l.s4 1983009808
    %v4072 = vunpack.c.0.s8 %v4071
    %v4073 = vlaneseq
    %v4074 = vshrl.u32 %v4073, 7
    %v4075 = vsub.s32 %v4072, %v4074
    %v4076 = vrot.slane %v4060, %v4075
    %4077 = vrot.lane.b32.xlu0 %v4069, 85
    %v4078 = vpop.permute.xlu0 %4077
    %4079 = vrot.lane.b32.xlu0 %v4076, 85
    %v4080 = vpop.permute.xlu0 %4079
    %v4081 = vrot.slane %v4078, 4
    %v4082 = vrot.slane %v4080, 4
    %v4083 = vsel %vm1573, %v4081, %v4082
    %v4084 = vsel %vm1936, %v4078, %v4083
    %4087 = vst [vmem:[#allocation3 + $0x9c] sm:$0xcc] %v4084
    %4088 = vst.msk [vmem:[#allocation3 + $0xa4] sm:$0xc] %vm1580, %v4080
    %v4089 = vld [vmem:[%s2363] sm:$0x3f]
    %v4091 = vcombine.high %v4089, %v4089
    %v4093 = vunpack.c.l.s4 1983009808
    %v4094 = vunpack.c.0.s8 %v4093
    %v4095 = vlaneseq
    %v4096 = vshrl.u32 %v4095, 7
    %v4097 = vsub.s32 %v4094, %v4096
    %v4098 = vrot.slane %v4089, %v4097
    %v4100 = vunpack.c.l.s4 1983009808
    %v4101 = vunpack.c.0.s8 %v4100
    %v4102 = vlaneseq
    %v4103 = vshrl.u32 %v4102, 7
    %v4104 = vsub.s32 %v4101, %v4103
    %v4105 = vrot.slane %v4091, %v4104
    %4106 = vrot.lane.b32.xlu0 %v4098, 84
    %v4107 = vpop.permute.xlu0 %4106
    %4108 = vrot.lane.b32.xlu0 %v4105, 84
    %v4109 = vpop.permute.xlu0 %4108
    %v4110 = vrot.slane %v4107, 4
    %v4111 = vrot.slane %v4109, 4
    %v4112 = vsel %vm1573, %v4110, %v4111
    %v4113 = vsel %vm1966, %v4107, %v4112
    %4116 = vst [vmem:[#allocation3 + $0xb4] sm:$0x33] %v4113
    %4117 = vst.msk [vmem:[#allocation3 + $0xbc] sm:$0x3] %vm1548, %v4109
    %v4118 = vld [vmem:[%s2363] sm:$0x3f]
    %v4120 = vcombine.low %v4118, %v4118
    %v4122 = vunpack.c.l.s4 1983009808
    %v4123 = vunpack.c.0.s8 %v4122
    %v4124 = vlaneseq
    %v4125 = vshrl.u32 %v4124, 7
    %v4126 = vsub.s32 %v4123, %v4125
    %v4127 = vrot.slane %v4120, %v4126
    %v4129 = vunpack.c.l.s4 1983009808
    %v4130 = vunpack.c.0.s8 %v4129
    %v4131 = vlaneseq
    %v4132 = vshrl.u32 %v4131, 7
    %v4133 = vsub.s32 %v4130, %v4132
    %v4134 = vrot.slane %v4118, %v4133
    %4135 = vrot.lane.b32.xlu0 %v4127, 68
    %v4136 = vpop.permute.xlu0 %4135
    %4137 = vrot.lane.b32.xlu0 %v4134, 68
    %v4138 = vpop.permute.xlu0 %4137
    %v4139 = vrot.slane %v4136, 4
    %v4140 = vrot.slane %v4138, 4
    %v4141 = vsel %vm1573, %v4139, %v4140
    %v4142 = vsel %vm1996, %v4136, %v4141
    %4145 = vst [vmem:[#allocation3 + $0xb4] sm:$0xcc] %v4142
    %4146 = vst.msk [vmem:[#allocation3 + $0xbc] sm:$0xc] %vm1580, %v4138
    %v4147 = vld [vmem:[%s2363] sm:$0x3f]
    %v4149 = vcombine.high %v4147, %v4147
    %v4151 = vunpack.c.l.s4 1983009808
    %v4152 = vunpack.c.0.s8 %v4151
    %v4153 = vlaneseq
    %v4154 = vshrl.u32 %v4153, 7
    %v4155 = vsub.s32 %v4152, %v4154
    %v4156 = vrot.slane %v4147, %v4155
    %v4158 = vunpack.c.l.s4 1983009808
    %v4159 = vunpack.c.0.s8 %v4158
    %v4160 = vlaneseq
    %v4161 = vshrl.u32 %v4160, 7
    %v4162 = vsub.s32 %v4159, %v4161
    %v4163 = vrot.slane %v4149, %v4162
    %4164 = vrot.lane.b32.xlu0 %v4156, 67
    %v4165 = vpop.permute.xlu0 %4164
    %4166 = vrot.lane.b32.xlu0 %v4163, 67
    %v4167 = vpop.permute.xlu0 %4166
    %v4168 = vrot.slane %v4165, 4
    %v4169 = vrot.slane %v4167, 4
    %v4170 = vsel %vm1573, %v4168, %v4169
    %v4171 = vsel %vm2026, %v4165, %v4170
    %4174 = vst [vmem:[#allocation3 + $0xcc] sm:$0x33] %v4171
    %4175 = vst.msk [vmem:[#allocation3 + $0xd4] sm:$0x3] %vm1548, %v4167
    %v4176 = vld [vmem:[%s2363] sm:$0x3f]
    %v4178 = vcombine.low %v4176, %v4176
    %v4180 = vunpack.c.l.s4 1983009808
    %v4181 = vunpack.c.0.s8 %v4180
    %v4182 = vlaneseq
    %v4183 = vshrl.u32 %v4182, 7
    %v4184 = vsub.s32 %v4181, %v4183
    %v4185 = vrot.slane %v4178, %v4184
    %v4187 = vunpack.c.l.s4 1983009808
    %v4188 = vunpack.c.0.s8 %v4187
    %v4189 = vlaneseq
    %v4190 = vshrl.u32 %v4189, 7
    %v4191 = vsub.s32 %v4188, %v4190
    %v4192 = vrot.slane %v4176, %v4191
    %4193 = vrot.lane.b32.xlu0 %v4185, 66
    %v4194 = vpop.permute.xlu0 %4193
    %4195 = vrot.lane.b32.xlu0 %v4192, 66
    %v4196 = vpop.permute.xlu0 %4195
    %v4197 = vrot.slane %v4194, 4
    %v4198 = vrot.slane %v4196, 4
    %v4199 = vsel %vm1573, %v4197, %v4198
    %v4200 = vsel %vm2056, %v4194, %v4199
    %4203 = vst [vmem:[#allocation3 + $0xcc] sm:$0xcc] %v4200
    %4204 = vst.msk [vmem:[#allocation3 + $0xd4] sm:$0xc] %vm1580, %v4196
    %v4205 = vld [vmem:[%s2363] sm:$0x3f]
    %v4207 = vcombine.high %v4205, %v4205
    %v4209 = vunpack.c.l.s4 1983009808
    %v4210 = vunpack.c.0.s8 %v4209
    %v4211 = vlaneseq
    %v4212 = vshrl.u32 %v4211, 7
    %v4213 = vsub.s32 %v4210, %v4212
    %v4214 = vrot.slane %v4205, %v4213
    %v4216 = vunpack.c.l.s4 1983009808
    %v4217 = vunpack.c.0.s8 %v4216
    %v4218 = vlaneseq
    %v4219 = vshrl.u32 %v4218, 7
    %v4220 = vsub.s32 %v4217, %v4219
    %v4221 = vrot.slane %v4207, %v4220
    %4222 = vrot.lane.b32.xlu0 %v4214, 65
    %v4223 = vpop.permute.xlu0 %4222
    %4224 = vrot.lane.b32.xlu0 %v4221, 65
    %v4225 = vpop.permute.xlu0 %4224
    %v4226 = vrot.slane %v4223, 4
    %v4227 = vrot.slane %v4225, 4
    %v4228 = vsel %vm1573, %v4226, %v4227
    %v4229 = vsel %vm2086, %v4223, %v4228
    %4232 = vst [vmem:[#allocation3 + $0xe4] sm:$0x33] %v4229
    %4233 = vst.msk [vmem:[#allocation3 + $0xec] sm:$0x3] %vm1548, %v4225
    %v4234 = vld [vmem:[%s2363] sm:$0x3f]
    %v4236 = vcombine.low %v4234, %v4234
    %v4238 = vunpack.c.l.s4 1983009808
    %v4239 = vunpack.c.0.s8 %v4238
    %v4240 = vlaneseq
    %v4241 = vshrl.u32 %v4240, 7
    %v4242 = vsub.s32 %v4239, %v4241
    %v4243 = vrot.slane %v4236, %v4242
    %v4245 = vunpack.c.l.s4 1983009808
    %v4246 = vunpack.c.0.s8 %v4245
    %v4247 = vlaneseq
    %v4248 = vshrl.u32 %v4247, 7
    %v4249 = vsub.s32 %v4246, %v4248
    %v4250 = vrot.slane %v4234, %v4249
    %4251 = vrot.lane.b32.xlu0 %v4243, 64
    %v4252 = vpop.permute.xlu0 %4251
    %4253 = vrot.lane.b32.xlu0 %v4250, 64
    %v4254 = vpop.permute.xlu0 %4253
    %v4255 = vrot.slane %v4252, 4
    %v4256 = vrot.slane %v4254, 4
    %v4257 = vsel %vm1573, %v4255, %v4256
    %v4258 = vsel %vm2116, %v4252, %v4257
    %4261 = vst [vmem:[#allocation3 + $0xe4] sm:$0xcc] %v4258
    %4262 = vst.msk [vmem:[#allocation3 + $0xec] sm:$0xc] %vm1580, %v4254
    %v4263 = vld [vmem:[%s2363] sm:$0xff]
    %v4265 = vcombine.high %v4263, %v4263
    %v4267 = vunpack.c.l.s4 1983009808
    %v4268 = vunpack.c.0.s8 %v4267
    %v4269 = vlaneseq
    %v4270 = vshrl.u32 %v4269, 7
    %v4271 = vsub.s32 %v4268, %v4270
    %v4272 = vrot.slane %v4263, %v4271
    %v4274 = vunpack.c.l.s4 1983009808
    %v4275 = vunpack.c.0.s8 %v4274
    %v4276 = vlaneseq
    %v4277 = vshrl.u32 %v4276, 7
    %v4278 = vsub.s32 %v4275, %v4277
    %v4279 = vrot.slane %v4265, %v4278
    %4280 = vrot.lane.b32.xlu0 %v4272, 48
    %v4281 = vpop.permute.xlu0 %4280
    %4282 = vrot.lane.b32.xlu0 %v4279, 48
    %v4283 = vpop.permute.xlu0 %4282
    %v4284 = vrot.slane %v4281, 4
    %v4285 = vrot.slane %v4283, 4
    %v4286 = vsel %vm1573, %v4284, %v4285
    %v4287 = vsel %vm2146, %v4281, %v4286
    %v4288 = vsel %vm2146, %v4283, %v4285
    %4291 = vst [vmem:[#allocation3 + $0xfc] sm:$0x33] %v4287
    %4292 = vst.msk [vmem:[#allocation3 + $0x104] sm:$0x3] %vm1548, %v4288
    %v4293 = vld [vmem:[%s2363] sm:$0xff]
    %v4295 = vcombine.low %v4293, %v4293
    %v4297 = vunpack.c.l.s4 1983009808
    %v4298 = vunpack.c.0.s8 %v4297
    %v4299 = vlaneseq
    %v4300 = vshrl.u32 %v4299, 7
    %v4301 = vsub.s32 %v4298, %v4300
    %v4302 = vrot.slane %v4295, %v4301
    %v4304 = vunpack.c.l.s4 1983009808
    %v4305 = vunpack.c.0.s8 %v4304
    %v4306 = vlaneseq
    %v4307 = vshrl.u32 %v4306, 7
    %v4308 = vsub.s32 %v4305, %v4307
    %v4309 = vrot.slane %v4293, %v4308
    %4310 = vrot.lane.b32.xlu0 %v4302, 47
    %v4311 = vpop.permute.xlu0 %4310
    %4312 = vrot.lane.b32.xlu0 %v4309, 47
    %v4313 = vpop.permute.xlu0 %4312
    %v4314 = vrot.slane %v4311, 4
    %v4315 = vrot.slane %v4313, 4
    %v4316 = vsel %vm1573, %v4314, %v4315
    %v4317 = vsel %vm2177, %v4311, %v4316
    %v4318 = vsel %vm2177, %v4313, %v4315
    %4321 = vst [vmem:[#allocation3 + $0xfc] sm:$0xcc] %v4317
    %4322 = vst.msk [vmem:[#allocation3 + $0x104] sm:$0xc] %vm1580, %v4318
    %v4323 = vld [vmem:[%s2363] sm:$0xff]
    %v4325 = vcombine.high %v4323, %v4323
    %v4327 = vunpack.c.l.s4 1983009808
    %v4328 = vunpack.c.0.s8 %v4327
    %v4329 = vlaneseq
    %v4330 = vshrl.u32 %v4329, 7
    %v4331 = vsub.s32 %v4328, %v4330
    %v4332 = vrot.slane %v4323, %v4331
    %v4334 = vunpack.c.l.s4 1983009808
    %v4335 = vunpack.c.0.s8 %v4334
    %v4336 = vlaneseq
    %v4337 = vshrl.u32 %v4336, 7
    %v4338 = vsub.s32 %v4335, %v4337
    %v4339 = vrot.slane %v4325, %v4338
    %4340 = vrot.lane.b32.xlu0 %v4332, 46
    %v4341 = vpop.permute.xlu0 %4340
    %4342 = vrot.lane.b32.xlu0 %v4339, 46
    %v4343 = vpop.permute.xlu0 %4342
    %v4344 = vrot.slane %v4341, 4
    %v4345 = vrot.slane %v4343, 4
    %v4346 = vsel %vm1573, %v4344, %v4345
    %v4347 = vsel %vm2208, %v4341, %v4346
    %v4348 = vsel %vm2208, %v4343, %v4345
    %4351 = vst [vmem:[#allocation3 + $0x114] sm:$0x33] %v4347
    %4352 = vst.msk [vmem:[#allocation3 + $0x11c] sm:$0x3] %vm1548, %v4348
    %v4353 = vld [vmem:[%s2363] sm:$0xff]
    %v4355 = vcombine.low %v4353, %v4353
    %v4357 = vunpack.c.l.s4 1983009808
    %v4358 = vunpack.c.0.s8 %v4357
    %v4359 = vlaneseq
    %v4360 = vshrl.u32 %v4359, 7
    %v4361 = vsub.s32 %v4358, %v4360
    %v4362 = vrot.slane %v4355, %v4361
    %v4364 = vunpack.c.l.s4 1983009808
    %v4365 = vunpack.c.0.s8 %v4364
    %v4366 = vlaneseq
    %v4367 = vshrl.u32 %v4366, 7
    %v4368 = vsub.s32 %v4365, %v4367
    %v4369 = vrot.slane %v4353, %v4368
    %4370 = vrot.lane.b32.xlu0 %v4362, 45
    %v4371 = vpop.permute.xlu0 %4370
    %4372 = vrot.lane.b32.xlu0 %v4369, 45
    %v4373 = vpop.permute.xlu0 %4372
    %v4374 = vrot.slane %v4371, 4
    %v4375 = vrot.slane %v4373, 4
    %v4376 = vsel %vm1573, %v4374, %v4375
    %v4377 = vsel %vm2239, %v4371, %v4376
    %v4378 = vsel %vm2239, %v4373, %v4375
    %4381 = vst [vmem:[#allocation3 + $0x114] sm:$0xcc] %v4377
    %4382 = vst.msk [vmem:[#allocation3 + $0x11c] sm:$0xc] %vm1580, %v4378
    %v4383 = vld [vmem:[%s2363] sm:$0xff]
    %v4385 = vcombine.high %v4383, %v4383
    %v4387 = vunpack.c.l.s4 1983009808
    %v4388 = vunpack.c.0.s8 %v4387
    %v4389 = vlaneseq
    %v4390 = vshrl.u32 %v4389, 7
    %v4391 = vsub.s32 %v4388, %v4390
    %v4392 = vrot.slane %v4383, %v4391
    %v4394 = vunpack.c.l.s4 1983009808
    %v4395 = vunpack.c.0.s8 %v4394
    %v4396 = vlaneseq
    %v4397 = vshrl.u32 %v4396, 7
    %v4398 = vsub.s32 %v4395, %v4397
    %v4399 = vrot.slane %v4385, %v4398
    %4400 = vrot.lane.b32.xlu0 %v4392, 44
    %v4401 = vpop.permute.xlu0 %4400
    %4402 = vrot.lane.b32.xlu0 %v4399, 44
    %v4403 = vpop.permute.xlu0 %4402
    %v4404 = vrot.slane %v4401, 4
    %v4405 = vrot.slane %v4403, 4
    %v4406 = vsel %vm1573, %v4404, %v4405
    %v4407 = vsel %vm2270, %v4401, %v4406
    %v4408 = vsel %vm2270, %v4403, %v4405
    %4411 = vst [vmem:[#allocation3 + $0x12c] sm:$0x33] %v4407
    %4412 = vst.msk [vmem:[#allocation3 + $0x134] sm:$0x3] %vm1548, %v4408
    %v4413 = vld [vmem:[#allocation7] sm:$0xf]
    %v4414 = vld [vmem:[#allocation3] sm:$0xff]
    %v4415 = vld [vmem:[#allocation3 + $0x8] sm:$0xff]
    %v4416 = vld [vmem:[#allocation3 + $0x10] sm:$0xff]
    %v4417 = vld [vmem:[#allocation3 + $0x18] sm:$0xff]
    %v4418 = vld [vmem:[#allocation3 + $0x20] sm:$0xff]
    %v4419 = vld [vmem:[#allocation3 + $0x28] sm:$0xff]
    %v4420 = vld [vmem:[#allocation3 + $0x30] sm:$0xff]
    %v4421 = vld [vmem:[#allocation3 + $0x38] sm:$0xff]
    %v4422 = vld [vmem:[#allocation3 + $0x40] sm:$0xff]
    %v4423 = vld [vmem:[#allocation3 + $0x48] sm:$0xff]
    %v4424 = vld [vmem:[#allocation3 + $0x50] sm:$0xff]
    %v4425 = vld [vmem:[#allocation3 + $0x58] sm:$0xff]
    %v4426 = vld [vmem:[#allocation3 + $0x60] sm:$0xff]
    %v4427 = vld [vmem:[#allocation3 + $0x68] sm:$0xff]
    %v4428 = vld [vmem:[#allocation3 + $0x70] sm:$0xff]
    %v4429 = vld [vmem:[#allocation3 + $0x78] sm:$0xff]
    %v4430 = vld [vmem:[#allocation3 + $0x80] sm:$0xff]
    %v4431 = vld [vmem:[#allocation3 + $0x88] sm:$0xff]
    %v4432 = vld [vmem:[#allocation3 + $0x90] sm:$0xff]
    %v4433 = vld [vmem:[#allocation3 + $0x98] sm:$0xff]
    %v4434 = vld [vmem:[#allocation3 + $0xa0] sm:$0xff]
    %v4435 = vld [vmem:[#allocation3 + $0xa8] sm:$0xff]
    %v4436 = vld [vmem:[#allocation3 + $0xb0] sm:$0xff]
    %v4437 = vld [vmem:[#allocation3 + $0xb8] sm:$0xff]
    %v4438 = vld [vmem:[#allocation3 + $0xc0] sm:$0xff]
    %v4439 = vld [vmem:[#allocation3 + $0xc8] sm:$0xff]
    %v4440 = vld [vmem:[#allocation3 + $0xd0] sm:$0xff]
    %v4441 = vld [vmem:[#allocation3 + $0xd8] sm:$0xff]
    %v4442 = vld [vmem:[#allocation3 + $0xe0] sm:$0xff]
    %v4443 = vld [vmem:[#allocation3 + $0xe8] sm:$0xff]
    %v4444 = vld [vmem:[#allocation3 + $0xf0] sm:$0xff]
    %v4445 = vld [vmem:[#allocation3 + $0xf8] sm:$0xff]
    %v4446 = vld [vmem:[#allocation3 + $0x100] sm:$0xff]
    %v4447 = vld [vmem:[#allocation3 + $0x108] sm:$0xff]
    %v4448 = vld [vmem:[#allocation3 + $0x110] sm:$0xff]
    %v4449 = vld [vmem:[#allocation3 + $0x118] sm:$0xff]
    %v4450 = vld [vmem:[#allocation3 + $0x120] sm:$0xff]
    %v4451 = vld [vmem:[#allocation3 + $0x128] sm:$0xff]
    %v4452 = vld [vmem:[#allocation3 + $0x130] sm:$0xff]
    %v4492 = vunpack.c.l.b16 %v4414
    %v4493 = vunpack.c.h.b16 %v4414
    %v4494 = vunpack.c.l.b16 %v4415
    %v4495 = vunpack.c.h.b16 %v4415
    %v4496 = vunpack.c.l.b16 %v4416
    %v4497 = vunpack.c.h.b16 %v4416
    %v4498 = vunpack.c.l.b16 %v4417
    %v4499 = vunpack.c.h.b16 %v4417
    %v4500 = vunpack.c.l.b16 %v4418
    %v4501 = vunpack.c.h.b16 %v4418
    %v4502 = vunpack.c.l.b16 %v4419
    %v4503 = vunpack.c.h.b16 %v4419
    %v4504 = vunpack.c.l.b16 %v4420
    %v4505 = vunpack.c.h.b16 %v4420
    %v4506 = vunpack.c.l.b16 %v4421
    %v4507 = vunpack.c.h.b16 %v4421
    %v4508 = vunpack.c.l.b16 %v4422
    %v4509 = vunpack.c.h.b16 %v4422
    %v4510 = vunpack.c.l.b16 %v4423
    %v4511 = vunpack.c.h.b16 %v4423
    %v4512 = vunpack.c.l.b16 %v4424
    %v4513 = vunpack.c.h.b16 %v4424
    %v4514 = vunpack.c.l.b16 %v4425
    %v4515 = vunpack.c.h.b16 %v4425
    %v4516 = vunpack.c.l.b16 %v4426
    %v4517 = vunpack.c.h.b16 %v4426
    %v4518 = vunpack.c.l.b16 %v4427
    %v4519 = vunpack.c.h.b16 %v4427
    %v4520 = vunpack.c.l.b16 %v4428
    %v4521 = vunpack.c.h.b16 %v4428
    %v4522 = vunpack.c.l.b16 %v4429
    %v4523 = vunpack.c.h.b16 %v4429
    %v4524 = vunpack.c.l.b16 %v4430
    %v4525 = vunpack.c.h.b16 %v4430
    %v4526 = vunpack.c.l.b16 %v4431
    %v4527 = vunpack.c.h.b16 %v4431
    %v4528 = vunpack.c.l.b16 %v4432
    %v4529 = vunpack.c.h.b16 %v4432
    %v4530 = vunpack.c.l.b16 %v4433
    %v4531 = vunpack.c.h.b16 %v4433
    %v4532 = vunpack.c.l.b16 %v4434
    %v4533 = vunpack.c.h.b16 %v4434
    %v4534 = vunpack.c.l.b16 %v4435
    %v4535 = vunpack.c.h.b16 %v4435
    %v4536 = vunpack.c.l.b16 %v4436
    %v4537 = vunpack.c.h.b16 %v4436
    %v4538 = vunpack.c.l.b16 %v4437
    %v4539 = vunpack.c.h.b16 %v4437
    %v4540 = vunpack.c.l.b16 %v4438
    %v4541 = vunpack.c.h.b16 %v4438
    %v4542 = vunpack.c.l.b16 %v4439
    %v4543 = vunpack.c.h.b16 %v4439
    %v4544 = vunpack.c.l.b16 %v4440
    %v4545 = vunpack.c.h.b16 %v4440
    %v4546 = vunpack.c.l.b16 %v4441
    %v4547 = vunpack.c.h.b16 %v4441
    %v4548 = vunpack.c.l.b16 %v4442
    %v4549 = vunpack.c.h.b16 %v4442
    %v4550 = vunpack.c.l.b16 %v4443
    %v4551 = vunpack.c.h.b16 %v4443
    %v4552 = vunpack.c.l.b16 %v4444
    %v4553 = vunpack.c.h.b16 %v4444
    %v4554 = vunpack.c.l.b16 %v4445
    %v4555 = vunpack.c.h.b16 %v4445
    %v4556 = vunpack.c.l.b16 %v4446
    %v4557 = vunpack.c.h.b16 %v4446
    %v4558 = vunpack.c.l.b16 %v4447
    %v4559 = vunpack.c.h.b16 %v4447
    %v4560 = vunpack.c.l.b16 %v4448
    %v4561 = vunpack.c.h.b16 %v4448
    %v4562 = vunpack.c.l.b16 %v4449
    %v4563 = vunpack.c.h.b16 %v4449
    %v4564 = vunpack.c.l.b16 %v4450
    %v4565 = vunpack.c.h.b16 %v4450
    %v4566 = vunpack.c.l.b16 %v4451
    %v4567 = vunpack.c.h.b16 %v4451
    %v4568 = vunpack.c.l.b16 %v4452
    %v4569 = vunpack.c.h.b16 %v4452
    %v4570 = vpack.c.b16 %v4498, %v4492
    %v4571 = vpack.c.b16 %v4499, %v4493
    %v4572 = vpack.c.b16 %v4500, %v4494
    %v4573 = vpack.c.b16 %v4501, %v4495
    %v4574 = vpack.c.b16 %v4502, %v4496
    %v4575 = vpack.c.b16 %v4503, %v4497
    %v4576 = vpack.c.b16 %v4510, %v4504
    %v4577 = vpack.c.b16 %v4511, %v4505
    %v4578 = vpack.c.b16 %v4512, %v4506
    %v4579 = vpack.c.b16 %v4513, %v4507
    %v4580 = vpack.c.b16 %v4514, %v4508
    %v4581 = vpack.c.b16 %v4515, %v4509
    %v4582 = vpack.c.b16 %v4522, %v4516
    %v4583 = vpack.c.b16 %v4523, %v4517
    %v4584 = vpack.c.b16 %v4524, %v4518
    %v4585 = vpack.c.b16 %v4525, %v4519
    %v4586 = vpack.c.b16 %v4526, %v4520
    %v4587 = vpack.c.b16 %v4527, %v4521
    %v4588 = vpack.c.b16 %v4534, %v4528
    %v4589 = vpack.c.b16 %v4535, %v4529
    %v4590 = vpack.c.b16 %v4536, %v4530
    %v4591 = vpack.c.b16 %v4537, %v4531
    %v4592 = vpack.c.b16 %v4538, %v4532
    %v4593 = vpack.c.b16 %v4539, %v4533
    %v4594 = vpack.c.b16 %v4546, %v4540
    %v4595 = vpack.c.b16 %v4547, %v4541
    %v4596 = vpack.c.b16 %v4548, %v4542
    %v4597 = vpack.c.b16 %v4549, %v4543
    %v4598 = vpack.c.b16 %v4550, %v4544
    %v4599 = vpack.c.b16 %v4551, %v4545
    %v4600 = vpack.c.b16 %v4558, %v4552
    %v4601 = vpack.c.b16 %v4559, %v4553
    %v4602 = vpack.c.b16 %v4560, %v4554
    %v4603 = vpack.c.b16 %v4561, %v4555
    %v4604 = vpack.c.b16 %v4562, %v4556
    %v4605 = vpack.c.b16 %v4563, %v4557
    %v4606 = vpack.c.b16 %v4564, %v4564
    %v4607 = vpack.c.b16 %v4565, %v4565
    %v4608 = vpack.c.b16 %v4566, %v4566
    %v4609 = vpack.c.b16 %v4567, %v4567
    %v4610 = vpack.c.b16 %v4568, %v4568
    %v4611 = vpack.c.b16 %v4569, %v4569
    %vm4648 = vcmask 850944
    %v4650 = vsel %vm4648, %v4413, 0
    %vm4652 = vcmask 1043456
    %v4654 = vsel %vm4652, %v4606, 0
    %v4657 = vsel %vm4652, %v4607, 0
    %v4660 = vsel %vm4652, %v4608, 0
    %v4663 = vsel %vm4652, %v4609, 0
    %v4666 = vsel %vm4652, %v4610, 0
    %v4669 = vsel %vm4652, %v4611, 0
    %4671 = vmatprep.subr.bf16.mxu0 %v4571
    %4672 = vmatpush1.bf16.msra.mxu0 %v4570
    %4673 = vmatprep.subr.bf16.mxu0 %v4577
    %4674 = vmatpush1.bf16.msra.mxu0 %v4576
    %4675 = vmatprep.subr.bf16.mxu0 %v4583
    %4676 = vmatpush1.bf16.msra.mxu0 %v4582
    %4677 = vmatprep.subr.bf16.mxu0 %v4589
    %4678 = vmatpush1.bf16.msra.mxu0 %v4588
    %4679 = vmatprep.subr.bf16.mxu0 %v4595
    %4680 = vmatpush1.bf16.msra.mxu0 %v4594
    %4681 = vmatprep.subr.bf16.mxu0 %v4601
    %4682 = vmatpush1.bf16.msra.mxu0 %v4600
    %4683 = vmatprep.subr.bf16.mxu0 %v4657
    %4684 = vmatpush1.bf16.msra.mxu0 %v4654
    %4685 = vmatprep.subr.bf16.mxu0 0
    %4686 = vmatpush1.bf16.msra.mxu0 0
    %4687 = vmatprep.subr.bf16.mxu0 0
    %4688 = vmatpush1.bf16.msra.mxu0 0
    %4689 = vmatprep.subr.bf16.mxu0 0
    %4690 = vmatpush1.bf16.msra.mxu0 0
    %4691 = vmatprep.subr.bf16.mxu0 0
    %4692 = vmatpush1.bf16.msra.mxu0 0
    %4693 = vmatprep.subr.bf16.mxu0 0
    %4694 = vmatpush1.bf16.msra.mxu0 0
    %4695 = vmatprep.subr.bf16.mxu0 0
    %4696 = vmatpush1.bf16.msra.mxu0 0
    %4697 = vmatprep.subr.bf16.mxu0 0
    %4698 = vmatpush1.bf16.msra.mxu0 0
    %4699 = vmatprep.subr.bf16.mxu0 0
    %4700 = vmatpush1.bf16.msra.mxu0 0
    %4701 = vmatprep.subr.bf16.mxu0 0
    %4702 = vmatpush1.bf16.msra.mxu0 0
    %4703 = vmatprep.mubr.bf16.mxu0 0
    %4704 = vmatmul.mubr.bf16.gmra.mrb[0].mxu0 %v4650
    %v4705 = vpop.f32.mrb[0].mxu0
    %v4706 = vadd.f32 0.0, %v4705
    %v4707 = vpop.f32.mrb[0].mxu0
    %v4708 = vadd.f32 0.0, %v4707
    %v4709 = vpop.f32.mrb[0].mxu0
    %v4710 = vpop.f32.mrb[0].mxu0
    %4711 = vdwg.mxu0
    %4712 = vmatprep.subr.bf16.mxu0 %v4573
    %4713 = vmatpush1.bf16.msra.mxu0 %v4572
    %4714 = vmatprep.subr.bf16.mxu0 %v4579
    %4715 = vmatpush1.bf16.msra.mxu0 %v4578
    %4716 = vmatprep.subr.bf16.mxu0 %v4585
    %4717 = vmatpush1.bf16.msra.mxu0 %v4584
    %4718 = vmatprep.subr.bf16.mxu0 %v4591
    %4719 = vmatpush1.bf16.msra.mxu0 %v4590
    %4720 = vmatprep.subr.bf16.mxu0 %v4597
    %4721 = vmatpush1.bf16.msra.mxu0 %v4596
    %4722 = vmatprep.subr.bf16.mxu0 %v4603
    %4723 = vmatpush1.bf16.msra.mxu0 %v4602
    %4724 = vmatprep.subr.bf16.mxu0 %v4663
    %4725 = vmatpush1.bf16.msra.mxu0 %v4660
    %4726 = vmatprep.subr.bf16.mxu0 0
    %4727 = vmatpush1.bf16.msra.mxu0 0
    %4728 = vmatprep.subr.bf16.mxu0 0
    %4729 = vmatpush1.bf16.msra.mxu0 0
    %4730 = vmatprep.subr.bf16.mxu0 0
    %4731 = vmatpush1.bf16.msra.mxu0 0
    %4732 = vmatprep.subr.bf16.mxu0 0
    %4733 = vmatpush1.bf16.msra.mxu0 0
    %4734 = vmatprep.subr.bf16.mxu0 0
    %4735 = vmatpush1.bf16.msra.mxu0 0
    %4736 = vmatprep.subr.bf16.mxu0 0
    %4737 = vmatpush1.bf16.msra.mxu0 0
    %4738 = vmatprep.subr.bf16.mxu0 0
    %4739 = vmatpush1.bf16.msra.mxu0 0
    %4740 = vmatprep.subr.bf16.mxu0 0
    %4741 = vmatpush1.bf16.msra.mxu0 0
    %4742 = vmatprep.subr.bf16.mxu0 0
    %4743 = vmatpush1.bf16.msra.mxu0 0
    %4744 = vmatprep.mubr.bf16.mxu0 0
    %4745 = vmatmul.mubr.bf16.gmra.mrb[0].mxu0 %v4650
    %v4746 = vpop.f32.mrb[0].mxu0
    %v4747 = vadd.f32 0.0, %v4746
    %v4748 = vpop.f32.mrb[0].mxu0
    %v4749 = vadd.f32 0.0, %v4748
    %v4750 = vpop.f32.mrb[0].mxu0
    %v4751 = vpop.f32.mrb[0].mxu0
    %4752 = vdwg.mxu0
    %4753 = vmatprep.subr.bf16.mxu0 %v4575
    %4754 = vmatpush1.bf16.msra.mxu0 %v4574
    %4755 = vmatprep.subr.bf16.mxu0 %v4581
    %4756 = vmatpush1.bf16.msra.mxu0 %v4580
    %4757 = vmatprep.subr.bf16.mxu0 %v4587
    %4758 = vmatpush1.bf16.msra.mxu0 %v4586
    %4759 = vmatprep.subr.bf16.mxu0 %v4593
    %4760 = vmatpush1.bf16.msra.mxu0 %v4592
    %4761 = vmatprep.subr.bf16.mxu0 %v4599
    %4762 = vmatpush1.bf16.msra.mxu0 %v4598
    %4763 = vmatprep.subr.bf16.mxu0 %v4605
    %4764 = vmatpush1.bf16.msra.mxu0 %v4604
    %4765 = vmatprep.subr.bf16.mxu0 %v4669
    %4766 = vmatpush1.bf16.msra.mxu0 %v4666
    %4767 = vmatprep.subr.bf16.mxu0 0
    %4768 = vmatpush1.bf16.msra.mxu0 0
    %4769 = vmatprep.subr.bf16.mxu0 0
    %4770 = vmatpush1.bf16.msra.mxu0 0
    %4771 = vmatprep.subr.bf16.mxu0 0
    %4772 = vmatpush1.bf16.msra.mxu0 0
    %4773 = vmatprep.subr.bf16.mxu0 0
    %4774 = vmatpush1.bf16.msra.mxu0 0
    %4775 = vmatprep.subr.bf16.mxu0 0
    %4776 = vmatpush1.bf16.msra.mxu0 0
    %4777 = vmatprep.subr.bf16.mxu0 0
    %4778 = vmatpush1.bf16.msra.mxu0 0
    %4779 = vmatprep.subr.bf16.mxu0 0
    %4780 = vmatpush1.bf16.msra.mxu0 0
    %4781 = vmatprep.subr.bf16.mxu0 0
    %4782 = vmatpush1.bf16.msra.mxu0 0
    %4783 = vmatprep.subr.bf16.mxu0 0
    %4784 = vmatpush1.bf16.msra.mxu0 0
    %4785 = vmatprep.mubr.bf16.mxu0 0
    %4786 = vmatmul.mubr.bf16.gmra.mrb[0].mxu0 %v4650
    %v4787 = vpop.f32.mrb[0].mxu0
    %v4788 = vadd.f32 0.0, %v4787
    %v4789 = vpop.f32.mrb[0].mxu0
    %v4790 = vadd.f32 0.0, %v4789
    %v4791 = vpop.f32.mrb[0].mxu0
    %v4792 = vpop.f32.mrb[0].mxu0
    %4793 = vdwg.mxu0
    %v4794 = vpack.c.bf16 %v4706, %v4706
    %v4795 = vpack.c.bf16 %v4708, %v4708
    %v4796 = vpack.c.bf16 %v4747, %v4747
    %v4800 = vunpack.c.l.b16 %v4794
    %v4801 = vunpack.c.l.b16 %v4795
    %v4802 = vunpack.c.l.b16 %v4796
    %v4803 = vpack.c.b16 %v4801, %v4800
    %v4804 = vpack.c.b16 %v4802, %v4802
    %4807 = vst [vmem:[#allocation9] sm:$0xff] %v4803
    %vm4808 = vcmask 519168
    %4809 = vst.msk [vmem:[#allocation9 + $0x8] sm:$0xf] %vm4808, %v4804
    %v4810 = vpack.c.bf16 %v4749, %v4749
    %v4811 = vpack.c.bf16 %v4788, %v4788
    %v4812 = vpack.c.bf16 %v4790, %v4790
    %v4816 = vunpack.c.l.b16 %v4810
    %v4817 = vunpack.c.l.b16 %v4811
    %v4818 = vunpack.c.l.b16 %v4812
    %v4819 = vpack.c.b16 %v4817, %v4816
    %v4820 = vpack.c.b16 %v4818, %v4818
    %s4823 = scalar_lea.vmem [#allocation9], 12
    %4824 = vst [vmem:[%s4823] sm:$0xff] %v4819
    %4825 = vst.msk [vmem:[%s4823 + $0x8] sm:$0xf] %vm4808, %v4820
    // Predicated region
    $region22: #{tpu_custom_call.1} parent=1 // pred_check
      _
    $region23: #{tpu_custom_call.1} parent=1 // pred_check_branch
      %4827 = sbr.rel (0) target = $region25
    $region24: #{tpu_custom_call.1} parent=1 // pred_region
      %s4829 = ssub.s32 384, 384
      %4830 = vsyncadd [#allocation6], %s4829
      %s4831 = sshll.u32 [#allocation9], 4
      %s4832 = int_to_ptr.vmem [resolvable:$true] %s4831
      %4837 = dma.vmem_to_hbm [thread:$0]  %s4832, 384, %s2, [#allocation6], 192, 192, 12
    $region25: #{tpu_custom_call.1} parent=1 // pred_fallthru
      _
    // Predicated region
    $region26: #{tpu_custom_call.1} parent=1 // pred_check
      _
    $region27: #{tpu_custom_call.1} parent=1 // pred_check_branch
      %4839 = sbr.rel (0) target = $region29
    $region28: #{tpu_custom_call.1} parent=1 // pred_region
      %4840 = dma.done [#allocation6], 384
    $region29: #{tpu_custom_call.1} parent=1 // pred_fallthru
      _
    %4841 = vsyncpa [#allocation5], 1
    %4842 = vsyncpa [#allocation8], 1
    %4843 = vsyncpa [#allocation6], 1

</llo_original>
